<compile_context>
chip_gen: v7x
topology: tpu7x:2x2x1
jax: 0.10.0
libtpu: 0.0.40
codegen_flags: <defaults>
</compile_context>

<pallas_src>
import jax
import jax.numpy as jnp
from jax import lax
from jax.experimental import pallas as pl
from jax.experimental.pallas import tpu as pltpu

NUM_PROTO = 100                       # number of prototypes (meta tensors)
PROTO_PAD = 128                       # lane-dense padded prototype count
FEAT = 784                            # 28 * 28
CHUNK = 128                           # feature lane-chunk width
FEAT_PAD = 896                        # 7 * 128
N_CHUNKS = FEAT_PAD // CHUNK          # 7
NUM_CLS = 10
BG = 8                                # batch rows per register block (f32 sublane group)
PG = 8                                # prototypes per register block
N_PG = -(-NUM_PROTO // PG)            # 13 -> protos 0..103 (104..127 via zero init)
TB_MAX = 128                          # max batch tile (multiple of BG)


def _ceil_div(a, b):
    return -(-a // b)


def _round_up(a, b):
    return _ceil_div(a, b) * b


def meta_tensor_kernel(x_ref, meta_ref, wt_ref, o_ref, dist_ref):
    """One batch tile.

    x_ref    : (TB, 896)   f32  zero-padded flattened images
    meta_ref : (128, 896)  f32  zero-padded prototypes (rows 100..127 = 0)
    wt_ref   : (128, 10)   f32  W.T with rows 100..127 = 0
    o_ref    : (TB, 10)    f32
    dist_ref : (TB, 128)   f32  VMEM scratch: L1 distances (protos lane-dense)
    """
    tb = x_ref.shape[0]

    # Zero the distance scratch once per tile so prototype columns that are
    # never written (104..127) are exactly 0 (their W.T rows are 0 too).
    dist_ref[...] = jnp.zeros_like(dist_ref)

    def bg_body(g, carry):
        row = pl.multiple_of(g * BG, BG)
        x_rows = x_ref[pl.ds(row, BG), :]                        # (8, 896), 7 vregs
        for pg in range(N_PG):                                   # 13 proto groups
            p0 = pg * PG
            acc = None                                           # (8, 8, 128) in vregs
            for c in range(N_CHUNKS):                            # 7 feature chunks
                off = c * CHUNK
                xc = x_rows[:, off:off + CHUNK]                  # (8, 128)
                mc = meta_ref[pl.ds(p0, PG), pl.ds(off, CHUNK)]  # (8, 128) static slice
                d = jnp.abs(xc[:, None, :] - mc[None, :, :])     # (8, 8, 128)
                acc = d if acc is None else acc + d
            # One lane reduce per block -> (8, 8) block of L1 distances.
            dist_ref[pl.ds(row, BG), pl.ds(p0, PG)] = jnp.sum(acc, axis=-1)
        return carry

    lax.fori_loop(0, tb // BG, bg_body, 0)

    # Linear(100 -> 10, bias=False) on the MXU: y = dist @ W.T (pre-transposed).
    o_ref[...] = jnp.dot(dist_ref[...], wt_ref[...],
                         preferred_element_type=jnp.float32).astype(o_ref.dtype)


def prepare_params(meta, w):
    """Pad / pre-transpose the fixed parameters once (outside the jitted fwd)."""
    meta_p = jnp.zeros((PROTO_PAD, FEAT_PAD), jnp.float32)
    meta_p = meta_p.at[:NUM_PROTO, :FEAT].set(meta.astype(jnp.float32))
    wt_p = jnp.zeros((PROTO_PAD, NUM_CLS), jnp.float32)
    wt_p = wt_p.at[:NUM_PROTO, :].set(w.astype(jnp.float32).T)
    return meta_p, wt_p


@jax.jit
def meta_tensor_forward(x, meta_p, wt_p):
    """Flatten input, pad for lane-dense layout, run the Pallas kernel."""
    x2d = x.reshape(-1, FEAT).astype(jnp.float32)     # torch .view(-1, 784)
    B = x2d.shape[0]

    tb = min(TB_MAX, _round_up(_ceil_div(B, 2), BG))
    num_tiles = max(2, _ceil_div(B, tb))              # >= 2 steps -> both v7x TCs
    b_pad = num_tiles * tb

    # Zero-pad batch and features (padded feature lanes contribute |0-0| = 0).
    x_p = jnp.zeros((b_pad, FEAT_PAD), jnp.float32).at[:B, :FEAT].set(x2d)

    out = pl.pallas_call(
        meta_tensor_kernel,
        out_shape=jax.ShapeDtypeStruct((b_pad, NUM_CLS), jnp.float32),
        grid_spec=pltpu.PrefetchScalarGridSpec(
            num_scalar_prefetch=0,
            grid=(num_tiles,),
            in_specs=[
                pl.BlockSpec((tb, FEAT_PAD), lambda i: (i, 0)),         # x tile
                pl.BlockSpec((PROTO_PAD, FEAT_PAD), lambda i: (0, 0)),  # meta (resident)
                pl.BlockSpec((PROTO_PAD, NUM_CLS), lambda i: (0, 0)),   # W.T  (resident)
            ],
            out_specs=pl.BlockSpec((tb, NUM_CLS), lambda i: (i, 0)),
            scratch_shapes=[pltpu.VMEM((tb, PROTO_PAD), jnp.float32)],  # (TB,128) dist
        ),
        compiler_params=pltpu.CompilerParams(
            dimension_semantics=("parallel",),        # megacore-shard batch on v7x
        ),
    )(x_p, meta_p, wt_p)

    return out[:B]


def reference_forward(x, meta, w):
    """Pure-JAX reference for sanity checking."""
    x2d = x.reshape(-1, FEAT).astype(jnp.float32)
    dist = jnp.sum(jnp.abs(x2d[:, None, :] - meta[None, :, :]), axis=-1)
    return dist @ w.T


if __name__ == "__main__":
    key = jax.random.PRNGKey(0)
    k_x, k_meta, k_w = jax.random.split(key, 3)

    # Deterministic synthetic parameters (shapes from the module's __init__).
    meta = jax.random.uniform(k_meta, (NUM_PROTO, FEAT), dtype=jnp.float32)
    w = jax.random.uniform(k_w, (NUM_CLS, NUM_PROTO), dtype=jnp.float32,
                           minval=-0.1, maxval=0.1)

    # Small MNIST-like batch, NCHW.
    x = jax.random.uniform(k_x, (8, 1, 28, 28), dtype=jnp.float32)

    meta_p, wt_p = prepare_params(meta, w)            # done once, outside the jit
    out = meta_tensor_forward(x, meta_p, wt_p)
    out = jax.block_until_ready(out)

    ref = reference_forward(x, meta, w)
    assert out.shape == (8, NUM_CLS)
    assert jnp.allclose(out, ref, rtol=1e-4, atol=1e-2), "mismatch vs reference"

    print("KERNEL_OK")
</pallas_src>

<mosaic_0001>
module attributes {stable_mosaic.version = 11 : i64} {
  func.func @meta_tensor_kernel(%arg0: i32, %arg1: memref<8x896xf32, #tpu.memory_space<vmem>>, %arg2: memref<128x896xf32, #tpu.memory_space<vmem>>, %arg3: memref<128x10xf32, #tpu.memory_space<vmem>>, %arg4: memref<8x10xf32, #tpu.memory_space<vmem>>, %arg5: memref<8x128xf32, #tpu.memory_space<vmem>>) attributes {dimension_semantics = [#tpu.dimension_semantics<parallel>], iteration_bounds = array<i64: 2>, scalar_prefetch = 0 : i64, scratch_operands = 1 : i64, tpu.core_type = #tpu.core_type<tc>, window_params = [{transform_indices = @transform_0, window_bounds = array<i64: 8, 896>}, {pipeline_mode = #tpu.pipeline_mode<synchronous>, transform_indices = @transform_1, window_bounds = array<i64: 128, 896>}, {pipeline_mode = #tpu.pipeline_mode<synchronous>, transform_indices = @transform_2, window_bounds = array<i64: 128, 10>}, {transform_indices = @transform_3, window_bounds = array<i64: 8, 10>}]} {
    %cst = arith.constant 0.000000e+00 : f32
    %0 = vector.broadcast %cst : f32 to vector<8x128xf32>
    %c0 = arith.constant 0 : index
    %c0_0 = arith.constant 0 : index
    %1 = vector.load %arg5[%c0, %c0_0] : memref<8x128xf32, #tpu.memory_space<vmem>>, vector<8x128xf32>
    tpu.vector_store %arg5[%c0, %c0_0], %0 {strides = array<i32>} : memref<8x128xf32, #tpu.memory_space<vmem>>, vector<8x128xf32>,
    %c0_i32 = arith.constant 0 : i32
    %c8_i32 = arith.constant 8 : i32
    %2 = arith.muli %c0_i32, %c8_i32 : i32
    %3 = tpu.assume_multiple %2, 8 : i32
    %4 = arith.index_cast %3 : i32 to index
    %c0_1 = arith.constant 0 : index
    %5 = vector.load %arg1[%4, %c0_1] : memref<8x896xf32, #tpu.memory_space<vmem>>, vector<8x896xf32>
    %6 = vector.extract_strided_slice %5 {offsets = [0, 0], sizes = [8, 128], strides = [1, 1]} : vector<8x896xf32> to vector<8x128xf32>
    %c0_2 = arith.constant 0 : index
    %c0_3 = arith.constant 0 : index
    %7 = vector.load %arg2[%c0_2, %c0_3] : memref<128x896xf32, #tpu.memory_space<vmem>>, vector<8x128xf32>
    %8 = vector.shape_cast %6 : vector<8x128xf32> to vector<8x1x128xf32>
    %9 = vector.shape_cast %7 : vector<8x128xf32> to vector<1x8x128xf32>
    %10 = vector.broadcast %8 : vector<8x1x128xf32> to vector<8x8x128xf32>
    %11 = vector.broadcast %9 : vector<1x8x128xf32> to vector<8x8x128xf32>
    %12 = arith.subf %10, %11 : vector<8x8x128xf32>
    %13 = math.absf %12 : vector<8x8x128xf32>
    %14 = vector.extract_strided_slice %5 {offsets = [0, 128], sizes = [8, 128], strides = [1, 1]} : vector<8x896xf32> to vector<8x128xf32>
    %c0_4 = arith.constant 0 : index
    %c128 = arith.constant 128 : index
    %15 = vector.load %arg2[%c0_4, %c128] : memref<128x896xf32, #tpu.memory_space<vmem>>, vector<8x128xf32>
    %16 = vector.shape_cast %14 : vector<8x128xf32> to vector<8x1x128xf32>
    %17 = vector.shape_cast %15 : vector<8x128xf32> to vector<1x8x128xf32>
    %18 = vector.broadcast %16 : vector<8x1x128xf32> to vector<8x8x128xf32>
    %19 = vector.broadcast %17 : vector<1x8x128xf32> to vector<8x8x128xf32>
    %20 = arith.subf %18, %19 : vector<8x8x128xf32>
    %21 = math.absf %20 : vector<8x8x128xf32>
    %22 = arith.addf %13, %21 : vector<8x8x128xf32>
    %23 = vector.extract_strided_slice %5 {offsets = [0, 256], sizes = [8, 128], strides = [1, 1]} : vector<8x896xf32> to vector<8x128xf32>
    %c0_5 = arith.constant 0 : index
    %c256 = arith.constant 256 : index
    %24 = vector.load %arg2[%c0_5, %c256] : memref<128x896xf32, #tpu.memory_space<vmem>>, vector<8x128xf32>
    %25 = vector.shape_cast %23 : vector<8x128xf32> to vector<8x1x128xf32>
    %26 = vector.shape_cast %24 : vector<8x128xf32> to vector<1x8x128xf32>
    %27 = vector.broadcast %25 : vector<8x1x128xf32> to vector<8x8x128xf32>
    %28 = vector.broadcast %26 : vector<1x8x128xf32> to vector<8x8x128xf32>
    %29 = arith.subf %27, %28 : vector<8x8x128xf32>
    %30 = math.absf %29 : vector<8x8x128xf32>
    %31 = arith.addf %22, %30 : vector<8x8x128xf32>
    %32 = vector.extract_strided_slice %5 {offsets = [0, 384], sizes = [8, 128], strides = [1, 1]} : vector<8x896xf32> to vector<8x128xf32>
    %c0_6 = arith.constant 0 : index
    %c384 = arith.constant 384 : index
    %33 = vector.load %arg2[%c0_6, %c384] : memref<128x896xf32, #tpu.memory_space<vmem>>, vector<8x128xf32>
    %34 = vector.shape_cast %32 : vector<8x128xf32> to vector<8x1x128xf32>
    %35 = vector.shape_cast %33 : vector<8x128xf32> to vector<1x8x128xf32>
    %36 = vector.broadcast %34 : vector<8x1x128xf32> to vector<8x8x128xf32>
    %37 = vector.broadcast %35 : vector<1x8x128xf32> to vector<8x8x128xf32>
    %38 = arith.subf %36, %37 : vector<8x8x128xf32>
    %39 = math.absf %38 : vector<8x8x128xf32>
    %40 = arith.addf %31, %39 : vector<8x8x128xf32>
    %41 = vector.extract_strided_slice %5 {offsets = [0, 512], sizes = [8, 128], strides = [1, 1]} : vector<8x896xf32> to vector<8x128xf32>
    %c0_7 = arith.constant 0 : index
    %c512 = arith.constant 512 : index
    %42 = vector.load %arg2[%c0_7, %c512] : memref<128x896xf32, #tpu.memory_space<vmem>>, vector<8x128xf32>
    %43 = vector.shape_cast %41 : vector<8x128xf32> to vector<8x1x128xf32>
    %44 = vector.shape_cast %42 : vector<8x128xf32> to vector<1x8x128xf32>
    %45 = vector.broadcast %43 : vector<8x1x128xf32> to vector<8x8x128xf32>
    %46 = vector.broadcast %44 : vector<1x8x128xf32> to vector<8x8x128xf32>
    %47 = arith.subf %45, %46 : vector<8x8x128xf32>
    %48 = math.absf %47 : vector<8x8x128xf32>
    %49 = arith.addf %40, %48 : vector<8x8x128xf32>
    %50 = vector.extract_strided_slice %5 {offsets = [0, 640], sizes = [8, 128], strides = [1, 1]} : vector<8x896xf32> to vector<8x128xf32>
    %c0_8 = arith.constant 0 : index
    %c640 = arith.constant 640 : index
    %51 = vector.load %arg2[%c0_8, %c640] : memref<128x896xf32, #tpu.memory_space<vmem>>, vector<8x128xf32>
    %52 = vector.shape_cast %50 : vector<8x128xf32> to vector<8x1x128xf32>
    %53 = vector.shape_cast %51 : vector<8x128xf32> to vector<1x8x128xf32>
    %54 = vector.broadcast %52 : vector<8x1x128xf32> to vector<8x8x128xf32>
    %55 = vector.broadcast %53 : vector<1x8x128xf32> to vector<8x8x128xf32>
    %56 = arith.subf %54, %55 : vector<8x8x128xf32>
    %57 = math.absf %56 : vector<8x8x128xf32>
    %58 = arith.addf %49, %57 : vector<8x8x128xf32>
    %59 = vector.extract_strided_slice %5 {offsets = [0, 768], sizes = [8, 128], strides = [1, 1]} : vector<8x896xf32> to vector<8x128xf32>
    %c0_9 = arith.constant 0 : index
    %c768 = arith.constant 768 : index
    %60 = vector.load %arg2[%c0_9, %c768] : memref<128x896xf32, #tpu.memory_space<vmem>>, vector<8x128xf32>
    %61 = vector.shape_cast %59 : vector<8x128xf32> to vector<8x1x128xf32>
    %62 = vector.shape_cast %60 : vector<8x128xf32> to vector<1x8x128xf32>
    %63 = vector.broadcast %61 : vector<8x1x128xf32> to vector<8x8x128xf32>
    %64 = vector.broadcast %62 : vector<1x8x128xf32> to vector<8x8x128xf32>
    %65 = arith.subf %63, %64 : vector<8x8x128xf32>
    %66 = math.absf %65 : vector<8x8x128xf32>
    %67 = arith.addf %58, %66 : vector<8x8x128xf32>
    %cst_10 = arith.constant dense<0.000000e+00> : vector<8x8xf32>
    %68 = vector.multi_reduction <add>, %67, %cst_10 [2] : vector<8x8x128xf32> to vector<8x8xf32>
    %69 = arith.index_cast %3 : i32 to index
    %c0_11 = arith.constant 0 : index
    %70 = vector.load %arg5[%69, %c0_11] : memref<8x128xf32, #tpu.memory_space<vmem>>, vector<8x8xf32>
    tpu.vector_store %arg5[%69, %c0_11], %68 {strides = array<i32>} : memref<8x128xf32, #tpu.memory_space<vmem>>, vector<8x8xf32>,
    %71 = vector.extract_strided_slice %5 {offsets = [0, 0], sizes = [8, 128], strides = [1, 1]} : vector<8x896xf32> to vector<8x128xf32>
    %c8 = arith.constant 8 : index
    %c0_12 = arith.constant 0 : index
    %72 = vector.load %arg2[%c8, %c0_12] : memref<128x896xf32, #tpu.memory_space<vmem>>, vector<8x128xf32>
    %73 = vector.shape_cast %71 : vector<8x128xf32> to vector<8x1x128xf32>
    %74 = vector.shape_cast %72 : vector<8x128xf32> to vector<1x8x128xf32>
    %75 = vector.broadcast %73 : vector<8x1x128xf32> to vector<8x8x128xf32>
    %76 = vector.broadcast %74 : vector<1x8x128xf32> to vector<8x8x128xf32>
    %77 = arith.subf %75, %76 : vector<8x8x128xf32>
    %78 = math.absf %77 : vector<8x8x128xf32>
    %79 = vector.extract_strided_slice %5 {offsets = [0, 128], sizes = [8, 128], strides = [1, 1]} : vector<8x896xf32> to vector<8x128xf32>
    %c8_13 = arith.constant 8 : index
    %c128_14 = arith.constant 128 : index
    %80 = vector.load %arg2[%c8_13, %c128_14] : memref<128x896xf32, #tpu.memory_space<vmem>>, vector<8x128xf32>
    %81 = vector.shape_cast %79 : vector<8x128xf32> to vector<8x1x128xf32>
    %82 = vector.shape_cast %80 : vector<8x128xf32> to vector<1x8x128xf32>
    %83 = vector.broadcast %81 : vector<8x1x128xf32> to vector<8x8x128xf32>
    %84 = vector.broadcast %82 : vector<1x8x128xf32> to vector<8x8x128xf32>
    %85 = arith.subf %83, %84 : vector<8x8x128xf32>
    %86 = math.absf %85 : vector<8x8x128xf32>
    %87 = arith.addf %78, %86 : vector<8x8x128xf32>
    %88 = vector.extract_strided_slice %5 {offsets = [0, 256], sizes = [8, 128], strides = [1, 1]} : vector<8x896xf32> to vector<8x128xf32>
    %c8_15 = arith.constant 8 : index
    %c256_16 = arith.constant 256 : index
    %89 = vector.load %arg2[%c8_15, %c256_16] : memref<128x896xf32, #tpu.memory_space<vmem>>, vector<8x128xf32>
    %90 = vector.shape_cast %88 : vector<8x128xf32> to vector<8x1x128xf32>
    %91 = vector.shape_cast %89 : vector<8x128xf32> to vector<1x8x128xf32>
    %92 = vector.broadcast %90 : vector<8x1x128xf32> to vector<8x8x128xf32>
    %93 = vector.broadcast %91 : vector<1x8x128xf32> to vector<8x8x128xf32>
    %94 = arith.subf %92, %93 : vector<8x8x128xf32>
    %95 = math.absf %94 : vector<8x8x128xf32>
    %96 = arith.addf %87, %95 : vector<8x8x128xf32>
    %97 = vector.extract_strided_slice %5 {offsets = [0, 384], sizes = [8, 128], strides = [1, 1]} : vector<8x896xf32> to vector<8x128xf32>
    %c8_17 = arith.constant 8 : index
    %c384_18 = arith.constant 384 : index
    %98 = vector.load %arg2[%c8_17, %c384_18] : memref<128x896xf32, #tpu.memory_space<vmem>>, vector<8x128xf32>
    %99 = vector.shape_cast %97 : vector<8x128xf32> to vector<8x1x128xf32>
    %100 = vector.shape_cast %98 : vector<8x128xf32> to vector<1x8x128xf32>
    %101 = vector.broadcast %99 : vector<8x1x128xf32> to vector<8x8x128xf32>
    %102 = vector.broadcast %100 : vector<1x8x128xf32> to vector<8x8x128xf32>
    %103 = arith.subf %101, %102 : vector<8x8x128xf32>
    %104 = math.absf %103 : vector<8x8x128xf32>
    %105 = arith.addf %96, %104 : vector<8x8x128xf32>
    %106 = vector.extract_strided_slice %5 {offsets = [0, 512], sizes = [8, 128], strides = [1, 1]} : vector<8x896xf32> to vector<8x128xf32>
    %c8_19 = arith.constant 8 : index
    %c512_20 = arith.constant 512 : index
    %107 = vector.load %arg2[%c8_19, %c512_20] : memref<128x896xf32, #tpu.memory_space<vmem>>, vector<8x128xf32>
    %108 = vector.shape_cast %106 : vector<8x128xf32> to vector<8x1x128xf32>
    %109 = vector.shape_cast %107 : vector<8x128xf32> to vector<1x8x128xf32>
    %110 = vector.broadcast %108 : vector<8x1x128xf32> to vector<8x8x128xf32>
    %111 = vector.broadcast %109 : vector<1x8x128xf32> to vector<8x8x128xf32>
    %112 = arith.subf %110, %111 : vector<8x8x128xf32>
    %113 = math.absf %112 : vector<8x8x128xf32>
    %114 = arith.addf %105, %113 : vector<8x8x128xf32>
    %115 = vector.extract_strided_slice %5 {offsets = [0, 640], sizes = [8, 128], strides = [1, 1]} : vector<8x896xf32> to vector<8x128xf32>
    %c8_21 = arith.constant 8 : index
    %c640_22 = arith.constant 640 : index
    %116 = vector.load %arg2[%c8_21, %c640_22] : memref<128x896xf32, #tpu.memory_space<vmem>>, vector<8x128xf32>
    %117 = vector.shape_cast %115 : vector<8x128xf32> to vector<8x1x128xf32>
    %118 = vector.shape_cast %116 : vector<8x128xf32> to vector<1x8x128xf32>
    %119 = vector.broadcast %117 : vector<8x1x128xf32> to vector<8x8x128xf32>
    %120 = vector.broadcast %118 : vector<1x8x128xf32> to vector<8x8x128xf32>
    %121 = arith.subf %119, %120 : vector<8x8x128xf32>
    %122 = math.absf %121 : vector<8x8x128xf32>
    %123 = arith.addf %114, %122 : vector<8x8x128xf32>
    %124 = vector.extract_strided_slice %5 {offsets = [0, 768], sizes = [8, 128], strides = [1, 1]} : vector<8x896xf32> to vector<8x128xf32>
    %c8_23 = arith.constant 8 : index
    %c768_24 = arith.constant 768 : index
    %125 = vector.load %arg2[%c8_23, %c768_24] : memref<128x896xf32, #tpu.memory_space<vmem>>, vector<8x128xf32>
    %126 = vector.shape_cast %124 : vector<8x128xf32> to vector<8x1x128xf32>
    %127 = vector.shape_cast %125 : vector<8x128xf32> to vector<1x8x128xf32>
    %128 = vector.broadcast %126 : vector<8x1x128xf32> to vector<8x8x128xf32>
    %129 = vector.broadcast %127 : vector<1x8x128xf32> to vector<8x8x128xf32>
    %130 = arith.subf %128, %129 : vector<8x8x128xf32>
    %131 = math.absf %130 : vector<8x8x128xf32>
    %132 = arith.addf %123, %131 : vector<8x8x128xf32>
    %cst_25 = arith.constant dense<0.000000e+00> : vector<8x8xf32>
    %133 = vector.multi_reduction <add>, %132, %cst_25 [2] : vector<8x8x128xf32> to vector<8x8xf32>
    %134 = arith.index_cast %3 : i32 to index
    %c8_26 = arith.constant 8 : index
    %135 = vector.load %arg5[%134, %c8_26] : memref<8x128xf32, #tpu.memory_space<vmem>>, vector<8x8xf32>
    tpu.vector_store %arg5[%134, %c8_26], %133 {strides = array<i32>} : memref<8x128xf32, #tpu.memory_space<vmem>>, vector<8x8xf32>,
    %136 = vector.extract_strided_slice %5 {offsets = [0, 0], sizes = [8, 128], strides = [1, 1]} : vector<8x896xf32> to vector<8x128xf32>
    %c16 = arith.constant 16 : index
    %c0_27 = arith.constant 0 : index
    %137 = vector.load %arg2[%c16, %c0_27] : memref<128x896xf32, #tpu.memory_space<vmem>>, vector<8x128xf32>
    %138 = vector.shape_cast %136 : vector<8x128xf32> to vector<8x1x128xf32>
    %139 = vector.shape_cast %137 : vector<8x128xf32> to vector<1x8x128xf32>
    %140 = vector.broadcast %138 : vector<8x1x128xf32> to vector<8x8x128xf32>
    %141 = vector.broadcast %139 : vector<1x8x128xf32> to vector<8x8x128xf32>
    %142 = arith.subf %140, %141 : vector<8x8x128xf32>
    %143 = math.absf %142 : vector<8x8x128xf32>
    %144 = vector.extract_strided_slice %5 {offsets = [0, 128], sizes = [8, 128], strides = [1, 1]} : vector<8x896xf32> to vector<8x128xf32>
    %c16_28 = arith.constant 16 : index
    %c128_29 = arith.constant 128 : index
    %145 = vector.load %arg2[%c16_28, %c128_29] : memref<128x896xf32, #tpu.memory_space<vmem>>, vector<8x128xf32>
    %146 = vector.shape_cast %144 : vector<8x128xf32> to vector<8x1x128xf32>
    %147 = vector.shape_cast %145 : vector<8x128xf32> to vector<1x8x128xf32>
    %148 = vector.broadcast %146 : vector<8x1x128xf32> to vector<8x8x128xf32>
    %149 = vector.broadcast %147 : vector<1x8x128xf32> to vector<8x8x128xf32>
    %150 = arith.subf %148, %149 : vector<8x8x128xf32>
    %151 = math.absf %150 : vector<8x8x128xf32>
    %152 = arith.addf %143, %151 : vector<8x8x128xf32>
    %153 = vector.extract_strided_slice %5 {offsets = [0, 256], sizes = [8, 128], strides = [1, 1]} : vector<8x896xf32> to vector<8x128xf32>
    %c16_30 = arith.constant 16 : index
    %c256_31 = arith.constant 256 : index
    %154 = vector.load %arg2[%c16_30, %c256_31] : memref<128x896xf32, #tpu.memory_space<vmem>>, vector<8x128xf32>
    %155 = vector.shape_cast %153 : vector<8x128xf32> to vector<8x1x128xf32>
    %156 = vector.shape_cast %154 : vector<8x128xf32> to vector<1x8x128xf32>
    %157 = vector.broadcast %155 : vector<8x1x128xf32> to vector<8x8x128xf32>
    %158 = vector.broadcast %156 : vector<1x8x128xf32> to vector<8x8x128xf32>
    %159 = arith.subf %157, %158 : vector<8x8x128xf32>
    %160 = math.absf %159 : vector<8x8x128xf32>
    %161 = arith.addf %152, %160 : vector<8x8x128xf32>
    %162 = vector.extract_strided_slice %5 {offsets = [0, 384], sizes = [8, 128], strides = [1, 1]} : vector<8x896xf32> to vector<8x128xf32>
    %c16_32 = arith.constant 16 : index
    %c384_33 = arith.constant 384 : index
    %163 = vector.load %arg2[%c16_32, %c384_33] : memref<128x896xf32, #tpu.memory_space<vmem>>, vector<8x128xf32>
    %164 = vector.shape_cast %162 : vector<8x128xf32> to vector<8x1x128xf32>
    %165 = vector.shape_cast %163 : vector<8x128xf32> to vector<1x8x128xf32>
    %166 = vector.broadcast %164 : vector<8x1x128xf32> to vector<8x8x128xf32>
    %167 = vector.broadcast %165 : vector<1x8x128xf32> to vector<8x8x128xf32>
    %168 = arith.subf %166, %167 : vector<8x8x128xf32>
    %169 = math.absf %168 : vector<8x8x128xf32>
    %170 = arith.addf %161, %169 : vector<8x8x128xf32>
    %171 = vector.extract_strided_slice %5 {offsets = [0, 512], sizes = [8, 128], strides = [1, 1]} : vector<8x896xf32> to vector<8x128xf32>
    %c16_34 = arith.constant 16 : index
    %c512_35 = arith.constant 512 : index
    %172 = vector.load %arg2[%c16_34, %c512_35] : memref<128x896xf32, #tpu.memory_space<vmem>>, vector<8x128xf32>
    %173 = vector.shape_cast %171 : vector<8x128xf32> to vector<8x1x128xf32>
    %174 = vector.shape_cast %172 : vector<8x128xf32> to vector<1x8x128xf32>
    %175 = vector.broadcast %173 : vector<8x1x128xf32> to vector<8x8x128xf32>
    %176 = vector.broadcast %174 : vector<1x8x128xf32> to vector<8x8x128xf32>
    %177 = arith.subf %175, %176 : vector<8x8x128xf32>
    %178 = math.absf %177 : vector<8x8x128xf32>
    %179 = arith.addf %170, %178 : vector<8x8x128xf32>
    %180 = vector.extract_strided_slice %5 {offsets = [0, 640], sizes = [8, 128], strides = [1, 1]} : vector<8x896xf32> to vector<8x128xf32>
    %c16_36 = arith.constant 16 : index
    %c640_37 = arith.constant 640 : index
    %181 = vector.load %arg2[%c16_36, %c640_37] : memref<128x896xf32, #tpu.memory_space<vmem>>, vector<8x128xf32>
    %182 = vector.shape_cast %180 : vector<8x128xf32> to vector<8x1x128xf32>
    %183 = vector.shape_cast %181 : vector<8x128xf32> to vector<1x8x128xf32>
    %184 = vector.broadcast %182 : vector<8x1x128xf32> to vector<8x8x128xf32>
    %185 = vector.broadcast %183 : vector<1x8x128xf32> to vector<8x8x128xf32>
    %186 = arith.subf %184, %185 : vector<8x8x128xf32>
    %187 = math.absf %186 : vector<8x8x128xf32>
    %188 = arith.addf %179, %187 : vector<8x8x128xf32>
    %189 = vector.extract_strided_slice %5 {offsets = [0, 768], sizes = [8, 128], strides = [1, 1]} : vector<8x896xf32> to vector<8x128xf32>
    %c16_38 = arith.constant 16 : index
    %c768_39 = arith.constant 768 : index
    %190 = vector.load %arg2[%c16_38, %c768_39] : memref<128x896xf32, #tpu.memory_space<vmem>>, vector<8x128xf32>
    %191 = vector.shape_cast %189 : vector<8x128xf32> to vector<8x1x128xf32>
    %192 = vector.shape_cast %190 : vector<8x128xf32> to vector<1x8x128xf32>
    %193 = vector.broadcast %191 : vector<8x1x128xf32> to vector<8x8x128xf32>
    %194 = vector.broadcast %192 : vector<1x8x128xf32> to vector<8x8x128xf32>
    %195 = arith.subf %193, %194 : vector<8x8x128xf32>
    %196 = math.absf %195 : vector<8x8x128xf32>
    %197 = arith.addf %188, %196 : vector<8x8x128xf32>
    %cst_40 = arith.constant dense<0.000000e+00> : vector<8x8xf32>
    %198 = vector.multi_reduction <add>, %197, %cst_40 [2] : vector<8x8x128xf32> to vector<8x8xf32>
    %199 = arith.index_cast %3 : i32 to index
    %c16_41 = arith.constant 16 : index
    %200 = vector.load %arg5[%199, %c16_41] : memref<8x128xf32, #tpu.memory_space<vmem>>, vector<8x8xf32>
    tpu.vector_store %arg5[%199, %c16_41], %198 {strides = array<i32>} : memref<8x128xf32, #tpu.memory_space<vmem>>, vector<8x8xf32>,
    %201 = vector.extract_strided_slice %5 {offsets = [0, 0], sizes = [8, 128], strides = [1, 1]} : vector<8x896xf32> to vector<8x128xf32>
    %c24 = arith.constant 24 : index
    %c0_42 = arith.constant 0 : index
    %202 = vector.load %arg2[%c24, %c0_42] : memref<128x896xf32, #tpu.memory_space<vmem>>, vector<8x128xf32>
    %203 = vector.shape_cast %201 : vector<8x128xf32> to vector<8x1x128xf32>
    %204 = vector.shape_cast %202 : vector<8x128xf32> to vector<1x8x128xf32>
    %205 = vector.broadcast %203 : vector<8x1x128xf32> to vector<8x8x128xf32>
    %206 = vector.broadcast %204 : vector<1x8x128xf32> to vector<8x8x128xf32>
    %207 = arith.subf %205, %206 : vector<8x8x128xf32>
    %208 = math.absf %207 : vector<8x8x128xf32>
    %209 = vector.extract_strided_slice %5 {offsets = [0, 128], sizes = [8, 128], strides = [1, 1]} : vector<8x896xf32> to vector<8x128xf32>
    %c24_43 = arith.constant 24 : index
    %c128_44 = arith.constant 128 : index
    %210 = vector.load %arg2[%c24_43, %c128_44] : memref<128x896xf32, #tpu.memory_space<vmem>>, vector<8x128xf32>
    %211 = vector.shape_cast %209 : vector<8x128xf32> to vector<8x1x128xf32>
    %212 = vector.shape_cast %210 : vector<8x128xf32> to vector<1x8x128xf32>
    %213 = vector.broadcast %211 : vector<8x1x128xf32> to vector<8x8x128xf32>
    %214 = vector.broadcast %212 : vector<1x8x128xf32> to vector<8x8x128xf32>
    %215 = arith.subf %213, %214 : vector<8x8x128xf32>
    %216 = math.absf %215 : vector<8x8x128xf32>
    %217 = arith.addf %208, %216 : vector<8x8x128xf32>
    %218 = vector.extract_strided_slice %5 {offsets = [0, 256], sizes = [8, 128], strides = [1, 1]} : vector<8x896xf32> to vector<8x128xf32>
    %c24_45 = arith.constant 24 : index
    %c256_46 = arith.constant 256 : index
    %219 = vector.load %arg2[%c24_45, %c256_46] : memref<128x896xf32, #tpu.memory_space<vmem>>, vector<8x128xf32>
    %220 = vector.shape_cast %218 : vector<8x128xf32> to vector<8x1x128xf32>
    %221 = vector.shape_cast %219 : vector<8x128xf32> to vector<1x8x128xf32>
    %222 = vector.broadcast %220 : vector<8x1x128xf32> to vector<8x8x128xf32>
    %223 = vector.broadcast %221 : vector<1x8x128xf32> to vector<8x8x128xf32>
    %224 = arith.subf %222, %223 : vector<8x8x128xf32>
    %225 = math.absf %224 : vector<8x8x128xf32>
    %226 = arith.addf %217, %225 : vector<8x8x128xf32>
    %227 = vector.extract_strided_slice %5 {offsets = [0, 384], sizes = [8, 128], strides = [1, 1]} : vector<8x896xf32> to vector<8x128xf32>
    %c24_47 = arith.constant 24 : index
    %c384_48 = arith.constant 384 : index
    %228 = vector.load %arg2[%c24_47, %c384_48] : memref<128x896xf32, #tpu.memory_space<vmem>>, vector<8x128xf32>
    %229 = vector.shape_cast %227 : vector<8x128xf32> to vector<8x1x128xf32>
    %230 = vector.shape_cast %228 : vector<8x128xf32> to vector<1x8x128xf32>
    %231 = vector.broadcast %229 : vector<8x1x128xf32> to vector<8x8x128xf32>
    %232 = vector.broadcast %230 : vector<1x8x128xf32> to vector<8x8x128xf32>
    %233 = arith.subf %231, %232 : vector<8x8x128xf32>
    %234 = math.absf %233 : vector<8x8x128xf32>
    %235 = arith.addf %226, %234 : vector<8x8x128xf32>
    %236 = vector.extract_strided_slice %5 {offsets = [0, 512], sizes = [8, 128], strides = [1, 1]} : vector<8x896xf32> to vector<8x128xf32>
    %c24_49 = arith.constant 24 : index
    %c512_50 = arith.constant 512 : index
    %237 = vector.load %arg2[%c24_49, %c512_50] : memref<128x896xf32, #tpu.memory_space<vmem>>, vector<8x128xf32>
    %238 = vector.shape_cast %236 : vector<8x128xf32> to vector<8x1x128xf32>
    %239 = vector.shape_cast %237 : vector<8x128xf32> to vector<1x8x128xf32>
    %240 = vector.broadcast %238 : vector<8x1x128xf32> to vector<8x8x128xf32>
    %241 = vector.broadcast %239 : vector<1x8x128xf32> to vector<8x8x128xf32>
    %242 = arith.subf %240, %241 : vector<8x8x128xf32>
    %243 = math.absf %242 : vector<8x8x128xf32>
    %244 = arith.addf %235, %243 : vector<8x8x128xf32>
    %245 = vector.extract_strided_slice %5 {offsets = [0, 640], sizes = [8, 128], strides = [1, 1]} : vector<8x896xf32> to vector<8x128xf32>
    %c24_51 = arith.constant 24 : index
    %c640_52 = arith.constant 640 : index
    %246 = vector.load %arg2[%c24_51, %c640_52] : memref<128x896xf32, #tpu.memory_space<vmem>>, vector<8x128xf32>
    %247 = vector.shape_cast %245 : vector<8x128xf32> to vector<8x1x128xf32>
    %248 = vector.shape_cast %246 : vector<8x128xf32> to vector<1x8x128xf32>
    %249 = vector.broadcast %247 : vector<8x1x128xf32> to vector<8x8x128xf32>
    %250 = vector.broadcast %248 : vector<1x8x128xf32> to vector<8x8x128xf32>
    %251 = arith.subf %249, %250 : vector<8x8x128xf32>
    %252 = math.absf %251 : vector<8x8x128xf32>
    %253 = arith.addf %244, %252 : vector<8x8x128xf32>
    %254 = vector.extract_strided_slice %5 {offsets = [0, 768], sizes = [8, 128], strides = [1, 1]} : vector<8x896xf32> to vector<8x128xf32>
    %c24_53 = arith.constant 24 : index
    %c768_54 = arith.constant 768 : index
    %255 = vector.load %arg2[%c24_53, %c768_54] : memref<128x896xf32, #tpu.memory_space<vmem>>, vector<8x128xf32>
    %256 = vector.shape_cast %254 : vector<8x128xf32> to vector<8x1x128xf32>
    %257 = vector.shape_cast %255 : vector<8x128xf32> to vector<1x8x128xf32>
    %258 = vector.broadcast %256 : vector<8x1x128xf32> to vector<8x8x128xf32>
    %259 = vector.broadcast %257 : vector<1x8x128xf32> to vector<8x8x128xf32>
    %260 = arith.subf %258, %259 : vector<8x8x128xf32>
    %261 = math.absf %260 : vector<8x8x128xf32>
    %262 = arith.addf %253, %261 : vector<8x8x128xf32>
    %cst_55 = arith.constant dense<0.000000e+00> : vector<8x8xf32>
    %263 = vector.multi_reduction <add>, %262, %cst_55 [2] : vector<8x8x128xf32> to vector<8x8xf32>
    %264 = arith.index_cast %3 : i32 to index
    %c24_56 = arith.constant 24 : index
    %265 = vector.load %arg5[%264, %c24_56] : memref<8x128xf32, #tpu.memory_space<vmem>>, vector<8x8xf32>
    tpu.vector_store %arg5[%264, %c24_56], %263 {strides = array<i32>} : memref<8x128xf32, #tpu.memory_space<vmem>>, vector<8x8xf32>,
    %266 = vector.extract_strided_slice %5 {offsets = [0, 0], sizes = [8, 128], strides = [1, 1]} : vector<8x896xf32> to vector<8x128xf32>
    %c32 = arith.constant 32 : index
    %c0_57 = arith.constant 0 : index
    %267 = vector.load %arg2[%c32, %c0_57] : memref<128x896xf32, #tpu.memory_space<vmem>>, vector<8x128xf32>
    %268 = vector.shape_cast %266 : vector<8x128xf32> to vector<8x1x128xf32>
    %269 = vector.shape_cast %267 : vector<8x128xf32> to vector<1x8x128xf32>
    %270 = vector.broadcast %268 : vector<8x1x128xf32> to vector<8x8x128xf32>
    %271 = vector.broadcast %269 : vector<1x8x128xf32> to vector<8x8x128xf32>
    %272 = arith.subf %270, %271 : vector<8x8x128xf32>
    %273 = math.absf %272 : vector<8x8x128xf32>
    %274 = vector.extract_strided_slice %5 {offsets = [0, 128], sizes = [8, 128], strides = [1, 1]} : vector<8x896xf32> to vector<8x128xf32>
    %c32_58 = arith.constant 32 : index
    %c128_59 = arith.constant 128 : index
    %275 = vector.load %arg2[%c32_58, %c128_59] : memref<128x896xf32, #tpu.memory_space<vmem>>, vector<8x128xf32>
    %276 = vector.shape_cast %274 : vector<8x128xf32> to vector<8x1x128xf32>
    %277 = vector.shape_cast %275 : vector<8x128xf32> to vector<1x8x128xf32>
    %278 = vector.broadcast %276 : vector<8x1x128xf32> to vector<8x8x128xf32>
    %279 = vector.broadcast %277 : vector<1x8x128xf32> to vector<8x8x128xf32>
    %280 = arith.subf %278, %279 : vector<8x8x128xf32>
    %281 = math.absf %280 : vector<8x8x128xf32>
    %282 = arith.addf %273, %281 : vector<8x8x128xf32>
    %283 = vector.extract_strided_slice %5 {offsets = [0, 256], sizes = [8, 128], strides = [1, 1]} : vector<8x896xf32> to vector<8x128xf32>
    %c32_60 = arith.constant 32 : index
    %c256_61 = arith.constant 256 : index
    %284 = vector.load %arg2[%c32_60, %c256_61] : memref<128x896xf32, #tpu.memory_space<vmem>>, vector<8x128xf32>
    %285 = vector.shape_cast %283 : vector<8x128xf32> to vector<8x1x128xf32>
    %286 = vector.shape_cast %284 : vector<8x128xf32> to vector<1x8x128xf32>
    %287 = vector.broadcast %285 : vector<8x1x128xf32> to vector<8x8x128xf32>
    %288 = vector.broadcast %286 : vector<1x8x128xf32> to vector<8x8x128xf32>
    %289 = arith.subf %287, %288 : vector<8x8x128xf32>
    %290 = math.absf %289 : vector<8x8x128xf32>
    %291 = arith.addf %282, %290 : vector<8x8x128xf32>
    %292 = vector.extract_strided_slice %5 {offsets = [0, 384], sizes = [8, 128], strides = [1, 1]} : vector<8x896xf32> to vector<8x128xf32>
    %c32_62 = arith.constant 32 : index
    %c384_63 = arith.constant 384 : index
    %293 = vector.load %arg2[%c32_62, %c384_63] : memref<128x896xf32, #tpu.memory_space<vmem>>, vector<8x128xf32>
    %294 = vector.shape_cast %292 : vector<8x128xf32> to vector<8x1x128xf32>
    %295 = vector.shape_cast %293 : vector<8x128xf32> to vector<1x8x128xf32>
    %296 = vector.broadcast %294 : vector<8x1x128xf32> to vector<8x8x128xf32>
    %297 = vector.broadcast %295 : vector<1x8x128xf32> to vector<8x8x128xf32>
    %298 = arith.subf %296, %297 : vector<8x8x128xf32>
    %299 = math.absf %298 : vector<8x8x128xf32>
    %300 = arith.addf %291, %299 : vector<8x8x128xf32>
    %301 = vector.extract_strided_slice %5 {offsets = [0, 512], sizes = [8, 128], strides = [1, 1]} : vector<8x896xf32> to vector<8x128xf32>
    %c32_64 = arith.constant 32 : index
    %c512_65 = arith.constant 512 : index
    %302 = vector.load %arg2[%c32_64, %c512_65] : memref<128x896xf32, #tpu.memory_space<vmem>>, vector<8x128xf32>
    %303 = vector.shape_cast %301 : vector<8x128xf32> to vector<8x1x128xf32>
    %304 = vector.shape_cast %302 : vector<8x128xf32> to vector<1x8x128xf32>
    %305 = vector.broadcast %303 : vector<8x1x128xf32> to vector<8x8x128xf32>
    %306 = vector.broadcast %304 : vector<1x8x128xf32> to vector<8x8x128xf32>
    %307 = arith.subf %305, %306 : vector<8x8x128xf32>
    %308 = math.absf %307 : vector<8x8x128xf32>
    %309 = arith.addf %300, %308 : vector<8x8x128xf32>
    %310 = vector.extract_strided_slice %5 {offsets = [0, 640], sizes = [8, 128], strides = [1, 1]} : vector<8x896xf32> to vector<8x128xf32>
    %c32_66 = arith.constant 32 : index
    %c640_67 = arith.constant 640 : index
    %311 = vector.load %arg2[%c32_66, %c640_67] : memref<128x896xf32, #tpu.memory_space<vmem>>, vector<8x128xf32>
    %312 = vector.shape_cast %310 : vector<8x128xf32> to vector<8x1x128xf32>
    %313 = vector.shape_cast %311 : vector<8x128xf32> to vector<1x8x128xf32>
    %314 = vector.broadcast %312 : vector<8x1x128xf32> to vector<8x8x128xf32>
    %315 = vector.broadcast %313 : vector<1x8x128xf32> to vector<8x8x128xf32>
    %316 = arith.subf %314, %315 : vector<8x8x128xf32>
    %317 = math.absf %316 : vector<8x8x128xf32>
    %318 = arith.addf %309, %317 : vector<8x8x128xf32>
    %319 = vector.extract_strided_slice %5 {offsets = [0, 768], sizes = [8, 128], strides = [1, 1]} : vector<8x896xf32> to vector<8x128xf32>
    %c32_68 = arith.constant 32 : index
    %c768_69 = arith.constant 768 : index
    %320 = vector.load %arg2[%c32_68, %c768_69] : memref<128x896xf32, #tpu.memory_space<vmem>>, vector<8x128xf32>
    %321 = vector.shape_cast %319 : vector<8x128xf32> to vector<8x1x128xf32>
    %322 = vector.shape_cast %320 : vector<8x128xf32> to vector<1x8x128xf32>
    %323 = vector.broadcast %321 : vector<8x1x128xf32> to vector<8x8x128xf32>
    %324 = vector.broadcast %322 : vector<1x8x128xf32> to vector<8x8x128xf32>
    %325 = arith.subf %323, %324 : vector<8x8x128xf32>
    %326 = math.absf %325 : vector<8x8x128xf32>
    %327 = arith.addf %318, %326 : vector<8x8x128xf32>
    %cst_70 = arith.constant dense<0.000000e+00> : vector<8x8xf32>
    %328 = vector.multi_reduction <add>, %327, %cst_70 [2] : vector<8x8x128xf32> to vector<8x8xf32>
    %329 = arith.index_cast %3 : i32 to index
    %c32_71 = arith.constant 32 : index
    %330 = vector.load %arg5[%329, %c32_71] : memref<8x128xf32, #tpu.memory_space<vmem>>, vector<8x8xf32>
    tpu.vector_store %arg5[%329, %c32_71], %328 {strides = array<i32>} : memref<8x128xf32, #tpu.memory_space<vmem>>, vector<8x8xf32>,
    %331 = vector.extract_strided_slice %5 {offsets = [0, 0], sizes = [8, 128], strides = [1, 1]} : vector<8x896xf32> to vector<8x128xf32>
    %c40 = arith.constant 40 : index
    %c0_72 = arith.constant 0 : index
    %332 = vector.load %arg2[%c40, %c0_72] : memref<128x896xf32, #tpu.memory_space<vmem>>, vector<8x128xf32>
    %333 = vector.shape_cast %331 : vector<8x128xf32> to vector<8x1x128xf32>
    %334 = vector.shape_cast %332 : vector<8x128xf32> to vector<1x8x128xf32>
    %335 = vector.broadcast %333 : vector<8x1x128xf32> to vector<8x8x128xf32>
    %336 = vector.broadcast %334 : vector<1x8x128xf32> to vector<8x8x128xf32>
    %337 = arith.subf %335, %336 : vector<8x8x128xf32>
    %338 = math.absf %337 : vector<8x8x128xf32>
    %339 = vector.extract_strided_slice %5 {offsets = [0, 128], sizes = [8, 128], strides = [1, 1]} : vector<8x896xf32> to vector<8x128xf32>
    %c40_73 = arith.constant 40 : index
    %c128_74 = arith.constant 128 : index
    %340 = vector.load %arg2[%c40_73, %c128_74] : memref<128x896xf32, #tpu.memory_space<vmem>>, vector<8x128xf32>
    %341 = vector.shape_cast %339 : vector<8x128xf32> to vector<8x1x128xf32>
    %342 = vector.shape_cast %340 : vector<8x128xf32> to vector<1x8x128xf32>
    %343 = vector.broadcast %341 : vector<8x1x128xf32> to vector<8x8x128xf32>
    %344 = vector.broadcast %342 : vector<1x8x128xf32> to vector<8x8x128xf32>
    %345 = arith.subf %343, %344 : vector<8x8x128xf32>
    %346 = math.absf %345 : vector<8x8x128xf32>
    %347 = arith.addf %338, %346 : vector<8x8x128xf32>
    %348 = vector.extract_strided_slice %5 {offsets = [0, 256], sizes = [8, 128], strides = [1, 1]} : vector<8x896xf32> to vector<8x128xf32>
    %c40_75 = arith.constant 40 : index
    %c256_76 = arith.constant 256 : index
    %349 = vector.load %arg2[%c40_75, %c256_76] : memref<128x896xf32, #tpu.memory_space<vmem>>, vector<8x128xf32>
    %350 = vector.shape_cast %348 : vector<8x128xf32> to vector<8x1x128xf32>
    %351 = vector.shape_cast %349 : vector<8x128xf32> to vector<1x8x128xf32>
    %352 = vector.broadcast %350 : vector<8x1x128xf32> to vector<8x8x128xf32>
    %353 = vector.broadcast %351 : vector<1x8x128xf32> to vector<8x8x128xf32>
    %354 = arith.subf %352, %353 : vector<8x8x128xf32>
    %355 = math.absf %354 : vector<8x8x128xf32>
    %356 = arith.addf %347, %355 : vector<8x8x128xf32>
    %357 = vector.extract_strided_slice %5 {offsets = [0, 384], sizes = [8, 128], strides = [1, 1]} : vector<8x896xf32> to vector<8x128xf32>
    %c40_77 = arith.constant 40 : index
    %c384_78 = arith.constant 384 : index
    %358 = vector.load %arg2[%c40_77, %c384_78] : memref<128x896xf32, #tpu.memory_space<vmem>>, vector<8x128xf32>
    %359 = vector.shape_cast %357 : vector<8x128xf32> to vector<8x1x128xf32>
    %360 = vector.shape_cast %358 : vector<8x128xf32> to vector<1x8x128xf32>
    %361 = vector.broadcast %359 : vector<8x1x128xf32> to vector<8x8x128xf32>
    %362 = vector.broadcast %360 : vector<1x8x128xf32> to vector<8x8x128xf32>
    %363 = arith.subf %361, %362 : vector<8x8x128xf32>
    %364 = math.absf %363 : vector<8x8x128xf32>
    %365 = arith.addf %356, %364 : vector<8x8x128xf32>
    %366 = vector.extract_strided_slice %5 {offsets = [0, 512], sizes = [8, 128], strides = [1, 1]} : vector<8x896xf32> to vector<8x128xf32>
    %c40_79 = arith.constant 40 : index
    %c512_80 = arith.constant 512 : index
    %367 = vector.load %arg2[%c40_79, %c512_80] : memref<128x896xf32, #tpu.memory_space<vmem>>, vector<8x128xf32>
    %368 = vector.shape_cast %366 : vector<8x128xf32> to vector<8x1x128xf32>
    %369 = vector.shape_cast %367 : vector<8x128xf32> to vector<1x8x128xf32>
    %370 = vector.broadcast %368 : vector<8x1x128xf32> to vector<8x8x128xf32>
    %371 = vector.broadcast %369 : vector<1x8x128xf32> to vector<8x8x128xf32>
    %372 = arith.subf %370, %371 : vector<8x8x128xf32>
    %373 = math.absf %372 : vector<8x8x128xf32>
    %374 = arith.addf %365, %373 : vector<8x8x128xf32>
    %375 = vector.extract_strided_slice %5 {offsets = [0, 640], sizes = [8, 128], strides = [1, 1]} : vector<8x896xf32> to vector<8x128xf32>
    %c40_81 = arith.constant 40 : index
    %c640_82 = arith.constant 640 : index
    %376 = vector.load %arg2[%c40_81, %c640_82] : memref<128x896xf32, #tpu.memory_space<vmem>>, vector<8x128xf32>
    %377 = vector.shape_cast %375 : vector<8x128xf32> to vector<8x1x128xf32>
    %378 = vector.shape_cast %376 : vector<8x128xf32> to vector<1x8x128xf32>
    %379 = vector.broadcast %377 : vector<8x1x128xf32> to vector<8x8x128xf32>
    %380 = vector.broadcast %378 : vector<1x8x128xf32> to vector<8x8x128xf32>
    %381 = arith.subf %379, %380 : vector<8x8x128xf32>
    %382 = math.absf %381 : vector<8x8x128xf32>
    %383 = arith.addf %374, %382 : vector<8x8x128xf32>
    %384 = vector.extract_strided_slice %5 {offsets = [0, 768], sizes = [8, 128], strides = [1, 1]} : vector<8x896xf32> to vector<8x128xf32>
    %c40_83 = arith.constant 40 : index
    %c768_84 = arith.constant 768 : index
    %385 = vector.load %arg2[%c40_83, %c768_84] : memref<128x896xf32, #tpu.memory_space<vmem>>, vector<8x128xf32>
    %386 = vector.shape_cast %384 : vector<8x128xf32> to vector<8x1x128xf32>
    %387 = vector.shape_cast %385 : vector<8x128xf32> to vector<1x8x128xf32>
    %388 = vector.broadcast %386 : vector<8x1x128xf32> to vector<8x8x128xf32>
    %389 = vector.broadcast %387 : vector<1x8x128xf32> to vector<8x8x128xf32>
    %390 = arith.subf %388, %389 : vector<8x8x128xf32>
    %391 = math.absf %390 : vector<8x8x128xf32>
    %392 = arith.addf %383, %391 : vector<8x8x128xf32>
    %cst_85 = arith.constant dense<0.000000e+00> : vector<8x8xf32>
    %393 = vector.multi_reduction <add>, %392, %cst_85 [2] : vector<8x8x128xf32> to vector<8x8xf32>
    %394 = arith.index_cast %3 : i32 to index
    %c40_86 = arith.constant 40 : index
    %395 = vector.load %arg5[%394, %c40_86] : memref<8x128xf32, #tpu.memory_space<vmem>>, vector<8x8xf32>
    tpu.vector_store %arg5[%394, %c40_86], %393 {strides = array<i32>} : memref<8x128xf32, #tpu.memory_space<vmem>>, vector<8x8xf32>,
    %396 = vector.extract_strided_slice %5 {offsets = [0, 0], sizes = [8, 128], strides = [1, 1]} : vector<8x896xf32> to vector<8x128xf32>
    %c48 = arith.constant 48 : index
    %c0_87 = arith.constant 0 : index
    %397 = vector.load %arg2[%c48, %c0_87] : memref<128x896xf32, #tpu.memory_space<vmem>>, vector<8x128xf32>
    %398 = vector.shape_cast %396 : vector<8x128xf32> to vector<8x1x128xf32>
    %399 = vector.shape_cast %397 : vector<8x128xf32> to vector<1x8x128xf32>
    %400 = vector.broadcast %398 : vector<8x1x128xf32> to vector<8x8x128xf32>
    %401 = vector.broadcast %399 : vector<1x8x128xf32> to vector<8x8x128xf32>
    %402 = arith.subf %400, %401 : vector<8x8x128xf32>
    %403 = math.absf %402 : vector<8x8x128xf32>
    %404 = vector.extract_strided_slice %5 {offsets = [0, 128], sizes = [8, 128], strides = [1, 1]} : vector<8x896xf32> to vector<8x128xf32>
    %c48_88 = arith.constant 48 : index
    %c128_89 = arith.constant 128 : index
    %405 = vector.load %arg2[%c48_88, %c128_89] : memref<128x896xf32, #tpu.memory_space<vmem>>, vector<8x128xf32>
    %406 = vector.shape_cast %404 : vector<8x128xf32> to vector<8x1x128xf32>
    %407 = vector.shape_cast %405 : vector<8x128xf32> to vector<1x8x128xf32>
    %408 = vector.broadcast %406 : vector<8x1x128xf32> to vector<8x8x128xf32>
    %409 = vector.broadcast %407 : vector<1x8x128xf32> to vector<8x8x128xf32>
    %410 = arith.subf %408, %409 : vector<8x8x128xf32>
    %411 = math.absf %410 : vector<8x8x128xf32>
    %412 = arith.addf %403, %411 : vector<8x8x128xf32>
    %413 = vector.extract_strided_slice %5 {offsets = [0, 256], sizes = [8, 128], strides = [1, 1]} : vector<8x896xf32> to vector<8x128xf32>
    %c48_90 = arith.constant 48 : index
    %c256_91 = arith.constant 256 : index
    %414 = vector.load %arg2[%c48_90, %c256_91] : memref<128x896xf32, #tpu.memory_space<vmem>>, vector<8x128xf32>
    %415 = vector.shape_cast %413 : vector<8x128xf32> to vector<8x1x128xf32>
    %416 = vector.shape_cast %414 : vector<8x128xf32> to vector<1x8x128xf32>
    %417 = vector.broadcast %415 : vector<8x1x128xf32> to vector<8x8x128xf32>
    %418 = vector.broadcast %416 : vector<1x8x128xf32> to vector<8x8x128xf32>
    %419 = arith.subf %417, %418 : vector<8x8x128xf32>
    %420 = math.absf %419 : vector<8x8x128xf32>
    %421 = arith.addf %412, %420 : vector<8x8x128xf32>
    %422 = vector.extract_strided_slice %5 {offsets = [0, 384], sizes = [8, 128], strides = [1, 1]} : vector<8x896xf32> to vector<8x128xf32>
    %c48_92 = arith.constant 48 : index
    %c384_93 = arith.constant 384 : index
    %423 = vector.load %arg2[%c48_92, %c384_93] : memref<128x896xf32, #tpu.memory_space<vmem>>, vector<8x128xf32>
    %424 = vector.shape_cast %422 : vector<8x128xf32> to vector<8x1x128xf32>
    %425 = vector.shape_cast %423 : vector<8x128xf32> to vector<1x8x128xf32>
    %426 = vector.broadcast %424 : vector<8x1x128xf32> to vector<8x8x128xf32>
    %427 = vector.broadcast %425 : vector<1x8x128xf32> to vector<8x8x128xf32>
    %428 = arith.subf %426, %427 : vector<8x8x128xf32>
    %429 = math.absf %428 : vector<8x8x128xf32>
    %430 = arith.addf %421, %429 : vector<8x8x128xf32>
    %431 = vector.extract_strided_slice %5 {offsets = [0, 512], sizes = [8, 128], strides = [1, 1]} : vector<8x896xf32> to vector<8x128xf32>
    %c48_94 = arith.constant 48 : index
    %c512_95 = arith.constant 512 : index
    %432 = vector.load %arg2[%c48_94, %c512_95] : memref<128x896xf32, #tpu.memory_space<vmem>>, vector<8x128xf32>
    %433 = vector.shape_cast %431 : vector<8x128xf32> to vector<8x1x128xf32>
    %434 = vector.shape_cast %432 : vector<8x128xf32> to vector<1x8x128xf32>
    %435 = vector.broadcast %433 : vector<8x1x128xf32> to vector<8x8x128xf32>
    %436 = vector.broadcast %434 : vector<1x8x128xf32> to vector<8x8x128xf32>
    %437 = arith.subf %435, %436 : vector<8x8x128xf32>
    %438 = math.absf %437 : vector<8x8x128xf32>
    %439 = arith.addf %430, %438 : vector<8x8x128xf32>
    %440 = vector.extract_strided_slice %5 {offsets = [0, 640], sizes = [8, 128], strides = [1, 1]} : vector<8x896xf32> to vector<8x128xf32>
    %c48_96 = arith.constant 48 : index
    %c640_97 = arith.constant 640 : index
    %441 = vector.load %arg2[%c48_96, %c640_97] : memref<128x896xf32, #tpu.memory_space<vmem>>, vector<8x128xf32>
    %442 = vector.shape_cast %440 : vector<8x128xf32> to vector<8x1x128xf32>
    %443 = vector.shape_cast %441 : vector<8x128xf32> to vector<1x8x128xf32>
    %444 = vector.broadcast %442 : vector<8x1x128xf32> to vector<8x8x128xf32>
    %445 = vector.broadcast %443 : vector<1x8x128xf32> to vector<8x8x128xf32>
    %446 = arith.subf %444, %445 : vector<8x8x128xf32>
    %447 = math.absf %446 : vector<8x8x128xf32>
    %448 = arith.addf %439, %447 : vector<8x8x128xf32>
    %449 = vector.extract_strided_slice %5 {offsets = [0, 768], sizes = [8, 128], strides = [1, 1]} : vector<8x896xf32> to vector<8x128xf32>
    %c48_98 = arith.constant 48 : index
    %c768_99 = arith.constant 768 : index
    %450 = vector.load %arg2[%c48_98, %c768_99] : memref<128x896xf32, #tpu.memory_space<vmem>>, vector<8x128xf32>
    %451 = vector.shape_cast %449 : vector<8x128xf32> to vector<8x1x128xf32>
    %452 = vector.shape_cast %450 : vector<8x128xf32> to vector<1x8x128xf32>
    %453 = vector.broadcast %451 : vector<8x1x128xf32> to vector<8x8x128xf32>
    %454 = vector.broadcast %452 : vector<1x8x128xf32> to vector<8x8x128xf32>
    %455 = arith.subf %453, %454 : vector<8x8x128xf32>
    %456 = math.absf %455 : vector<8x8x128xf32>
    %457 = arith.addf %448, %456 : vector<8x8x128xf32>
    %cst_100 = arith.constant dense<0.000000e+00> : vector<8x8xf32>
    %458 = vector.multi_reduction <add>, %457, %cst_100 [2] : vector<8x8x128xf32> to vector<8x8xf32>
    %459 = arith.index_cast %3 : i32 to index
    %c48_101 = arith.constant 48 : index
    %460 = vector.load %arg5[%459, %c48_101] : memref<8x128xf32, #tpu.memory_space<vmem>>, vector<8x8xf32>
    tpu.vector_store %arg5[%459, %c48_101], %458 {strides = array<i32>} : memref<8x128xf32, #tpu.memory_space<vmem>>, vector<8x8xf32>,
    %461 = vector.extract_strided_slice %5 {offsets = [0, 0], sizes = [8, 128], strides = [1, 1]} : vector<8x896xf32> to vector<8x128xf32>
    %c56 = arith.constant 56 : index
    %c0_102 = arith.constant 0 : index
    %462 = vector.load %arg2[%c56, %c0_102] : memref<128x896xf32, #tpu.memory_space<vmem>>, vector<8x128xf32>
    %463 = vector.shape_cast %461 : vector<8x128xf32> to vector<8x1x128xf32>
    %464 = vector.shape_cast %462 : vector<8x128xf32> to vector<1x8x128xf32>
    %465 = vector.broadcast %463 : vector<8x1x128xf32> to vector<8x8x128xf32>
    %466 = vector.broadcast %464 : vector<1x8x128xf32> to vector<8x8x128xf32>
    %467 = arith.subf %465, %466 : vector<8x8x128xf32>
    %468 = math.absf %467 : vector<8x8x128xf32>
    %469 = vector.extract_strided_slice %5 {offsets = [0, 128], sizes = [8, 128], strides = [1, 1]} : vector<8x896xf32> to vector<8x128xf32>
    %c56_103 = arith.constant 56 : index
    %c128_104 = arith.constant 128 : index
    %470 = vector.load %arg2[%c56_103, %c128_104] : memref<128x896xf32, #tpu.memory_space<vmem>>, vector<8x128xf32>
    %471 = vector.shape_cast %469 : vector<8x128xf32> to vector<8x1x128xf32>
    %472 = vector.shape_cast %470 : vector<8x128xf32> to vector<1x8x128xf32>
    %473 = vector.broadcast %471 : vector<8x1x128xf32> to vector<8x8x128xf32>
    %474 = vector.broadcast %472 : vector<1x8x128xf32> to vector<8x8x128xf32>
    %475 = arith.subf %473, %474 : vector<8x8x128xf32>
    %476 = math.absf %475 : vector<8x8x128xf32>
    %477 = arith.addf %468, %476 : vector<8x8x128xf32>
    %478 = vector.extract_strided_slice %5 {offsets = [0, 256], sizes = [8, 128], strides = [1, 1]} : vector<8x896xf32> to vector<8x128xf32>
    %c56_105 = arith.constant 56 : index
    %c256_106 = arith.constant 256 : index
    %479 = vector.load %arg2[%c56_105, %c256_106] : memref<128x896xf32, #tpu.memory_space<vmem>>, vector<8x128xf32>
    %480 = vector.shape_cast %478 : vector<8x128xf32> to vector<8x1x128xf32>
    %481 = vector.shape_cast %479 : vector<8x128xf32> to vector<1x8x128xf32>
    %482 = vector.broadcast %480 : vector<8x1x128xf32> to vector<8x8x128xf32>
    %483 = vector.broadcast %481 : vector<1x8x128xf32> to vector<8x8x128xf32>
    %484 = arith.subf %482, %483 : vector<8x8x128xf32>
    %485 = math.absf %484 : vector<8x8x128xf32>
    %486 = arith.addf %477, %485 : vector<8x8x128xf32>
    %487 = vector.extract_strided_slice %5 {offsets = [0, 384], sizes = [8, 128], strides = [1, 1]} : vector<8x896xf32> to vector<8x128xf32>
    %c56_107 = arith.constant 56 : index
    %c384_108 = arith.constant 384 : index
    %488 = vector.load %arg2[%c56_107, %c384_108] : memref<128x896xf32, #tpu.memory_space<vmem>>, vector<8x128xf32>
    %489 = vector.shape_cast %487 : vector<8x128xf32> to vector<8x1x128xf32>
    %490 = vector.shape_cast %488 : vector<8x128xf32> to vector<1x8x128xf32>
    %491 = vector.broadcast %489 : vector<8x1x128xf32> to vector<8x8x128xf32>
    %492 = vector.broadcast %490 : vector<1x8x128xf32> to vector<8x8x128xf32>
    %493 = arith.subf %491, %492 : vector<8x8x128xf32>
    %494 = math.absf %493 : vector<8x8x128xf32>
    %495 = arith.addf %486, %494 : vector<8x8x128xf32>
    %496 = vector.extract_strided_slice %5 {offsets = [0, 512], sizes = [8, 128], strides = [1, 1]} : vector<8x896xf32> to vector<8x128xf32>
    %c56_109 = arith.constant 56 : index
    %c512_110 = arith.constant 512 : index
    %497 = vector.load %arg2[%c56_109, %c512_110] : memref<128x896xf32, #tpu.memory_space<vmem>>, vector<8x128xf32>
    %498 = vector.shape_cast %496 : vector<8x128xf32> to vector<8x1x128xf32>
    %499 = vector.shape_cast %497 : vector<8x128xf32> to vector<1x8x128xf32>
    %500 = vector.broadcast %498 : vector<8x1x128xf32> to vector<8x8x128xf32>
    %501 = vector.broadcast %499 : vector<1x8x128xf32> to vector<8x8x128xf32>
    %502 = arith.subf %500, %501 : vector<8x8x128xf32>
    %503 = math.absf %502 : vector<8x8x128xf32>
    %504 = arith.addf %495, %503 : vector<8x8x128xf32>
    %505 = vector.extract_strided_slice %5 {offsets = [0, 640], sizes = [8, 128], strides = [1, 1]} : vector<8x896xf32> to vector<8x128xf32>
    %c56_111 = arith.constant 56 : index
    %c640_112 = arith.constant 640 : index
    %506 = vector.load %arg2[%c56_111, %c640_112] : memref<128x896xf32, #tpu.memory_space<vmem>>, vector<8x128xf32>
    %507 = vector.shape_cast %505 : vector<8x128xf32> to vector<8x1x128xf32>
    %508 = vector.shape_cast %506 : vector<8x128xf32> to vector<1x8x128xf32>
    %509 = vector.broadcast %507 : vector<8x1x128xf32> to vector<8x8x128xf32>
    %510 = vector.broadcast %508 : vector<1x8x128xf32> to vector<8x8x128xf32>
    %511 = arith.subf %509, %510 : vector<8x8x128xf32>
    %512 = math.absf %511 : vector<8x8x128xf32>
    %513 = arith.addf %504, %512 : vector<8x8x128xf32>
    %514 = vector.extract_strided_slice %5 {offsets = [0, 768], sizes = [8, 128], strides = [1, 1]} : vector<8x896xf32> to vector<8x128xf32>
    %c56_113 = arith.constant 56 : index
    %c768_114 = arith.constant 768 : index
    %515 = vector.load %arg2[%c56_113, %c768_114] : memref<128x896xf32, #tpu.memory_space<vmem>>, vector<8x128xf32>
    %516 = vector.shape_cast %514 : vector<8x128xf32> to vector<8x1x128xf32>
    %517 = vector.shape_cast %515 : vector<8x128xf32> to vector<1x8x128xf32>
    %518 = vector.broadcast %516 : vector<8x1x128xf32> to vector<8x8x128xf32>
    %519 = vector.broadcast %517 : vector<1x8x128xf32> to vector<8x8x128xf32>
    %520 = arith.subf %518, %519 : vector<8x8x128xf32>
    %521 = math.absf %520 : vector<8x8x128xf32>
    %522 = arith.addf %513, %521 : vector<8x8x128xf32>
    %cst_115 = arith.constant dense<0.000000e+00> : vector<8x8xf32>
    %523 = vector.multi_reduction <add>, %522, %cst_115 [2] : vector<8x8x128xf32> to vector<8x8xf32>
    %524 = arith.index_cast %3 : i32 to index
    %c56_116 = arith.constant 56 : index
    %525 = vector.load %arg5[%524, %c56_116] : memref<8x128xf32, #tpu.memory_space<vmem>>, vector<8x8xf32>
    tpu.vector_store %arg5[%524, %c56_116], %523 {strides = array<i32>} : memref<8x128xf32, #tpu.memory_space<vmem>>, vector<8x8xf32>,
    %526 = vector.extract_strided_slice %5 {offsets = [0, 0], sizes = [8, 128], strides = [1, 1]} : vector<8x896xf32> to vector<8x128xf32>
    %c64 = arith.constant 64 : index
    %c0_117 = arith.constant 0 : index
    %527 = vector.load %arg2[%c64, %c0_117] : memref<128x896xf32, #tpu.memory_space<vmem>>, vector<8x128xf32>
    %528 = vector.shape_cast %526 : vector<8x128xf32> to vector<8x1x128xf32>
    %529 = vector.shape_cast %527 : vector<8x128xf32> to vector<1x8x128xf32>
    %530 = vector.broadcast %528 : vector<8x1x128xf32> to vector<8x8x128xf32>
    %531 = vector.broadcast %529 : vector<1x8x128xf32> to vector<8x8x128xf32>
    %532 = arith.subf %530, %531 : vector<8x8x128xf32>
    %533 = math.absf %532 : vector<8x8x128xf32>
    %534 = vector.extract_strided_slice %5 {offsets = [0, 128], sizes = [8, 128], strides = [1, 1]} : vector<8x896xf32> to vector<8x128xf32>
    %c64_118 = arith.constant 64 : index
    %c128_119 = arith.constant 128 : index
    %535 = vector.load %arg2[%c64_118, %c128_119] : memref<128x896xf32, #tpu.memory_space<vmem>>, vector<8x128xf32>
    %536 = vector.shape_cast %534 : vector<8x128xf32> to vector<8x1x128xf32>
    %537 = vector.shape_cast %535 : vector<8x128xf32> to vector<1x8x128xf32>
    %538 = vector.broadcast %536 : vector<8x1x128xf32> to vector<8x8x128xf32>
    %539 = vector.broadcast %537 : vector<1x8x128xf32> to vector<8x8x128xf32>
    %540 = arith.subf %538, %539 : vector<8x8x128xf32>
    %541 = math.absf %540 : vector<8x8x128xf32>
    %542 = arith.addf %533, %541 : vector<8x8x128xf32>
    %543 = vector.extract_strided_slice %5 {offsets = [0, 256], sizes = [8, 128], strides = [1, 1]} : vector<8x896xf32> to vector<8x128xf32>
    %c64_120 = arith.constant 64 : index
    %c256_121 = arith.constant 256 : index
    %544 = vector.load %arg2[%c64_120, %c256_121] : memref<128x896xf32, #tpu.memory_space<vmem>>, vector<8x128xf32>
    %545 = vector.shape_cast %543 : vector<8x128xf32> to vector<8x1x128xf32>
    %546 = vector.shape_cast %544 : vector<8x128xf32> to vector<1x8x128xf32>
    %547 = vector.broadcast %545 : vector<8x1x128xf32> to vector<8x8x128xf32>
    %548 = vector.broadcast %546 : vector<1x8x128xf32> to vector<8x8x128xf32>
    %549 = arith.subf %547, %548 : vector<8x8x128xf32>
    %550 = math.absf %549 : vector<8x8x128xf32>
    %551 = arith.addf %542, %550 : vector<8x8x128xf32>
    %552 = vector.extract_strided_slice %5 {offsets = [0, 384], sizes = [8, 128], strides = [1, 1]} : vector<8x896xf32> to vector<8x128xf32>
    %c64_122 = arith.constant 64 : index
    %c384_123 = arith.constant 384 : index
    %553 = vector.load %arg2[%c64_122, %c384_123] : memref<128x896xf32, #tpu.memory_space<vmem>>, vector<8x128xf32>
    %554 = vector.shape_cast %552 : vector<8x128xf32> to vector<8x1x128xf32>
    %555 = vector.shape_cast %553 : vector<8x128xf32> to vector<1x8x128xf32>
    %556 = vector.broadcast %554 : vector<8x1x128xf32> to vector<8x8x128xf32>
    %557 = vector.broadcast %555 : vector<1x8x128xf32> to vector<8x8x128xf32>
    %558 = arith.subf %556, %557 : vector<8x8x128xf32>
    %559 = math.absf %558 : vector<8x8x128xf32>
    %560 = arith.addf %551, %559 : vector<8x8x128xf32>
    %561 = vector.extract_strided_slice %5 {offsets = [0, 512], sizes = [8, 128], strides = [1, 1]} : vector<8x896xf32> to vector<8x128xf32>
    %c64_124 = arith.constant 64 : index
    %c512_125 = arith.constant 512 : index
    %562 = vector.load %arg2[%c64_124, %c512_125] : memref<128x896xf32, #tpu.memory_space<vmem>>, vector<8x128xf32>
    %563 = vector.shape_cast %561 : vector<8x128xf32> to vector<8x1x128xf32>
    %564 = vector.shape_cast %562 : vector<8x128xf32> to vector<1x8x128xf32>
    %565 = vector.broadcast %563 : vector<8x1x128xf32> to vector<8x8x128xf32>
    %566 = vector.broadcast %564 : vector<1x8x128xf32> to vector<8x8x128xf32>
    %567 = arith.subf %565, %566 : vector<8x8x128xf32>
    %568 = math.absf %567 : vector<8x8x128xf32>
    %569 = arith.addf %560, %568 : vector<8x8x128xf32>
    %570 = vector.extract_strided_slice %5 {offsets = [0, 640], sizes = [8, 128], strides = [1, 1]} : vector<8x896xf32> to vector<8x128xf32>
    %c64_126 = arith.constant 64 : index
    %c640_127 = arith.constant 640 : index
    %571 = vector.load %arg2[%c64_126, %c640_127] : memref<128x896xf32, #tpu.memory_space<vmem>>, vector<8x128xf32>
    %572 = vector.shape_cast %570 : vector<8x128xf32> to vector<8x1x128xf32>
    %573 = vector.shape_cast %571 : vector<8x128xf32> to vector<1x8x128xf32>
    %574 = vector.broadcast %572 : vector<8x1x128xf32> to vector<8x8x128xf32>
    %575 = vector.broadcast %573 : vector<1x8x128xf32> to vector<8x8x128xf32>
    %576 = arith.subf %574, %575 : vector<8x8x128xf32>
    %577 = math.absf %576 : vector<8x8x128xf32>
    %578 = arith.addf %569, %577 : vector<8x8x128xf32>
    %579 = vector.extract_strided_slice %5 {offsets = [0, 768], sizes = [8, 128], strides = [1, 1]} : vector<8x896xf32> to vector<8x128xf32>
    %c64_128 = arith.constant 64 : index
    %c768_129 = arith.constant 768 : index
    %580 = vector.load %arg2[%c64_128, %c768_129] : memref<128x896xf32, #tpu.memory_space<vmem>>, vector<8x128xf32>
    %581 = vector.shape_cast %579 : vector<8x128xf32> to vector<8x1x128xf32>
    %582 = vector.shape_cast %580 : vector<8x128xf32> to vector<1x8x128xf32>
    %583 = vector.broadcast %581 : vector<8x1x128xf32> to vector<8x8x128xf32>
    %584 = vector.broadcast %582 : vector<1x8x128xf32> to vector<8x8x128xf32>
    %585 = arith.subf %583, %584 : vector<8x8x128xf32>
    %586 = math.absf %585 : vector<8x8x128xf32>
    %587 = arith.addf %578, %586 : vector<8x8x128xf32>
    %cst_130 = arith.constant dense<0.000000e+00> : vector<8x8xf32>
    %588 = vector.multi_reduction <add>, %587, %cst_130 [2] : vector<8x8x128xf32> to vector<8x8xf32>
    %589 = arith.index_cast %3 : i32 to index
    %c64_131 = arith.constant 64 : index
    %590 = vector.load %arg5[%589, %c64_131] : memref<8x128xf32, #tpu.memory_space<vmem>>, vector<8x8xf32>
    tpu.vector_store %arg5[%589, %c64_131], %588 {strides = array<i32>} : memref<8x128xf32, #tpu.memory_space<vmem>>, vector<8x8xf32>,
    %591 = vector.extract_strided_slice %5 {offsets = [0, 0], sizes = [8, 128], strides = [1, 1]} : vector<8x896xf32> to vector<8x128xf32>
    %c72 = arith.constant 72 : index
    %c0_132 = arith.constant 0 : index
    %592 = vector.load %arg2[%c72, %c0_132] : memref<128x896xf32, #tpu.memory_space<vmem>>, vector<8x128xf32>
    %593 = vector.shape_cast %591 : vector<8x128xf32> to vector<8x1x128xf32>
    %594 = vector.shape_cast %592 : vector<8x128xf32> to vector<1x8x128xf32>
    %595 = vector.broadcast %593 : vector<8x1x128xf32> to vector<8x8x128xf32>
    %596 = vector.broadcast %594 : vector<1x8x128xf32> to vector<8x8x128xf32>
    %597 = arith.subf %595, %596 : vector<8x8x128xf32>
    %598 = math.absf %597 : vector<8x8x128xf32>
    %599 = vector.extract_strided_slice %5 {offsets = [0, 128], sizes = [8, 128], strides = [1, 1]} : vector<8x896xf32> to vector<8x128xf32>
    %c72_133 = arith.constant 72 : index
    %c128_134 = arith.constant 128 : index
    %600 = vector.load %arg2[%c72_133, %c128_134] : memref<128x896xf32, #tpu.memory_space<vmem>>, vector<8x128xf32>
    %601 = vector.shape_cast %599 : vector<8x128xf32> to vector<8x1x128xf32>
    %602 = vector.shape_cast %600 : vector<8x128xf32> to vector<1x8x128xf32>
    %603 = vector.broadcast %601 : vector<8x1x128xf32> to vector<8x8x128xf32>
    %604 = vector.broadcast %602 : vector<1x8x128xf32> to vector<8x8x128xf32>
    %605 = arith.subf %603, %604 : vector<8x8x128xf32>
    %606 = math.absf %605 : vector<8x8x128xf32>
    %607 = arith.addf %598, %606 : vector<8x8x128xf32>
    %608 = vector.extract_strided_slice %5 {offsets = [0, 256], sizes = [8, 128], strides = [1, 1]} : vector<8x896xf32> to vector<8x128xf32>
    %c72_135 = arith.constant 72 : index
    %c256_136 = arith.constant 256 : index
    %609 = vector.load %arg2[%c72_135, %c256_136] : memref<128x896xf32, #tpu.memory_space<vmem>>, vector<8x128xf32>
    %610 = vector.shape_cast %608 : vector<8x128xf32> to vector<8x1x128xf32>
    %611 = vector.shape_cast %609 : vector<8x128xf32> to vector<1x8x128xf32>
    %612 = vector.broadcast %610 : vector<8x1x128xf32> to vector<8x8x128xf32>
    %613 = vector.broadcast %611 : vector<1x8x128xf32> to vector<8x8x128xf32>
    %614 = arith.subf %612, %613 : vector<8x8x128xf32>
    %615 = math.absf %614 : vector<8x8x128xf32>
    %616 = arith.addf %607, %615 : vector<8x8x128xf32>
    %617 = vector.extract_strided_slice %5 {offsets = [0, 384], sizes = [8, 128], strides = [1, 1]} : vector<8x896xf32> to vector<8x128xf32>
    %c72_137 = arith.constant 72 : index
    %c384_138 = arith.constant 384 : index
    %618 = vector.load %arg2[%c72_137, %c384_138] : memref<128x896xf32, #tpu.memory_space<vmem>>, vector<8x128xf32>
    %619 = vector.shape_cast %617 : vector<8x128xf32> to vector<8x1x128xf32>
    %620 = vector.shape_cast %618 : vector<8x128xf32> to vector<1x8x128xf32>
    %621 = vector.broadcast %619 : vector<8x1x128xf32> to vector<8x8x128xf32>
    %622 = vector.broadcast %620 : vector<1x8x128xf32> to vector<8x8x128xf32>
    %623 = arith.subf %621, %622 : vector<8x8x128xf32>
    %624 = math.absf %623 : vector<8x8x128xf32>
    %625 = arith.addf %616, %624 : vector<8x8x128xf32>
    %626 = vector.extract_strided_slice %5 {offsets = [0, 512], sizes = [8, 128], strides = [1, 1]} : vector<8x896xf32> to vector<8x128xf32>
    %c72_139 = arith.constant 72 : index
    %c512_140 = arith.constant 512 : index
    %627 = vector.load %arg2[%c72_139, %c512_140] : memref<128x896xf32, #tpu.memory_space<vmem>>, vector<8x128xf32>
    %628 = vector.shape_cast %626 : vector<8x128xf32> to vector<8x1x128xf32>
    %629 = vector.shape_cast %627 : vector<8x128xf32> to vector<1x8x128xf32>
    %630 = vector.broadcast %628 : vector<8x1x128xf32> to vector<8x8x128xf32>
    %631 = vector.broadcast %629 : vector<1x8x128xf32> to vector<8x8x128xf32>
    %632 = arith.subf %630, %631 : vector<8x8x128xf32>
    %633 = math.absf %632 : vector<8x8x128xf32>
    %634 = arith.addf %625, %633 : vector<8x8x128xf32>
    %635 = vector.extract_strided_slice %5 {offsets = [0, 640], sizes = [8, 128], strides = [1, 1]} : vector<8x896xf32> to vector<8x128xf32>
    %c72_141 = arith.constant 72 : index
    %c640_142 = arith.constant 640 : index
    %636 = vector.load %arg2[%c72_141, %c640_142] : memref<128x896xf32, #tpu.memory_space<vmem>>, vector<8x128xf32>
    %637 = vector.shape_cast %635 : vector<8x128xf32> to vector<8x1x128xf32>
    %638 = vector.shape_cast %636 : vector<8x128xf32> to vector<1x8x128xf32>
    %639 = vector.broadcast %637 : vector<8x1x128xf32> to vector<8x8x128xf32>
    %640 = vector.broadcast %638 : vector<1x8x128xf32> to vector<8x8x128xf32>
    %641 = arith.subf %639, %640 : vector<8x8x128xf32>
    %642 = math.absf %641 : vector<8x8x128xf32>
    %643 = arith.addf %634, %642 : vector<8x8x128xf32>
    %644 = vector.extract_strided_slice %5 {offsets = [0, 768], sizes = [8, 128], strides = [1, 1]} : vector<8x896xf32> to vector<8x128xf32>
    %c72_143 = arith.constant 72 : index
    %c768_144 = arith.constant 768 : index
    %645 = vector.load %arg2[%c72_143, %c768_144] : memref<128x896xf32, #tpu.memory_space<vmem>>, vector<8x128xf32>
    %646 = vector.shape_cast %644 : vector<8x128xf32> to vector<8x1x128xf32>
    %647 = vector.shape_cast %645 : vector<8x128xf32> to vector<1x8x128xf32>
    %648 = vector.broadcast %646 : vector<8x1x128xf32> to vector<8x8x128xf32>
    %649 = vector.broadcast %647 : vector<1x8x128xf32> to vector<8x8x128xf32>
    %650 = arith.subf %648, %649 : vector<8x8x128xf32>
    %651 = math.absf %650 : vector<8x8x128xf32>
    %652 = arith.addf %643, %651 : vector<8x8x128xf32>
    %cst_145 = arith.constant dense<0.000000e+00> : vector<8x8xf32>
    %653 = vector.multi_reduction <add>, %652, %cst_145 [2] : vector<8x8x128xf32> to vector<8x8xf32>
    %654 = arith.index_cast %3 : i32 to index
    %c72_146 = arith.constant 72 : index
    %655 = vector.load %arg5[%654, %c72_146] : memref<8x128xf32, #tpu.memory_space<vmem>>, vector<8x8xf32>
    tpu.vector_store %arg5[%654, %c72_146], %653 {strides = array<i32>} : memref<8x128xf32, #tpu.memory_space<vmem>>, vector<8x8xf32>,
    %656 = vector.extract_strided_slice %5 {offsets = [0, 0], sizes = [8, 128], strides = [1, 1]} : vector<8x896xf32> to vector<8x128xf32>
    %c80 = arith.constant 80 : index
    %c0_147 = arith.constant 0 : index
    %657 = vector.load %arg2[%c80, %c0_147] : memref<128x896xf32, #tpu.memory_space<vmem>>, vector<8x128xf32>
    %658 = vector.shape_cast %656 : vector<8x128xf32> to vector<8x1x128xf32>
    %659 = vector.shape_cast %657 : vector<8x128xf32> to vector<1x8x128xf32>
    %660 = vector.broadcast %658 : vector<8x1x128xf32> to vector<8x8x128xf32>
    %661 = vector.broadcast %659 : vector<1x8x128xf32> to vector<8x8x128xf32>
    %662 = arith.subf %660, %661 : vector<8x8x128xf32>
    %663 = math.absf %662 : vector<8x8x128xf32>
    %664 = vector.extract_strided_slice %5 {offsets = [0, 128], sizes = [8, 128], strides = [1, 1]} : vector<8x896xf32> to vector<8x128xf32>
    %c80_148 = arith.constant 80 : index
    %c128_149 = arith.constant 128 : index
    %665 = vector.load %arg2[%c80_148, %c128_149] : memref<128x896xf32, #tpu.memory_space<vmem>>, vector<8x128xf32>
    %666 = vector.shape_cast %664 : vector<8x128xf32> to vector<8x1x128xf32>
    %667 = vector.shape_cast %665 : vector<8x128xf32> to vector<1x8x128xf32>
    %668 = vector.broadcast %666 : vector<8x1x128xf32> to vector<8x8x128xf32>
    %669 = vector.broadcast %667 : vector<1x8x128xf32> to vector<8x8x128xf32>
    %670 = arith.subf %668, %669 : vector<8x8x128xf32>
    %671 = math.absf %670 : vector<8x8x128xf32>
    %672 = arith.addf %663, %671 : vector<8x8x128xf32>
    %673 = vector.extract_strided_slice %5 {offsets = [0, 256], sizes = [8, 128], strides = [1, 1]} : vector<8x896xf32> to vector<8x128xf32>
    %c80_150 = arith.constant 80 : index
    %c256_151 = arith.constant 256 : index
    %674 = vector.load %arg2[%c80_150, %c256_151] : memref<128x896xf32, #tpu.memory_space<vmem>>, vector<8x128xf32>
    %675 = vector.shape_cast %673 : vector<8x128xf32> to vector<8x1x128xf32>
    %676 = vector.shape_cast %674 : vector<8x128xf32> to vector<1x8x128xf32>
    %677 = vector.broadcast %675 : vector<8x1x128xf32> to vector<8x8x128xf32>
    %678 = vector.broadcast %676 : vector<1x8x128xf32> to vector<8x8x128xf32>
    %679 = arith.subf %677, %678 : vector<8x8x128xf32>
    %680 = math.absf %679 : vector<8x8x128xf32>
    %681 = arith.addf %672, %680 : vector<8x8x128xf32>
    %682 = vector.extract_strided_slice %5 {offsets = [0, 384], sizes = [8, 128], strides = [1, 1]} : vector<8x896xf32> to vector<8x128xf32>
    %c80_152 = arith.constant 80 : index
    %c384_153 = arith.constant 384 : index
    %683 = vector.load %arg2[%c80_152, %c384_153] : memref<128x896xf32, #tpu.memory_space<vmem>>, vector<8x128xf32>
    %684 = vector.shape_cast %682 : vector<8x128xf32> to vector<8x1x128xf32>
    %685 = vector.shape_cast %683 : vector<8x128xf32> to vector<1x8x128xf32>
    %686 = vector.broadcast %684 : vector<8x1x128xf32> to vector<8x8x128xf32>
    %687 = vector.broadcast %685 : vector<1x8x128xf32> to vector<8x8x128xf32>
    %688 = arith.subf %686, %687 : vector<8x8x128xf32>
    %689 = math.absf %688 : vector<8x8x128xf32>
    %690 = arith.addf %681, %689 : vector<8x8x128xf32>
    %691 = vector.extract_strided_slice %5 {offsets = [0, 512], sizes = [8, 128], strides = [1, 1]} : vector<8x896xf32> to vector<8x128xf32>
    %c80_154 = arith.constant 80 : index
    %c512_155 = arith.constant 512 : index
    %692 = vector.load %arg2[%c80_154, %c512_155] : memref<128x896xf32, #tpu.memory_space<vmem>>, vector<8x128xf32>
    %693 = vector.shape_cast %691 : vector<8x128xf32> to vector<8x1x128xf32>
    %694 = vector.shape_cast %692 : vector<8x128xf32> to vector<1x8x128xf32>
    %695 = vector.broadcast %693 : vector<8x1x128xf32> to vector<8x8x128xf32>
    %696 = vector.broadcast %694 : vector<1x8x128xf32> to vector<8x8x128xf32>
    %697 = arith.subf %695, %696 : vector<8x8x128xf32>
    %698 = math.absf %697 : vector<8x8x128xf32>
    %699 = arith.addf %690, %698 : vector<8x8x128xf32>
    %700 = vector.extract_strided_slice %5 {offsets = [0, 640], sizes = [8, 128], strides = [1, 1]} : vector<8x896xf32> to vector<8x128xf32>
    %c80_156 = arith.constant 80 : index
    %c640_157 = arith.constant 640 : index
    %701 = vector.load %arg2[%c80_156, %c640_157] : memref<128x896xf32, #tpu.memory_space<vmem>>, vector<8x128xf32>
    %702 = vector.shape_cast %700 : vector<8x128xf32> to vector<8x1x128xf32>
    %703 = vector.shape_cast %701 : vector<8x128xf32> to vector<1x8x128xf32>
    %704 = vector.broadcast %702 : vector<8x1x128xf32> to vector<8x8x128xf32>
    %705 = vector.broadcast %703 : vector<1x8x128xf32> to vector<8x8x128xf32>
    %706 = arith.subf %704, %705 : vector<8x8x128xf32>
    %707 = math.absf %706 : vector<8x8x128xf32>
    %708 = arith.addf %699, %707 : vector<8x8x128xf32>
    %709 = vector.extract_strided_slice %5 {offsets = [0, 768], sizes = [8, 128], strides = [1, 1]} : vector<8x896xf32> to vector<8x128xf32>
    %c80_158 = arith.constant 80 : index
    %c768_159 = arith.constant 768 : index
    %710 = vector.load %arg2[%c80_158, %c768_159] : memref<128x896xf32, #tpu.memory_space<vmem>>, vector<8x128xf32>
    %711 = vector.shape_cast %709 : vector<8x128xf32> to vector<8x1x128xf32>
    %712 = vector.shape_cast %710 : vector<8x128xf32> to vector<1x8x128xf32>
    %713 = vector.broadcast %711 : vector<8x1x128xf32> to vector<8x8x128xf32>
    %714 = vector.broadcast %712 : vector<1x8x128xf32> to vector<8x8x128xf32>
    %715 = arith.subf %713, %714 : vector<8x8x128xf32>
    %716 = math.absf %715 : vector<8x8x128xf32>
    %717 = arith.addf %708, %716 : vector<8x8x128xf32>
    %cst_160 = arith.constant dense<0.000000e+00> : vector<8x8xf32>
    %718 = vector.multi_reduction <add>, %717, %cst_160 [2] : vector<8x8x128xf32> to vector<8x8xf32>
    %719 = arith.index_cast %3 : i32 to index
    %c80_161 = arith.constant 80 : index
    %720 = vector.load %arg5[%719, %c80_161] : memref<8x128xf32, #tpu.memory_space<vmem>>, vector<8x8xf32>
    tpu.vector_store %arg5[%719, %c80_161], %718 {strides = array<i32>} : memref<8x128xf32, #tpu.memory_space<vmem>>, vector<8x8xf32>,
    %721 = vector.extract_strided_slice %5 {offsets = [0, 0], sizes = [8, 128], strides = [1, 1]} : vector<8x896xf32> to vector<8x128xf32>
    %c88 = arith.constant 88 : index
    %c0_162 = arith.constant 0 : index
    %722 = vector.load %arg2[%c88, %c0_162] : memref<128x896xf32, #tpu.memory_space<vmem>>, vector<8x128xf32>
    %723 = vector.shape_cast %721 : vector<8x128xf32> to vector<8x1x128xf32>
    %724 = vector.shape_cast %722 : vector<8x128xf32> to vector<1x8x128xf32>
    %725 = vector.broadcast %723 : vector<8x1x128xf32> to vector<8x8x128xf32>
    %726 = vector.broadcast %724 : vector<1x8x128xf32> to vector<8x8x128xf32>
    %727 = arith.subf %725, %726 : vector<8x8x128xf32>
    %728 = math.absf %727 : vector<8x8x128xf32>
    %729 = vector.extract_strided_slice %5 {offsets = [0, 128], sizes = [8, 128], strides = [1, 1]} : vector<8x896xf32> to vector<8x128xf32>
    %c88_163 = arith.constant 88 : index
    %c128_164 = arith.constant 128 : index
    %730 = vector.load %arg2[%c88_163, %c128_164] : memref<128x896xf32, #tpu.memory_space<vmem>>, vector<8x128xf32>
    %731 = vector.shape_cast %729 : vector<8x128xf32> to vector<8x1x128xf32>
    %732 = vector.shape_cast %730 : vector<8x128xf32> to vector<1x8x128xf32>
    %733 = vector.broadcast %731 : vector<8x1x128xf32> to vector<8x8x128xf32>
    %734 = vector.broadcast %732 : vector<1x8x128xf32> to vector<8x8x128xf32>
    %735 = arith.subf %733, %734 : vector<8x8x128xf32>
    %736 = math.absf %735 : vector<8x8x128xf32>
    %737 = arith.addf %728, %736 : vector<8x8x128xf32>
    %738 = vector.extract_strided_slice %5 {offsets = [0, 256], sizes = [8, 128], strides = [1, 1]} : vector<8x896xf32> to vector<8x128xf32>
    %c88_165 = arith.constant 88 : index
    %c256_166 = arith.constant 256 : index
    %739 = vector.load %arg2[%c88_165, %c256_166] : memref<128x896xf32, #tpu.memory_space<vmem>>, vector<8x128xf32>
    %740 = vector.shape_cast %738 : vector<8x128xf32> to vector<8x1x128xf32>
    %741 = vector.shape_cast %739 : vector<8x128xf32> to vector<1x8x128xf32>
    %742 = vector.broadcast %740 : vector<8x1x128xf32> to vector<8x8x128xf32>
    %743 = vector.broadcast %741 : vector<1x8x128xf32> to vector<8x8x128xf32>
    %744 = arith.subf %742, %743 : vector<8x8x128xf32>
    %745 = math.absf %744 : vector<8x8x128xf32>
    %746 = arith.addf %737, %745 : vector<8x8x128xf32>
    %747 = vector.extract_strided_slice %5 {offsets = [0, 384], sizes = [8, 128], strides = [1, 1]} : vector<8x896xf32> to vector<8x128xf32>
    %c88_167 = arith.constant 88 : index
    %c384_168 = arith.constant 384 : index
    %748 = vector.load %arg2[%c88_167, %c384_168] : memref<128x896xf32, #tpu.memory_space<vmem>>, vector<8x128xf32>
    %749 = vector.shape_cast %747 : vector<8x128xf32> to vector<8x1x128xf32>
    %750 = vector.shape_cast %748 : vector<8x128xf32> to vector<1x8x128xf32>
    %751 = vector.broadcast %749 : vector<8x1x128xf32> to vector<8x8x128xf32>
    %752 = vector.broadcast %750 : vector<1x8x128xf32> to vector<8x8x128xf32>
    %753 = arith.subf %751, %752 : vector<8x8x128xf32>
    %754 = math.absf %753 : vector<8x8x128xf32>
    %755 = arith.addf %746, %754 : vector<8x8x128xf32>
    %756 = vector.extract_strided_slice %5 {offsets = [0, 512], sizes = [8, 128], strides = [1, 1]} : vector<8x896xf32> to vector<8x128xf32>
    %c88_169 = arith.constant 88 : index
    %c512_170 = arith.constant 512 : index
    %757 = vector.load %arg2[%c88_169, %c512_170] : memref<128x896xf32, #tpu.memory_space<vmem>>, vector<8x128xf32>
    %758 = vector.shape_cast %756 : vector<8x128xf32> to vector<8x1x128xf32>
    %759 = vector.shape_cast %757 : vector<8x128xf32> to vector<1x8x128xf32>
    %760 = vector.broadcast %758 : vector<8x1x128xf32> to vector<8x8x128xf32>
    %761 = vector.broadcast %759 : vector<1x8x128xf32> to vector<8x8x128xf32>
    %762 = arith.subf %760, %761 : vector<8x8x128xf32>
    %763 = math.absf %762 : vector<8x8x128xf32>
    %764 = arith.addf %755, %763 : vector<8x8x128xf32>
    %765 = vector.extract_strided_slice %5 {offsets = [0, 640], sizes = [8, 128], strides = [1, 1]} : vector<8x896xf32> to vector<8x128xf32>
    %c88_171 = arith.constant 88 : index
    %c640_172 = arith.constant 640 : index
    %766 = vector.load %arg2[%c88_171, %c640_172] : memref<128x896xf32, #tpu.memory_space<vmem>>, vector<8x128xf32>
    %767 = vector.shape_cast %765 : vector<8x128xf32> to vector<8x1x128xf32>
    %768 = vector.shape_cast %766 : vector<8x128xf32> to vector<1x8x128xf32>
    %769 = vector.broadcast %767 : vector<8x1x128xf32> to vector<8x8x128xf32>
    %770 = vector.broadcast %768 : vector<1x8x128xf32> to vector<8x8x128xf32>
    %771 = arith.subf %769, %770 : vector<8x8x128xf32>
    %772 = math.absf %771 : vector<8x8x128xf32>
    %773 = arith.addf %764, %772 : vector<8x8x128xf32>
    %774 = vector.extract_strided_slice %5 {offsets = [0, 768], sizes = [8, 128], strides = [1, 1]} : vector<8x896xf32> to vector<8x128xf32>
    %c88_173 = arith.constant 88 : index
    %c768_174 = arith.constant 768 : index
    %775 = vector.load %arg2[%c88_173, %c768_174] : memref<128x896xf32, #tpu.memory_space<vmem>>, vector<8x128xf32>
    %776 = vector.shape_cast %774 : vector<8x128xf32> to vector<8x1x128xf32>
    %777 = vector.shape_cast %775 : vector<8x128xf32> to vector<1x8x128xf32>
    %778 = vector.broadcast %776 : vector<8x1x128xf32> to vector<8x8x128xf32>
    %779 = vector.broadcast %777 : vector<1x8x128xf32> to vector<8x8x128xf32>
    %780 = arith.subf %778, %779 : vector<8x8x128xf32>
    %781 = math.absf %780 : vector<8x8x128xf32>
    %782 = arith.addf %773, %781 : vector<8x8x128xf32>
    %cst_175 = arith.constant dense<0.000000e+00> : vector<8x8xf32>
    %783 = vector.multi_reduction <add>, %782, %cst_175 [2] : vector<8x8x128xf32> to vector<8x8xf32>
    %784 = arith.index_cast %3 : i32 to index
    %c88_176 = arith.constant 88 : index
    %785 = vector.load %arg5[%784, %c88_176] : memref<8x128xf32, #tpu.memory_space<vmem>>, vector<8x8xf32>
    tpu.vector_store %arg5[%784, %c88_176], %783 {strides = array<i32>} : memref<8x128xf32, #tpu.memory_space<vmem>>, vector<8x8xf32>,
    %786 = vector.extract_strided_slice %5 {offsets = [0, 0], sizes = [8, 128], strides = [1, 1]} : vector<8x896xf32> to vector<8x128xf32>
    %c96 = arith.constant 96 : index
    %c0_177 = arith.constant 0 : index
    %787 = vector.load %arg2[%c96, %c0_177] : memref<128x896xf32, #tpu.memory_space<vmem>>, vector<8x128xf32>
    %788 = vector.shape_cast %786 : vector<8x128xf32> to vector<8x1x128xf32>
    %789 = vector.shape_cast %787 : vector<8x128xf32> to vector<1x8x128xf32>
    %790 = vector.broadcast %788 : vector<8x1x128xf32> to vector<8x8x128xf32>
    %791 = vector.broadcast %789 : vector<1x8x128xf32> to vector<8x8x128xf32>
    %792 = arith.subf %790, %791 : vector<8x8x128xf32>
    %793 = math.absf %792 : vector<8x8x128xf32>
    %794 = vector.extract_strided_slice %5 {offsets = [0, 128], sizes = [8, 128], strides = [1, 1]} : vector<8x896xf32> to vector<8x128xf32>
    %c96_178 = arith.constant 96 : index
    %c128_179 = arith.constant 128 : index
    %795 = vector.load %arg2[%c96_178, %c128_179] : memref<128x896xf32, #tpu.memory_space<vmem>>, vector<8x128xf32>
    %796 = vector.shape_cast %794 : vector<8x128xf32> to vector<8x1x128xf32>
    %797 = vector.shape_cast %795 : vector<8x128xf32> to vector<1x8x128xf32>
    %798 = vector.broadcast %796 : vector<8x1x128xf32> to vector<8x8x128xf32>
    %799 = vector.broadcast %797 : vector<1x8x128xf32> to vector<8x8x128xf32>
    %800 = arith.subf %798, %799 : vector<8x8x128xf32>
    %801 = math.absf %800 : vector<8x8x128xf32>
    %802 = arith.addf %793, %801 : vector<8x8x128xf32>
    %803 = vector.extract_strided_slice %5 {offsets = [0, 256], sizes = [8, 128], strides = [1, 1]} : vector<8x896xf32> to vector<8x128xf32>
    %c96_180 = arith.constant 96 : index
    %c256_181 = arith.constant 256 : index
    %804 = vector.load %arg2[%c96_180, %c256_181] : memref<128x896xf32, #tpu.memory_space<vmem>>, vector<8x128xf32>
    %805 = vector.shape_cast %803 : vector<8x128xf32> to vector<8x1x128xf32>
    %806 = vector.shape_cast %804 : vector<8x128xf32> to vector<1x8x128xf32>
    %807 = vector.broadcast %805 : vector<8x1x128xf32> to vector<8x8x128xf32>
    %808 = vector.broadcast %806 : vector<1x8x128xf32> to vector<8x8x128xf32>
    %809 = arith.subf %807, %808 : vector<8x8x128xf32>
    %810 = math.absf %809 : vector<8x8x128xf32>
    %811 = arith.addf %802, %810 : vector<8x8x128xf32>
    %812 = vector.extract_strided_slice %5 {offsets = [0, 384], sizes = [8, 128], strides = [1, 1]} : vector<8x896xf32> to vector<8x128xf32>
    %c96_182 = arith.constant 96 : index
    %c384_183 = arith.constant 384 : index
    %813 = vector.load %arg2[%c96_182, %c384_183] : memref<128x896xf32, #tpu.memory_space<vmem>>, vector<8x128xf32>
    %814 = vector.shape_cast %812 : vector<8x128xf32> to vector<8x1x128xf32>
    %815 = vector.shape_cast %813 : vector<8x128xf32> to vector<1x8x128xf32>
    %816 = vector.broadcast %814 : vector<8x1x128xf32> to vector<8x8x128xf32>
    %817 = vector.broadcast %815 : vector<1x8x128xf32> to vector<8x8x128xf32>
    %818 = arith.subf %816, %817 : vector<8x8x128xf32>
    %819 = math.absf %818 : vector<8x8x128xf32>
    %820 = arith.addf %811, %819 : vector<8x8x128xf32>
    %821 = vector.extract_strided_slice %5 {offsets = [0, 512], sizes = [8, 128], strides = [1, 1]} : vector<8x896xf32> to vector<8x128xf32>
    %c96_184 = arith.constant 96 : index
    %c512_185 = arith.constant 512 : index
    %822 = vector.load %arg2[%c96_184, %c512_185] : memref<128x896xf32, #tpu.memory_space<vmem>>, vector<8x128xf32>
    %823 = vector.shape_cast %821 : vector<8x128xf32> to vector<8x1x128xf32>
    %824 = vector.shape_cast %822 : vector<8x128xf32> to vector<1x8x128xf32>
    %825 = vector.broadcast %823 : vector<8x1x128xf32> to vector<8x8x128xf32>
    %826 = vector.broadcast %824 : vector<1x8x128xf32> to vector<8x8x128xf32>
    %827 = arith.subf %825, %826 : vector<8x8x128xf32>
    %828 = math.absf %827 : vector<8x8x128xf32>
    %829 = arith.addf %820, %828 : vector<8x8x128xf32>
    %830 = vector.extract_strided_slice %5 {offsets = [0, 640], sizes = [8, 128], strides = [1, 1]} : vector<8x896xf32> to vector<8x128xf32>
    %c96_186 = arith.constant 96 : index
    %c640_187 = arith.constant 640 : index
    %831 = vector.load %arg2[%c96_186, %c640_187] : memref<128x896xf32, #tpu.memory_space<vmem>>, vector<8x128xf32>
    %832 = vector.shape_cast %830 : vector<8x128xf32> to vector<8x1x128xf32>
    %833 = vector.shape_cast %831 : vector<8x128xf32> to vector<1x8x128xf32>
    %834 = vector.broadcast %832 : vector<8x1x128xf32> to vector<8x8x128xf32>
    %835 = vector.broadcast %833 : vector<1x8x128xf32> to vector<8x8x128xf32>
    %836 = arith.subf %834, %835 : vector<8x8x128xf32>
    %837 = math.absf %836 : vector<8x8x128xf32>
    %838 = arith.addf %829, %837 : vector<8x8x128xf32>
    %839 = vector.extract_strided_slice %5 {offsets = [0, 768], sizes = [8, 128], strides = [1, 1]} : vector<8x896xf32> to vector<8x128xf32>
    %c96_188 = arith.constant 96 : index
    %c768_189 = arith.constant 768 : index
    %840 = vector.load %arg2[%c96_188, %c768_189] : memref<128x896xf32, #tpu.memory_space<vmem>>, vector<8x128xf32>
    %841 = vector.shape_cast %839 : vector<8x128xf32> to vector<8x1x128xf32>
    %842 = vector.shape_cast %840 : vector<8x128xf32> to vector<1x8x128xf32>
    %843 = vector.broadcast %841 : vector<8x1x128xf32> to vector<8x8x128xf32>
    %844 = vector.broadcast %842 : vector<1x8x128xf32> to vector<8x8x128xf32>
    %845 = arith.subf %843, %844 : vector<8x8x128xf32>
    %846 = math.absf %845 : vector<8x8x128xf32>
    %847 = arith.addf %838, %846 : vector<8x8x128xf32>
    %cst_190 = arith.constant dense<0.000000e+00> : vector<8x8xf32>
    %848 = vector.multi_reduction <add>, %847, %cst_190 [2] : vector<8x8x128xf32> to vector<8x8xf32>
    %849 = arith.index_cast %3 : i32 to index
    %c96_191 = arith.constant 96 : index
    %850 = vector.load %arg5[%849, %c96_191] : memref<8x128xf32, #tpu.memory_space<vmem>>, vector<8x8xf32>
    tpu.vector_store %arg5[%849, %c96_191], %848 {strides = array<i32>} : memref<8x128xf32, #tpu.memory_space<vmem>>, vector<8x8xf32>,
    %c1_i32 = arith.constant 1 : i32
    %c0_192 = arith.constant 0 : index
    %c0_193 = arith.constant 0 : index
    %851 = vector.load %arg5[%c0_192, %c0_193] : memref<8x128xf32, #tpu.memory_space<vmem>>, vector<8x128xf32>
    %c0_194 = arith.constant 0 : index
    %c0_195 = arith.constant 0 : index
    %852 = vector.load %arg3[%c0_194, %c0_195] : memref<128x10xf32, #tpu.memory_space<vmem>>, vector<128x10xf32>
    %cst_196 = arith.constant dense<0.000000e+00> : vector<8x10xf32>
    %853 = tpu.matmul %851, %852, %cst_196 {dimension_numbers = #tpu.dot_dimension_numbers<[1], [0], [0], [1], [0, 0, 1, 1], [], []>} : vector<8x128xf32>, vector<128x10xf32>, vector<8x10xf32> -> vector<8x10xf32>
    %c0_197 = arith.constant 0 : index
    %c0_198 = arith.constant 0 : index
    %854 = vector.load %arg4[%c0_197, %c0_198] : memref<8x10xf32, #tpu.memory_space<vmem>>, vector<8x10xf32>
    tpu.vector_store %arg4[%c0_197, %c0_198], %853 {strides = array<i32>} : memref<8x10xf32, #tpu.memory_space<vmem>>, vector<8x10xf32>,
    return
  }
  func.func @transform_0(%arg0: i32) -> (i32, i32) {
    %c0_i32 = arith.constant 0 : i32
    %c0_i32_0 = arith.constant 0 : i32
    return %arg0, %c0_i32 : i32, i32
  }
  func.func @transform_1(%arg0: i32) -> (i32, i32) {
    %c0_i32 = arith.constant 0 : i32
    %c0_i32_0 = arith.constant 0 : i32
    %c0_i32_1 = arith.constant 0 : i32
    return %c0_i32, %c0_i32_0 : i32, i32
  }
  func.func @transform_2(%arg0: i32) -> (i32, i32) {
    %c0_i32 = arith.constant 0 : i32
    %c0_i32_0 = arith.constant 0 : i32
    %c0_i32_1 = arith.constant 0 : i32
    return %c0_i32, %c0_i32_0 : i32, i32
  }
  func.func @transform_3(%arg0: i32) -> (i32, i32) {
    %c0_i32 = arith.constant 0 : i32
    %c0_i32_0 = arith.constant 0 : i32
    return %arg0, %c0_i32 : i32, i32
  }
}

</mosaic_0001>

<llo_original>
// kernel: meta_tensor_forward.1
$region0: #{meta_tensor_forward.1}
  #allocation0 [shape = 'u32[]', space=smem, size = 0x4, offset = 0x4, fixed_abs, tag = 'smem constant byte address 0x4 - core index']
  #allocation1 [shape = 'u32[144,128]{1,0:T(1,128)}', space=vmem, size = 0x12000, scoped, tag = 'internal scratch']
  #allocation2 [shape = 'f32[8,128]{1,0:T(8,128)}', space=vmem, size = 0x1000, scoped, tag = 'scratch operand']
  %s0 = inlined_call_operand.vmem [shape: f32[16,896], index: 0, kind: input, shape index: {}]
  %s1 = inlined_call_operand.vmem [shape: f32[128,896], index: 1, kind: input, shape index: {}]
  %s2 = inlined_call_operand.vmem [shape: f32[128,10], index: 2, kind: input, shape index: {}]
  %s3 = inlined_call_operand.vmem [shape: f32[16,10], index: 3, kind: output, shape index: {}]
  %s4 = sld [smem:[#allocation0]]
  $region45: #{meta_tensor_forward.1} parent=0
    _
  %s6 = ssub.s32 1, %s4
  %s7 = scalar_select 0, %s6, %s4
  loop: start=0, step=1, limit=4
  $region2: #{meta_tensor_forward.1} parent=0 // loop_pre_header
    _
  $region3: #{meta_tensor_forward.1} parent=0 // loop_header
    %s9 = sphi 0, %s13
    %p10 = scmp.ge.s32.totalorder %s9, 4
    %s19 = sphi 0, %s21
    %s22 = sphi 0, %s19
    %s23 = sphi 0, %s22
    %s39 = sphi 0, %s23
    %s43 = sphi 0, %s43
    %s45 = sphi 0, %s43
    %s46 = sphi 0, %s45
    %s60 = sphi 0, %s46
    %s64 = sphi 0, %s64
    %s66 = sphi 0, %s64
    %s67 = sphi 0, %s66
    %s81 = sphi 0, %s67
    %s87 = sphi 0, %s89
    %s90 = sphi 0, %s87
    %s91 = sphi 0, %s90
    %s107 = sphi 0, %s91
  $region4: #{meta_tensor_forward.1} parent=0 // loop_header_branch
    %12 = sbr.rel (%p10) target = $region8
  $region5: #{meta_tensor_forward.1} parent=0 // loop_body
    %s14 = ssub.s32 %s9, 1
    %s15 = ssub.s32 %s9, 2
    %s16 = sadd.s32 %s9, 1
    %s17 = ssub.s32 %s9, %s16
    %p18 = scmp.eq.s32.totalorder %s17, 0
    %s20 = sadd.s32 %s19, 1
    %s21 = scalar_select %p18, %s19, %s20
    %p24 = pneg %p18
    %p25 = scmp.eq.s32.totalorder %s9, 1
    %p26 = por %p24, %p25
    %p27 = scmp.ne.s32.totalorder %s19, %s22
    %p28 = scmp.eq.s32.totalorder %s9, 0
    %p29 = por %p27, %p28
    %p30 = scmp.ne.s32.totalorder %s19, %s22
    %p31 = scmp.eq.s32.totalorder %s14, 1
    %p32 = por %p30, %p31
    %p33 = scmp.ne.s32.totalorder %s22, %s23
    %p34 = scmp.eq.s32.totalorder %s14, 0
    %p35 = por %p33, %p34
    %p36 = scmp.ne.s32.totalorder %s22, %s23
    %p37 = scmp.eq.s32.totalorder %s15, 1
    %p38 = por %p36, %p37
    %p40 = scmp.ne.s32.totalorder %s23, %s39
    %p41 = scmp.eq.s32.totalorder %s15, 0
    %p42 = por %p40, %p41
    %s44 = sadd.s32 %s43, 1
    %p47 = scmp.eq.s32.totalorder %s9, 1
    %p48 = scmp.ne.s32.totalorder %s43, %s45
    %p49 = scmp.eq.s32.totalorder %s9, 0
    %p50 = por %p48, %p49
    %p51 = scmp.ne.s32.totalorder %s43, %s45
    %p52 = scmp.eq.s32.totalorder %s14, 1
    %p53 = por %p51, %p52
    %p54 = scmp.ne.s32.totalorder %s45, %s46
    %p55 = scmp.eq.s32.totalorder %s14, 0
    %p56 = por %p54, %p55
    %p57 = scmp.ne.s32.totalorder %s45, %s46
    %p58 = scmp.eq.s32.totalorder %s15, 1
    %p59 = por %p57, %p58
    %p61 = scmp.ne.s32.totalorder %s46, %s60
    %p62 = scmp.eq.s32.totalorder %s15, 0
    %p63 = por %p61, %p62
    %s65 = sadd.s32 %s64, 1
    %p68 = scmp.eq.s32.totalorder %s9, 1
    %p69 = scmp.ne.s32.totalorder %s64, %s66
    %p70 = scmp.eq.s32.totalorder %s9, 0
    %p71 = por %p69, %p70
    %p72 = scmp.ne.s32.totalorder %s64, %s66
    %p73 = scmp.eq.s32.totalorder %s14, 1
    %p74 = por %p72, %p73
    %p75 = scmp.ne.s32.totalorder %s66, %s67
    %p76 = scmp.eq.s32.totalorder %s14, 0
    %p77 = por %p75, %p76
    %p78 = scmp.ne.s32.totalorder %s66, %s67
    %p79 = scmp.eq.s32.totalorder %s15, 1
    %p80 = por %p78, %p79
    %p82 = scmp.ne.s32.totalorder %s67, %s81
    %p83 = scmp.eq.s32.totalorder %s15, 0
    %p84 = por %p82, %p83
    %s85 = ssub.s32 %s9, %s16
    %p86 = scmp.eq.s32.totalorder %s85, 0
    %s88 = sadd.s32 %s87, 1
    %s89 = scalar_select %p86, %s87, %s88
    %p92 = pneg %p86
    %p93 = scmp.eq.s32.totalorder %s9, 1
    %p94 = por %p92, %p93
    %p95 = scmp.ne.s32.totalorder %s87, %s90
    %p96 = scmp.eq.s32.totalorder %s9, 0
    %p97 = por %p95, %p96
    %p98 = scmp.ne.s32.totalorder %s87, %s90
    %p99 = scmp.eq.s32.totalorder %s14, 1
    %p100 = por %p98, %p99
    %p101 = scmp.ne.s32.totalorder %s90, %s91
    %p102 = scmp.eq.s32.totalorder %s14, 0
    %p103 = por %p101, %p102
    %p104 = scmp.ne.s32.totalorder %s90, %s91
    %p105 = scmp.eq.s32.totalorder %s15, 1
    %p106 = por %p104, %p105
    %p108 = scmp.ne.s32.totalorder %s91, %s107
    %p109 = scmp.eq.s32.totalorder %s15, 0
    %p110 = por %p108, %p109
    %p111 = scmp.le.s32.totalorder 1, %s9
    %p112 = scmp.lt.s32.totalorder %s9, 3
    %p113 = pnand %p111, %p112
    %p114 = pneg %p113
    // Predicated region
    $region9: #{meta_tensor_forward.1} parent=5 // pred_check
      _
    $region10: #{meta_tensor_forward.1} parent=5 // pred_check_branch
      %116 = sbr.rel (%p113) target = $region12
    $region11: #{meta_tensor_forward.1} parent=5 // pred_region
      %s117 = ssub.s32 %s9, 1
      // Predicated region
      $region13: #{meta_tensor_forward.1} parent=11 // pred_check
        %p118 = pneg %p56
      $region14: #{meta_tensor_forward.1} parent=11 // pred_check_branch
        %120 = sbr.rel (%p118) target = $region16
      $region15: #{meta_tensor_forward.1} parent=11 // pred_region
        _
      $region16: #{meta_tensor_forward.1} parent=11 // pred_fallthru
        _
      // Predicated region
      $region17: #{meta_tensor_forward.1} parent=11 // pred_check
        %p121 = pneg %p77
      $region18: #{meta_tensor_forward.1} parent=11 // pred_check_branch
        %123 = sbr.rel (%p121) target = $region20
      $region19: #{meta_tensor_forward.1} parent=11 // pred_region
        _
      $region20: #{meta_tensor_forward.1} parent=11 // pred_fallthru
        _
    $region12: #{meta_tensor_forward.1} parent=5 // pred_fallthru
      _
    %p124 = scmp.lt.s32.totalorder %s9, 2
    // Predicated region
    $region21: #{meta_tensor_forward.1} parent=5 // pred_check
      %p125 = pneg %p124
    $region22: #{meta_tensor_forward.1} parent=5 // pred_check_branch
      %127 = sbr.rel (%p125) target = $region24
    $region23: #{meta_tensor_forward.1} parent=5 // pred_region
      // Predicated region
      $region25: #{meta_tensor_forward.1} parent=23 // pred_check
        %p128 = pneg %p29
      $region26: #{meta_tensor_forward.1} parent=23 // pred_check_branch
        %130 = sbr.rel (%p128) target = $region28
      $region27: #{meta_tensor_forward.1} parent=23 // pred_region
        %p131 = scmp.lt.s32.totalorder %s9, 1
        %s132 = scalar_select %p131, %s9, 1
        %s133 = smul.addr %s132, 7
        %s134 = smul.addr %s133, 8
        %s135 = scalar_lea.vmem %s0, %s134
      $region28: #{meta_tensor_forward.1} parent=23 // pred_fallthru
        _
    $region24: #{meta_tensor_forward.1} parent=5 // pred_fallthru
      _
    %p136 = scmp.le.s32.totalorder 1, %s9
    %p137 = scmp.lt.s32.totalorder %s9, 3
    %p138 = pnand %p136, %p137
    %p139 = pneg %p138
    // Predicated region
    $region29: #{meta_tensor_forward.1} parent=5 // pred_check
      _
    $region30: #{meta_tensor_forward.1} parent=5 // pred_check_branch
      %141 = sbr.rel (%p138) target = $region32
    $region31: #{meta_tensor_forward.1} parent=5 // pred_region
      %s142 = ssub.s32 %s9, 1
      %p143 = scmp.lt.s32.totalorder %s14, 1
      %s144 = scalar_select %p143, %s14, 1
      %s145 = smul.addr %s144, 7
      %s146 = smul.addr %s145, 8
      %s147 = scalar_lea.vmem %s0, %s146
      %p148 = pneg %p35
      %p149 = pneg %p32
      %p150 = pneg %p56
      %p151 = pneg %p53
      %p152 = pneg %p77
      %p153 = pneg %p74
      %p154 = pneg %p103
      %p155 = pneg %p100
      %p156 = scmp.lt.s32.totalorder %s14, 1
      %s157 = scalar_select %p156, %s14, 1
      %s158 = smul.addr %s157, 8
      %s159 = scalar_lea.vmem %s3, %s158
      %p160 = scmp.lt.s32.totalorder %s14, 1
      %s161 = scalar_select %p160, %s14, 1
      %s162 = smul.addr %s161, 7
      %s163 = smul.addr %s162, 8
      %s164 = scalar_lea.vmem %s0, %s163
      %p165 = scmp.lt.s32.totalorder %s14, 1
      %s166 = scalar_select %p165, %s14, 1
      %s167 = smul.addr %s166, 8
      %s168 = scalar_lea.vmem %s3, %s167
      %169 = vst [vmem:[#allocation2] sm:$0xff] 0.0
      %s170 = smul.u32 0, 7
      %s171 = smul.addr %s170, 8
      %s172 = scalar_lea.vmem %s164, %s171
      %v173 = vld [vmem:[%s172] sm:$0xff]
      %v174 = vld [vmem:[%s172 + $0x8] sm:$0xff]
      %v175 = vld [vmem:[%s172 + $0x10] sm:$0xff]
      %v176 = vld [vmem:[%s172 + $0x18] sm:$0xff]
      %v177 = vld [vmem:[%s172 + $0x20] sm:$0xff]
      %v178 = vld [vmem:[%s172 + $0x28] sm:$0xff]
      %v179 = vld [vmem:[%s172 + $0x30] sm:$0xff]
      %v180 = vld [vmem:[%s1] sm:$0xff]
      %v182 = vcombine.high %v173, %v173
      %v184 = vunpack.c.l.s4 1966171168
      %v185 = vunpack.c.0.s8 %v184
      %v186 = vlaneseq
      %v187 = vshrl.u32 %v186, 7
      %v188 = vsub.s32 %v185, %v187
      %v189 = vrot.slane %v173, %v188
      %v191 = vunpack.c.l.s4 1966171168
      %v192 = vunpack.c.0.s8 %v191
      %v193 = vlaneseq
      %v194 = vshrl.u32 %v193, 7
      %v195 = vsub.s32 %v192, %v194
      %v196 = vrot.slane %v182, %v195
      %v197 = vcombine.high %v189, %v189
      %v198 = vcombine.high %v196, %v196
      %v200 = vunpack.c.l.s4 1966171168
      %v201 = vunpack.c.0.s8 %v200
      %v202 = vlaneseq
      %v203 = vshrl.u32 %v202, 7
      %v204 = vsub.s32 %v201, %v203
      %v205 = vrot.slane %v189, %v204
      %v207 = vunpack.c.l.s4 1966171168
      %v208 = vunpack.c.0.s8 %v207
      %v209 = vlaneseq
      %v210 = vshrl.u32 %v209, 7
      %v211 = vsub.s32 %v208, %v210
      %v212 = vrot.slane %v196, %v211
      %v214 = vunpack.c.l.s4 1966171168
      %v215 = vunpack.c.0.s8 %v214
      %v216 = vlaneseq
      %v217 = vshrl.u32 %v216, 7
      %v218 = vsub.s32 %v215, %v217
      %v219 = vrot.slane %v197, %v218
      %v221 = vunpack.c.l.s4 1966171168
      %v222 = vunpack.c.0.s8 %v221
      %v223 = vlaneseq
      %v224 = vshrl.u32 %v223, 7
      %v225 = vsub.s32 %v222, %v224
      %v226 = vrot.slane %v198, %v225
      %v227 = vcombine.high %v205, %v205
      %v228 = vcombine.high %v212, %v212
      %v229 = vcombine.high %v219, %v219
      %v230 = vcombine.high %v226, %v226
      %v231 = vlaneseq
      %v232 = vshrl.u32 %v231, 7
      %v233 = vsub.s32 0, %v232
      %v234 = vrot.slane %v205, %v233
      %v235 = vlaneseq
      %v236 = vshrl.u32 %v235, 7
      %v237 = vsub.s32 0, %v236
      %v238 = vrot.slane %v219, %v237
      %v239 = vlaneseq
      %v240 = vshrl.u32 %v239, 7
      %v241 = vsub.s32 0, %v240
      %v242 = vrot.slane %v227, %v241
      %v243 = vlaneseq
      %v244 = vshrl.u32 %v243, 7
      %v245 = vsub.s32 0, %v244
      %v246 = vrot.slane %v229, %v245
      %v247 = vlaneseq
      %v248 = vshrl.u32 %v247, 7
      %v249 = vsub.s32 0, %v248
      %v250 = vrot.slane %v212, %v249
      %v251 = vlaneseq
      %v252 = vshrl.u32 %v251, 7
      %v253 = vsub.s32 0, %v252
      %v254 = vrot.slane %v226, %v253
      %v255 = vlaneseq
      %v256 = vshrl.u32 %v255, 7
      %v257 = vsub.s32 0, %v256
      %v258 = vrot.slane %v228, %v257
      %v259 = vlaneseq
      %v260 = vshrl.u32 %v259, 7
      %v261 = vsub.s32 0, %v260
      %v262 = vrot.slane %v230, %v261
      %v271 = vsub.f32 %v234, %v180
      %v272 = vsub.f32 %v238, %v180
      %v273 = vsub.f32 %v242, %v180
      %v274 = vsub.f32 %v246, %v180
      %v275 = vsub.f32 %v250, %v180
      %v276 = vsub.f32 %v254, %v180
      %v277 = vsub.f32 %v258, %v180
      %v278 = vsub.f32 %v262, %v180
      %v279 = vand.u32 2147483647, %v271
      %v280 = vand.u32 2147483647, %v272
      %v281 = vand.u32 2147483647, %v273
      %v282 = vand.u32 2147483647, %v274
      %v283 = vand.u32 2147483647, %v275
      %v284 = vand.u32 2147483647, %v276
      %v285 = vand.u32 2147483647, %v277
      %v286 = vand.u32 2147483647, %v278
      %v287 = vld [vmem:[%s1 + $0x8] sm:$0xff]
      %v289 = vcombine.high %v174, %v174
      %v291 = vunpack.c.l.s4 1966171168
      %v292 = vunpack.c.0.s8 %v291
      %v293 = vlaneseq
      %v294 = vshrl.u32 %v293, 7
      %v295 = vsub.s32 %v292, %v294
      %v296 = vrot.slane %v174, %v295
      %v298 = vunpack.c.l.s4 1966171168
      %v299 = vunpack.c.0.s8 %v298
      %v300 = vlaneseq
      %v301 = vshrl.u32 %v300, 7
      %v302 = vsub.s32 %v299, %v301
      %v303 = vrot.slane %v289, %v302
      %v304 = vcombine.high %v296, %v296
      %v305 = vcombine.high %v303, %v303
      %v307 = vunpack.c.l.s4 1966171168
      %v308 = vunpack.c.0.s8 %v307
      %v309 = vlaneseq
      %v310 = vshrl.u32 %v309, 7
      %v311 = vsub.s32 %v308, %v310
      %v312 = vrot.slane %v296, %v311
      %v314 = vunpack.c.l.s4 1966171168
      %v315 = vunpack.c.0.s8 %v314
      %v316 = vlaneseq
      %v317 = vshrl.u32 %v316, 7
      %v318 = vsub.s32 %v315, %v317
      %v319 = vrot.slane %v303, %v318
      %v321 = vunpack.c.l.s4 1966171168
      %v322 = vunpack.c.0.s8 %v321
      %v323 = vlaneseq
      %v324 = vshrl.u32 %v323, 7
      %v325 = vsub.s32 %v322, %v324
      %v326 = vrot.slane %v304, %v325
      %v328 = vunpack.c.l.s4 1966171168
      %v329 = vunpack.c.0.s8 %v328
      %v330 = vlaneseq
      %v331 = vshrl.u32 %v330, 7
      %v332 = vsub.s32 %v329, %v331
      %v333 = vrot.slane %v305, %v332
      %v334 = vcombine.high %v312, %v312
      %v335 = vcombine.high %v319, %v319
      %v336 = vcombine.high %v326, %v326
      %v337 = vcombine.high %v333, %v333
      %v338 = vlaneseq
      %v339 = vshrl.u32 %v338, 7
      %v340 = vsub.s32 0, %v339
      %v341 = vrot.slane %v312, %v340
      %v342 = vlaneseq
      %v343 = vshrl.u32 %v342, 7
      %v344 = vsub.s32 0, %v343
      %v345 = vrot.slane %v326, %v344
      %v346 = vlaneseq
      %v347 = vshrl.u32 %v346, 7
      %v348 = vsub.s32 0, %v347
      %v349 = vrot.slane %v334, %v348
      %v350 = vlaneseq
      %v351 = vshrl.u32 %v350, 7
      %v352 = vsub.s32 0, %v351
      %v353 = vrot.slane %v336, %v352
      %v354 = vlaneseq
      %v355 = vshrl.u32 %v354, 7
      %v356 = vsub.s32 0, %v355
      %v357 = vrot.slane %v319, %v356
      %v358 = vlaneseq
      %v359 = vshrl.u32 %v358, 7
      %v360 = vsub.s32 0, %v359
      %v361 = vrot.slane %v333, %v360
      %v362 = vlaneseq
      %v363 = vshrl.u32 %v362, 7
      %v364 = vsub.s32 0, %v363
      %v365 = vrot.slane %v335, %v364
      %v366 = vlaneseq
      %v367 = vshrl.u32 %v366, 7
      %v368 = vsub.s32 0, %v367
      %v369 = vrot.slane %v337, %v368
      %v378 = vsub.f32 %v341, %v287
      %v379 = vsub.f32 %v345, %v287
      %v380 = vsub.f32 %v349, %v287
      %v381 = vsub.f32 %v353, %v287
      %v382 = vsub.f32 %v357, %v287
      %v383 = vsub.f32 %v361, %v287
      %v384 = vsub.f32 %v365, %v287
      %v385 = vsub.f32 %v369, %v287
      %v386 = vand.u32 2147483647, %v378
      %v387 = vand.u32 2147483647, %v379
      %v388 = vand.u32 2147483647, %v380
      %v389 = vand.u32 2147483647, %v381
      %v390 = vand.u32 2147483647, %v382
      %v391 = vand.u32 2147483647, %v383
      %v392 = vand.u32 2147483647, %v384
      %v393 = vand.u32 2147483647, %v385
      %v394 = vadd.f32 %v279, %v386
      %v395 = vadd.f32 %v280, %v387
      %v396 = vadd.f32 %v281, %v388
      %v397 = vadd.f32 %v282, %v389
      %v398 = vadd.f32 %v283, %v390
      %v399 = vadd.f32 %v284, %v391
      %v400 = vadd.f32 %v285, %v392
      %v401 = vadd.f32 %v286, %v393
      %v402 = vld [vmem:[%s1 + $0x10] sm:$0xff]
      %v404 = vcombine.high %v175, %v175
      %v406 = vunpack.c.l.s4 1966171168
      %v407 = vunpack.c.0.s8 %v406
      %v408 = vlaneseq
      %v409 = vshrl.u32 %v408, 7
      %v410 = vsub.s32 %v407, %v409
      %v411 = vrot.slane %v175, %v410
      %v413 = vunpack.c.l.s4 1966171168
      %v414 = vunpack.c.0.s8 %v413
      %v415 = vlaneseq
      %v416 = vshrl.u32 %v415, 7
      %v417 = vsub.s32 %v414, %v416
      %v418 = vrot.slane %v404, %v417
      %v419 = vcombine.high %v411, %v411
      %v420 = vcombine.high %v418, %v418
      %v422 = vunpack.c.l.s4 1966171168
      %v423 = vunpack.c.0.s8 %v422
      %v424 = vlaneseq
      %v425 = vshrl.u32 %v424, 7
      %v426 = vsub.s32 %v423, %v425
      %v427 = vrot.slane %v411, %v426
      %v429 = vunpack.c.l.s4 1966171168
      %v430 = vunpack.c.0.s8 %v429
      %v431 = vlaneseq
      %v432 = vshrl.u32 %v431, 7
      %v433 = vsub.s32 %v430, %v432
      %v434 = vrot.slane %v418, %v433
      %v436 = vunpack.c.l.s4 1966171168
      %v437 = vunpack.c.0.s8 %v436
      %v438 = vlaneseq
      %v439 = vshrl.u32 %v438, 7
      %v440 = vsub.s32 %v437, %v439
      %v441 = vrot.slane %v419, %v440
      %v443 = vunpack.c.l.s4 1966171168
      %v444 = vunpack.c.0.s8 %v443
      %v445 = vlaneseq
      %v446 = vshrl.u32 %v445, 7
      %v447 = vsub.s32 %v444, %v446
      %v448 = vrot.slane %v420, %v447
      %v449 = vcombine.high %v427, %v427
      %v450 = vcombine.high %v434, %v434
      %v451 = vcombine.high %v441, %v441
      %v452 = vcombine.high %v448, %v448
      %v453 = vlaneseq
      %v454 = vshrl.u32 %v453, 7
      %v455 = vsub.s32 0, %v454
      %v456 = vrot.slane %v427, %v455
      %v457 = vlaneseq
      %v458 = vshrl.u32 %v457, 7
      %v459 = vsub.s32 0, %v458
      %v460 = vrot.slane %v441, %v459
      %v461 = vlaneseq
      %v462 = vshrl.u32 %v461, 7
      %v463 = vsub.s32 0, %v462
      %v464 = vrot.slane %v449, %v463
      %v465 = vlaneseq
      %v466 = vshrl.u32 %v465, 7
      %v467 = vsub.s32 0, %v466
      %v468 = vrot.slane %v451, %v467
      %v469 = vlaneseq
      %v470 = vshrl.u32 %v469, 7
      %v471 = vsub.s32 0, %v470
      %v472 = vrot.slane %v434, %v471
      %v473 = vlaneseq
      %v474 = vshrl.u32 %v473, 7
      %v475 = vsub.s32 0, %v474
      %v476 = vrot.slane %v448, %v475
      %v477 = vlaneseq
      %v478 = vshrl.u32 %v477, 7
      %v479 = vsub.s32 0, %v478
      %v480 = vrot.slane %v450, %v479
      %v481 = vlaneseq
      %v482 = vshrl.u32 %v481, 7
      %v483 = vsub.s32 0, %v482
      %v484 = vrot.slane %v452, %v483
      %v493 = vsub.f32 %v456, %v402
      %v494 = vsub.f32 %v460, %v402
      %v495 = vsub.f32 %v464, %v402
      %v496 = vsub.f32 %v468, %v402
      %v497 = vsub.f32 %v472, %v402
      %v498 = vsub.f32 %v476, %v402
      %v499 = vsub.f32 %v480, %v402
      %v500 = vsub.f32 %v484, %v402
      %v501 = vand.u32 2147483647, %v493
      %v502 = vand.u32 2147483647, %v494
      %v503 = vand.u32 2147483647, %v495
      %v504 = vand.u32 2147483647, %v496
      %v505 = vand.u32 2147483647, %v497
      %v506 = vand.u32 2147483647, %v498
      %v507 = vand.u32 2147483647, %v499
      %v508 = vand.u32 2147483647, %v500
      %v509 = vadd.f32 %v394, %v501
      %v510 = vadd.f32 %v395, %v502
      %v511 = vadd.f32 %v396, %v503
      %v512 = vadd.f32 %v397, %v504
      %v513 = vadd.f32 %v398, %v505
      %v514 = vadd.f32 %v399, %v506
      %v515 = vadd.f32 %v400, %v507
      %v516 = vadd.f32 %v401, %v508
      %v517 = vld [vmem:[%s1 + $0x18] sm:$0xff]
      %v519 = vcombine.high %v176, %v176
      %v521 = vunpack.c.l.s4 1966171168
      %v522 = vunpack.c.0.s8 %v521
      %v523 = vlaneseq
      %v524 = vshrl.u32 %v523, 7
      %v525 = vsub.s32 %v522, %v524
      %v526 = vrot.slane %v176, %v525
      %v528 = vunpack.c.l.s4 1966171168
      %v529 = vunpack.c.0.s8 %v528
      %v530 = vlaneseq
      %v531 = vshrl.u32 %v530, 7
      %v532 = vsub.s32 %v529, %v531
      %v533 = vrot.slane %v519, %v532
      %v534 = vcombine.high %v526, %v526
      %v535 = vcombine.high %v533, %v533
      %v537 = vunpack.c.l.s4 1966171168
      %v538 = vunpack.c.0.s8 %v537
      %v539 = vlaneseq
      %v540 = vshrl.u32 %v539, 7
      %v541 = vsub.s32 %v538, %v540
      %v542 = vrot.slane %v526, %v541
      %v544 = vunpack.c.l.s4 1966171168
      %v545 = vunpack.c.0.s8 %v544
      %v546 = vlaneseq
      %v547 = vshrl.u32 %v546, 7
      %v548 = vsub.s32 %v545, %v547
      %v549 = vrot.slane %v533, %v548
      %v551 = vunpack.c.l.s4 1966171168
      %v552 = vunpack.c.0.s8 %v551
      %v553 = vlaneseq
      %v554 = vshrl.u32 %v553, 7
      %v555 = vsub.s32 %v552, %v554
      %v556 = vrot.slane %v534, %v555
      %v558 = vunpack.c.l.s4 1966171168
      %v559 = vunpack.c.0.s8 %v558
      %v560 = vlaneseq
      %v561 = vshrl.u32 %v560, 7
      %v562 = vsub.s32 %v559, %v561
      %v563 = vrot.slane %v535, %v562
      %v564 = vcombine.high %v542, %v542
      %v565 = vcombine.high %v549, %v549
      %v566 = vcombine.high %v556, %v556
      %v567 = vcombine.high %v563, %v563
      %v568 = vlaneseq
      %v569 = vshrl.u32 %v568, 7
      %v570 = vsub.s32 0, %v569
      %v571 = vrot.slane %v542, %v570
      %v572 = vlaneseq
      %v573 = vshrl.u32 %v572, 7
      %v574 = vsub.s32 0, %v573
      %v575 = vrot.slane %v556, %v574
      %v576 = vlaneseq
      %v577 = vshrl.u32 %v576, 7
      %v578 = vsub.s32 0, %v577
      %v579 = vrot.slane %v564, %v578
      %v580 = vlaneseq
      %v581 = vshrl.u32 %v580, 7
      %v582 = vsub.s32 0, %v581
      %v583 = vrot.slane %v566, %v582
      %v584 = vlaneseq
      %v585 = vshrl.u32 %v584, 7
      %v586 = vsub.s32 0, %v585
      %v587 = vrot.slane %v549, %v586
      %v588 = vlaneseq
      %v589 = vshrl.u32 %v588, 7
      %v590 = vsub.s32 0, %v589
      %v591 = vrot.slane %v563, %v590
      %v592 = vlaneseq
      %v593 = vshrl.u32 %v592, 7
      %v594 = vsub.s32 0, %v593
      %v595 = vrot.slane %v565, %v594
      %v596 = vlaneseq
      %v597 = vshrl.u32 %v596, 7
      %v598 = vsub.s32 0, %v597
      %v599 = vrot.slane %v567, %v598
      %v608 = vsub.f32 %v571, %v517
      %v609 = vsub.f32 %v575, %v517
      %v610 = vsub.f32 %v579, %v517
      %v611 = vsub.f32 %v583, %v517
      %v612 = vsub.f32 %v587, %v517
      %v613 = vsub.f32 %v591, %v517
      %v614 = vsub.f32 %v595, %v517
      %v615 = vsub.f32 %v599, %v517
      %v616 = vand.u32 2147483647, %v608
      %v617 = vand.u32 2147483647, %v609
      %v618 = vand.u32 2147483647, %v610
      %v619 = vand.u32 2147483647, %v611
      %v620 = vand.u32 2147483647, %v612
      %v621 = vand.u32 2147483647, %v613
      %v622 = vand.u32 2147483647, %v614
      %v623 = vand.u32 2147483647, %v615
      %v624 = vadd.f32 %v509, %v616
      %v625 = vadd.f32 %v510, %v617
      %v626 = vadd.f32 %v511, %v618
      %v627 = vadd.f32 %v512, %v619
      %v628 = vadd.f32 %v513, %v620
      %v629 = vadd.f32 %v514, %v621
      %v630 = vadd.f32 %v515, %v622
      %v631 = vadd.f32 %v516, %v623
      %v632 = vld [vmem:[%s1 + $0x20] sm:$0xff]
      %v634 = vcombine.high %v177, %v177
      %v636 = vunpack.c.l.s4 1966171168
      %v637 = vunpack.c.0.s8 %v636
      %v638 = vlaneseq
      %v639 = vshrl.u32 %v638, 7
      %v640 = vsub.s32 %v637, %v639
      %v641 = vrot.slane %v177, %v640
      %v643 = vunpack.c.l.s4 1966171168
      %v644 = vunpack.c.0.s8 %v643
      %v645 = vlaneseq
      %v646 = vshrl.u32 %v645, 7
      %v647 = vsub.s32 %v644, %v646
      %v648 = vrot.slane %v634, %v647
      %v649 = vcombine.high %v641, %v641
      %v650 = vcombine.high %v648, %v648
      %v652 = vunpack.c.l.s4 1966171168
      %v653 = vunpack.c.0.s8 %v652
      %v654 = vlaneseq
      %v655 = vshrl.u32 %v654, 7
      %v656 = vsub.s32 %v653, %v655
      %v657 = vrot.slane %v641, %v656
      %v659 = vunpack.c.l.s4 1966171168
      %v660 = vunpack.c.0.s8 %v659
      %v661 = vlaneseq
      %v662 = vshrl.u32 %v661, 7
      %v663 = vsub.s32 %v660, %v662
      %v664 = vrot.slane %v648, %v663
      %v666 = vunpack.c.l.s4 1966171168
      %v667 = vunpack.c.0.s8 %v666
      %v668 = vlaneseq
      %v669 = vshrl.u32 %v668, 7
      %v670 = vsub.s32 %v667, %v669
      %v671 = vrot.slane %v649, %v670
      %v673 = vunpack.c.l.s4 1966171168
      %v674 = vunpack.c.0.s8 %v673
      %v675 = vlaneseq
      %v676 = vshrl.u32 %v675, 7
      %v677 = vsub.s32 %v674, %v676
      %v678 = vrot.slane %v650, %v677
      %v679 = vcombine.high %v657, %v657
      %v680 = vcombine.high %v664, %v664
      %v681 = vcombine.high %v671, %v671
      %v682 = vcombine.high %v678, %v678
      %v683 = vlaneseq
      %v684 = vshrl.u32 %v683, 7
      %v685 = vsub.s32 0, %v684
      %v686 = vrot.slane %v657, %v685
      %v687 = vlaneseq
      %v688 = vshrl.u32 %v687, 7
      %v689 = vsub.s32 0, %v688
      %v690 = vrot.slane %v671, %v689
      %v691 = vlaneseq
      %v692 = vshrl.u32 %v691, 7
      %v693 = vsub.s32 0, %v692
      %v694 = vrot.slane %v679, %v693
      %v695 = vlaneseq
      %v696 = vshrl.u32 %v695, 7
      %v697 = vsub.s32 0, %v696
      %v698 = vrot.slane %v681, %v697
      %v699 = vlaneseq
      %v700 = vshrl.u32 %v699, 7
      %v701 = vsub.s32 0, %v700
      %v702 = vrot.slane %v664, %v701
      %v703 = vlaneseq
      %v704 = vshrl.u32 %v703, 7
      %v705 = vsub.s32 0, %v704
      %v706 = vrot.slane %v678, %v705
      %v707 = vlaneseq
      %v708 = vshrl.u32 %v707, 7
      %v709 = vsub.s32 0, %v708
      %v710 = vrot.slane %v680, %v709
      %v711 = vlaneseq
      %v712 = vshrl.u32 %v711, 7
      %v713 = vsub.s32 0, %v712
      %v714 = vrot.slane %v682, %v713
      %v723 = vsub.f32 %v686, %v632
      %v724 = vsub.f32 %v690, %v632
      %v725 = vsub.f32 %v694, %v632
      %v726 = vsub.f32 %v698, %v632
      %v727 = vsub.f32 %v702, %v632
      %v728 = vsub.f32 %v706, %v632
      %v729 = vsub.f32 %v710, %v632
      %v730 = vsub.f32 %v714, %v632
      %v731 = vand.u32 2147483647, %v723
      %v732 = vand.u32 2147483647, %v724
      %v733 = vand.u32 2147483647, %v725
      %v734 = vand.u32 2147483647, %v726
      %v735 = vand.u32 2147483647, %v727
      %v736 = vand.u32 2147483647, %v728
      %v737 = vand.u32 2147483647, %v729
      %v738 = vand.u32 2147483647, %v730
      %v739 = vadd.f32 %v624, %v731
      %v740 = vadd.f32 %v625, %v732
      %v741 = vadd.f32 %v626, %v733
      %v742 = vadd.f32 %v627, %v734
      %v743 = vadd.f32 %v628, %v735
      %v744 = vadd.f32 %v629, %v736
      %v745 = vadd.f32 %v630, %v737
      %v746 = vadd.f32 %v631, %v738
      %v747 = vld [vmem:[%s1 + $0x28] sm:$0xff]
      %v749 = vcombine.high %v178, %v178
      %v751 = vunpack.c.l.s4 1966171168
      %v752 = vunpack.c.0.s8 %v751
      %v753 = vlaneseq
      %v754 = vshrl.u32 %v753, 7
      %v755 = vsub.s32 %v752, %v754
      %v756 = vrot.slane %v178, %v755
      %v758 = vunpack.c.l.s4 1966171168
      %v759 = vunpack.c.0.s8 %v758
      %v760 = vlaneseq
      %v761 = vshrl.u32 %v760, 7
      %v762 = vsub.s32 %v759, %v761
      %v763 = vrot.slane %v749, %v762
      %v764 = vcombine.high %v756, %v756
      %v765 = vcombine.high %v763, %v763
      %v767 = vunpack.c.l.s4 1966171168
      %v768 = vunpack.c.0.s8 %v767
      %v769 = vlaneseq
      %v770 = vshrl.u32 %v769, 7
      %v771 = vsub.s32 %v768, %v770
      %v772 = vrot.slane %v756, %v771
      %v774 = vunpack.c.l.s4 1966171168
      %v775 = vunpack.c.0.s8 %v774
      %v776 = vlaneseq
      %v777 = vshrl.u32 %v776, 7
      %v778 = vsub.s32 %v775, %v777
      %v779 = vrot.slane %v763, %v778
      %v781 = vunpack.c.l.s4 1966171168
      %v782 = vunpack.c.0.s8 %v781
      %v783 = vlaneseq
      %v784 = vshrl.u32 %v783, 7
      %v785 = vsub.s32 %v782, %v784
      %v786 = vrot.slane %v764, %v785
      %v788 = vunpack.c.l.s4 1966171168
      %v789 = vunpack.c.0.s8 %v788
      %v790 = vlaneseq
      %v791 = vshrl.u32 %v790, 7
      %v792 = vsub.s32 %v789, %v791
      %v793 = vrot.slane %v765, %v792
      %v794 = vcombine.high %v772, %v772
      %v795 = vcombine.high %v779, %v779
      %v796 = vcombine.high %v786, %v786
      %v797 = vcombine.high %v793, %v793
      %v798 = vlaneseq
      %v799 = vshrl.u32 %v798, 7
      %v800 = vsub.s32 0, %v799
      %v801 = vrot.slane %v772, %v800
      %v802 = vlaneseq
      %v803 = vshrl.u32 %v802, 7
      %v804 = vsub.s32 0, %v803
      %v805 = vrot.slane %v786, %v804
      %v806 = vlaneseq
      %v807 = vshrl.u32 %v806, 7
      %v808 = vsub.s32 0, %v807
      %v809 = vrot.slane %v794, %v808
      %v810 = vlaneseq
      %v811 = vshrl.u32 %v810, 7
      %v812 = vsub.s32 0, %v811
      %v813 = vrot.slane %v796, %v812
      %v814 = vlaneseq
      %v815 = vshrl.u32 %v814, 7
      %v816 = vsub.s32 0, %v815
      %v817 = vrot.slane %v779, %v816
      %v818 = vlaneseq
      %v819 = vshrl.u32 %v818, 7
      %v820 = vsub.s32 0, %v819
      %v821 = vrot.slane %v793, %v820
      %v822 = vlaneseq
      %v823 = vshrl.u32 %v822, 7
      %v824 = vsub.s32 0, %v823
      %v825 = vrot.slane %v795, %v824
      %v826 = vlaneseq
      %v827 = vshrl.u32 %v826, 7
      %v828 = vsub.s32 0, %v827
      %v829 = vrot.slane %v797, %v828
      %v838 = vsub.f32 %v801, %v747
      %v839 = vsub.f32 %v805, %v747
      %v840 = vsub.f32 %v809, %v747
      %v841 = vsub.f32 %v813, %v747
      %v842 = vsub.f32 %v817, %v747
      %v843 = vsub.f32 %v821, %v747
      %v844 = vsub.f32 %v825, %v747
      %v845 = vsub.f32 %v829, %v747
      %v846 = vand.u32 2147483647, %v838
      %v847 = vand.u32 2147483647, %v839
      %v848 = vand.u32 2147483647, %v840
      %v849 = vand.u32 2147483647, %v841
      %v850 = vand.u32 2147483647, %v842
      %v851 = vand.u32 2147483647, %v843
      %v852 = vand.u32 2147483647, %v844
      %v853 = vand.u32 2147483647, %v845
      %v854 = vadd.f32 %v739, %v846
      %v855 = vadd.f32 %v740, %v847
      %v856 = vadd.f32 %v741, %v848
      %v857 = vadd.f32 %v742, %v849
      %v858 = vadd.f32 %v743, %v850
      %v859 = vadd.f32 %v744, %v851
      %v860 = vadd.f32 %v745, %v852
      %v861 = vadd.f32 %v746, %v853
      %v862 = vld [vmem:[%s1 + $0x30] sm:$0xff]
      %v864 = vcombine.high %v179, %v179
      %v866 = vunpack.c.l.s4 1966171168
      %v867 = vunpack.c.0.s8 %v866
      %v868 = vlaneseq
      %v869 = vshrl.u32 %v868, 7
      %v870 = vsub.s32 %v867, %v869
      %v871 = vrot.slane %v179, %v870
      %v873 = vunpack.c.l.s4 1966171168
      %v874 = vunpack.c.0.s8 %v873
      %v875 = vlaneseq
      %v876 = vshrl.u32 %v875, 7
      %v877 = vsub.s32 %v874, %v876
      %v878 = vrot.slane %v864, %v877
      %v879 = vcombine.high %v871, %v871
      %v880 = vcombine.high %v878, %v878
      %v882 = vunpack.c.l.s4 1966171168
      %v883 = vunpack.c.0.s8 %v882
      %v884 = vlaneseq
      %v885 = vshrl.u32 %v884, 7
      %v886 = vsub.s32 %v883, %v885
      %v887 = vrot.slane %v871, %v886
      %v889 = vunpack.c.l.s4 1966171168
      %v890 = vunpack.c.0.s8 %v889
      %v891 = vlaneseq
      %v892 = vshrl.u32 %v891, 7
      %v893 = vsub.s32 %v890, %v892
      %v894 = vrot.slane %v878, %v893
      %v896 = vunpack.c.l.s4 1966171168
      %v897 = vunpack.c.0.s8 %v896
      %v898 = vlaneseq
      %v899 = vshrl.u32 %v898, 7
      %v900 = vsub.s32 %v897, %v899
      %v901 = vrot.slane %v879, %v900
      %v903 = vunpack.c.l.s4 1966171168
      %v904 = vunpack.c.0.s8 %v903
      %v905 = vlaneseq
      %v906 = vshrl.u32 %v905, 7
      %v907 = vsub.s32 %v904, %v906
      %v908 = vrot.slane %v880, %v907
      %v909 = vcombine.high %v887, %v887
      %v910 = vcombine.high %v894, %v894
      %v911 = vcombine.high %v901, %v901
      %v912 = vcombine.high %v908, %v908
      %v913 = vlaneseq
      %v914 = vshrl.u32 %v913, 7
      %v915 = vsub.s32 0, %v914
      %v916 = vrot.slane %v887, %v915
      %v917 = vlaneseq
      %v918 = vshrl.u32 %v917, 7
      %v919 = vsub.s32 0, %v918
      %v920 = vrot.slane %v901, %v919
      %v921 = vlaneseq
      %v922 = vshrl.u32 %v921, 7
      %v923 = vsub.s32 0, %v922
      %v924 = vrot.slane %v909, %v923
      %v925 = vlaneseq
      %v926 = vshrl.u32 %v925, 7
      %v927 = vsub.s32 0, %v926
      %v928 = vrot.slane %v911, %v927
      %v929 = vlaneseq
      %v930 = vshrl.u32 %v929, 7
      %v931 = vsub.s32 0, %v930
      %v932 = vrot.slane %v894, %v931
      %v933 = vlaneseq
      %v934 = vshrl.u32 %v933, 7
      %v935 = vsub.s32 0, %v934
      %v936 = vrot.slane %v908, %v935
      %v937 = vlaneseq
      %v938 = vshrl.u32 %v937, 7
      %v939 = vsub.s32 0, %v938
      %v940 = vrot.slane %v910, %v939
      %v941 = vlaneseq
      %v942 = vshrl.u32 %v941, 7
      %v943 = vsub.s32 0, %v942
      %v944 = vrot.slane %v912, %v943
      %v953 = vsub.f32 %v916, %v862
      %v954 = vsub.f32 %v920, %v862
      %v955 = vsub.f32 %v924, %v862
      %v956 = vsub.f32 %v928, %v862
      %v957 = vsub.f32 %v932, %v862
      %v958 = vsub.f32 %v936, %v862
      %v959 = vsub.f32 %v940, %v862
      %v960 = vsub.f32 %v944, %v862
      %v961 = vand.u32 2147483647, %v953
      %v962 = vand.u32 2147483647, %v954
      %v963 = vand.u32 2147483647, %v955
      %v964 = vand.u32 2147483647, %v956
      %v965 = vand.u32 2147483647, %v957
      %v966 = vand.u32 2147483647, %v958
      %v967 = vand.u32 2147483647, %v959
      %v968 = vand.u32 2147483647, %v960
      %v969 = vadd.f32 %v854, %v961
      %v970 = vadd.f32 %v855, %v962
      %v971 = vadd.f32 %v856, %v963
      %v972 = vadd.f32 %v857, %v964
      %v973 = vadd.f32 %v858, %v965
      %v974 = vadd.f32 %v859, %v966
      %v975 = vadd.f32 %v860, %v967
      %v976 = vadd.f32 %v861, %v968
      %977 = vadd.xlane.f32.xlu0 %v969
      %v978 = vpop.xlane.xlu0 %977
      %979 = vadd.xlane.f32.xlu0 %v970
      %v980 = vpop.xlane.xlu0 %979
      %981 = vadd.xlane.f32.xlu0 %v971
      %v982 = vpop.xlane.xlu0 %981
      %983 = vadd.xlane.f32.xlu0 %v972
      %v984 = vpop.xlane.xlu0 %983
      %985 = vadd.xlane.f32.xlu0 %v973
      %v986 = vpop.xlane.xlu0 %985
      %987 = vadd.xlane.f32.xlu0 %v974
      %v988 = vpop.xlane.xlu0 %987
      %989 = vadd.xlane.f32.xlu0 %v975
      %v990 = vpop.xlane.xlu0 %989
      %991 = vadd.xlane.f32.xlu0 %v976
      %v992 = vpop.xlane.xlu0 %991
      %v1001 = vlaneseq
      %v1002 = vand.u32 %v1001, 127
      %v1003 = vlaneseq
      %v1004 = vshrl.u32 %v1003, 7
      %v1005 = vsub.s32 %v1002, %v1004
      %v1006 = vrot.slane %v978, %v1005
      %v1007 = vlaneseq
      %v1008 = vshrl.u32 %v1007, 7
      %v1009 = vsub.s32 %v1002, %v1008
      %v1010 = vrot.slane %v980, %v1009
      %v1011 = vlaneseq
      %v1012 = vshrl.u32 %v1011, 7
      %v1013 = vsub.s32 %v1002, %v1012
      %v1014 = vrot.slane %v982, %v1013
      %v1015 = vlaneseq
      %v1016 = vshrl.u32 %v1015, 7
      %v1017 = vsub.s32 %v1002, %v1016
      %v1018 = vrot.slane %v984, %v1017
      %v1019 = vlaneseq
      %v1020 = vshrl.u32 %v1019, 7
      %v1021 = vsub.s32 %v1002, %v1020
      %v1022 = vrot.slane %v986, %v1021
      %v1023 = vlaneseq
      %v1024 = vshrl.u32 %v1023, 7
      %v1025 = vsub.s32 %v1002, %v1024
      %v1026 = vrot.slane %v988, %v1025
      %v1027 = vlaneseq
      %v1028 = vshrl.u32 %v1027, 7
      %v1029 = vsub.s32 %v1002, %v1028
      %v1030 = vrot.slane %v990, %v1029
      %v1031 = vlaneseq
      %v1032 = vshrl.u32 %v1031, 7
      %v1033 = vsub.s32 %v1002, %v1032
      %v1034 = vrot.slane %v992, %v1033
      %vm1035 = vcmask 1041409
      %v1036 = vsel %vm1035, %v1010, %v1006
      %vm1037 = vcmask 1042434
      %v1038 = vsel %vm1037, %v1014, %v1036
      %vm1039 = vcmask 1043459
      %v1040 = vsel %vm1039, %v1018, %v1038
      %vm1041 = vcmask 1044484
      %v1042 = vsel %vm1041, %v1022, %v1040
      %vm1043 = vcmask 1045509
      %v1044 = vsel %vm1043, %v1026, %v1042
      %vm1045 = vcmask 1046534
      %v1046 = vsel %vm1045, %v1030, %v1044
      %vm1047 = vcmask 1047559
      %v1048 = vsel %vm1047, %v1034, %v1046
      %vm1050 = vcmask 64512
      %1051 = vst.msk [vmem:[#allocation2] sm:$0xff] %vm1050, %v1048
      %v1052 = vld [vmem:[%s1 + $0x38] sm:$0xff]
      %v1053 = vsub.f32 %v234, %v1052
      %v1054 = vsub.f32 %v238, %v1052
      %v1055 = vsub.f32 %v242, %v1052
      %v1056 = vsub.f32 %v246, %v1052
      %v1057 = vsub.f32 %v250, %v1052
      %v1058 = vsub.f32 %v254, %v1052
      %v1059 = vsub.f32 %v258, %v1052
      %v1060 = vsub.f32 %v262, %v1052
      %v1061 = vand.u32 2147483647, %v1053
      %v1062 = vand.u32 2147483647, %v1054
      %v1063 = vand.u32 2147483647, %v1055
      %v1064 = vand.u32 2147483647, %v1056
      %v1065 = vand.u32 2147483647, %v1057
      %v1066 = vand.u32 2147483647, %v1058
      %v1067 = vand.u32 2147483647, %v1059
      %v1068 = vand.u32 2147483647, %v1060
      %v1069 = vld [vmem:[%s1 + $0x40] sm:$0xff]
      %v1070 = vsub.f32 %v341, %v1069
      %v1071 = vsub.f32 %v345, %v1069
      %v1072 = vsub.f32 %v349, %v1069
      %v1073 = vsub.f32 %v353, %v1069
      %v1074 = vsub.f32 %v357, %v1069
      %v1075 = vsub.f32 %v361, %v1069
      %v1076 = vsub.f32 %v365, %v1069
      %v1077 = vsub.f32 %v369, %v1069
      %v1078 = vand.u32 2147483647, %v1070
      %v1079 = vand.u32 2147483647, %v1071
      %v1080 = vand.u32 2147483647, %v1072
      %v1081 = vand.u32 2147483647, %v1073
      %v1082 = vand.u32 2147483647, %v1074
      %v1083 = vand.u32 2147483647, %v1075
      %v1084 = vand.u32 2147483647, %v1076
      %v1085 = vand.u32 2147483647, %v1077
      %v1086 = vadd.f32 %v1061, %v1078
      %v1087 = vadd.f32 %v1062, %v1079
      %v1088 = vadd.f32 %v1063, %v1080
      %v1089 = vadd.f32 %v1064, %v1081
      %v1090 = vadd.f32 %v1065, %v1082
      %v1091 = vadd.f32 %v1066, %v1083
      %v1092 = vadd.f32 %v1067, %v1084
      %v1093 = vadd.f32 %v1068, %v1085
      %v1094 = vld [vmem:[%s1 + $0x48] sm:$0xff]
      %v1095 = vsub.f32 %v456, %v1094
      %v1096 = vsub.f32 %v460, %v1094
      %v1097 = vsub.f32 %v464, %v1094
      %v1098 = vsub.f32 %v468, %v1094
      %v1099 = vsub.f32 %v472, %v1094
      %v1100 = vsub.f32 %v476, %v1094
      %v1101 = vsub.f32 %v480, %v1094
      %v1102 = vsub.f32 %v484, %v1094
      %v1103 = vand.u32 2147483647, %v1095
      %v1104 = vand.u32 2147483647, %v1096
      %v1105 = vand.u32 2147483647, %v1097
      %v1106 = vand.u32 2147483647, %v1098
      %v1107 = vand.u32 2147483647, %v1099
      %v1108 = vand.u32 2147483647, %v1100
      %v1109 = vand.u32 2147483647, %v1101
      %v1110 = vand.u32 2147483647, %v1102
      %v1111 = vadd.f32 %v1086, %v1103
      %v1112 = vadd.f32 %v1087, %v1104
      %v1113 = vadd.f32 %v1088, %v1105
      %v1114 = vadd.f32 %v1089, %v1106
      %v1115 = vadd.f32 %v1090, %v1107
      %v1116 = vadd.f32 %v1091, %v1108
      %v1117 = vadd.f32 %v1092, %v1109
      %v1118 = vadd.f32 %v1093, %v1110
      %v1119 = vld [vmem:[%s1 + $0x50] sm:$0xff]
      %v1120 = vsub.f32 %v571, %v1119
      %v1121 = vsub.f32 %v575, %v1119
      %v1122 = vsub.f32 %v579, %v1119
      %v1123 = vsub.f32 %v583, %v1119
      %v1124 = vsub.f32 %v587, %v1119
      %v1125 = vsub.f32 %v591, %v1119
      %v1126 = vsub.f32 %v595, %v1119
      %v1127 = vsub.f32 %v599, %v1119
      %v1128 = vand.u32 2147483647, %v1120
      %v1129 = vand.u32 2147483647, %v1121
      %v1130 = vand.u32 2147483647, %v1122
      %v1131 = vand.u32 2147483647, %v1123
      %v1132 = vand.u32 2147483647, %v1124
      %v1133 = vand.u32 2147483647, %v1125
      %v1134 = vand.u32 2147483647, %v1126
      %v1135 = vand.u32 2147483647, %v1127
      %v1136 = vadd.f32 %v1111, %v1128
      %v1137 = vadd.f32 %v1112, %v1129
      %v1138 = vadd.f32 %v1113, %v1130
      %v1139 = vadd.f32 %v1114, %v1131
      %v1140 = vadd.f32 %v1115, %v1132
      %v1141 = vadd.f32 %v1116, %v1133
      %v1142 = vadd.f32 %v1117, %v1134
      %v1143 = vadd.f32 %v1118, %v1135
      %v1144 = vld [vmem:[%s1 + $0x58] sm:$0xff]
      %v1145 = vsub.f32 %v686, %v1144
      %v1146 = vsub.f32 %v690, %v1144
      %v1147 = vsub.f32 %v694, %v1144
      %v1148 = vsub.f32 %v698, %v1144
      %v1149 = vsub.f32 %v702, %v1144
      %v1150 = vsub.f32 %v706, %v1144
      %v1151 = vsub.f32 %v710, %v1144
      %v1152 = vsub.f32 %v714, %v1144
      %v1153 = vand.u32 2147483647, %v1145
      %v1154 = vand.u32 2147483647, %v1146
      %v1155 = vand.u32 2147483647, %v1147
      %v1156 = vand.u32 2147483647, %v1148
      %v1157 = vand.u32 2147483647, %v1149
      %v1158 = vand.u32 2147483647, %v1150
      %v1159 = vand.u32 2147483647, %v1151
      %v1160 = vand.u32 2147483647, %v1152
      %v1161 = vadd.f32 %v1136, %v1153
      %v1162 = vadd.f32 %v1137, %v1154
      %v1163 = vadd.f32 %v1138, %v1155
      %v1164 = vadd.f32 %v1139, %v1156
      %v1165 = vadd.f32 %v1140, %v1157
      %v1166 = vadd.f32 %v1141, %v1158
      %v1167 = vadd.f32 %v1142, %v1159
      %v1168 = vadd.f32 %v1143, %v1160
      %v1169 = vld [vmem:[%s1 + $0x60] sm:$0xff]
      %v1170 = vsub.f32 %v801, %v1169
      %v1171 = vsub.f32 %v805, %v1169
      %v1172 = vsub.f32 %v809, %v1169
      %v1173 = vsub.f32 %v813, %v1169
      %v1174 = vsub.f32 %v817, %v1169
      %v1175 = vsub.f32 %v821, %v1169
      %v1176 = vsub.f32 %v825, %v1169
      %v1177 = vsub.f32 %v829, %v1169
      %v1178 = vand.u32 2147483647, %v1170
      %v1179 = vand.u32 2147483647, %v1171
      %v1180 = vand.u32 2147483647, %v1172
      %v1181 = vand.u32 2147483647, %v1173
      %v1182 = vand.u32 2147483647, %v1174
      %v1183 = vand.u32 2147483647, %v1175
      %v1184 = vand.u32 2147483647, %v1176
      %v1185 = vand.u32 2147483647, %v1177
      %v1186 = vadd.f32 %v1161, %v1178
      %v1187 = vadd.f32 %v1162, %v1179
      %v1188 = vadd.f32 %v1163, %v1180
      %v1189 = vadd.f32 %v1164, %v1181
      %v1190 = vadd.f32 %v1165, %v1182
      %v1191 = vadd.f32 %v1166, %v1183
      %v1192 = vadd.f32 %v1167, %v1184
      %v1193 = vadd.f32 %v1168, %v1185
      %v1194 = vld [vmem:[%s1 + $0x68] sm:$0xff]
      %v1195 = vsub.f32 %v916, %v1194
      %v1196 = vsub.f32 %v920, %v1194
      %v1197 = vsub.f32 %v924, %v1194
      %v1198 = vsub.f32 %v928, %v1194
      %v1199 = vsub.f32 %v932, %v1194
      %v1200 = vsub.f32 %v936, %v1194
      %v1201 = vsub.f32 %v940, %v1194
      %v1202 = vsub.f32 %v944, %v1194
      %v1203 = vand.u32 2147483647, %v1195
      %v1204 = vand.u32 2147483647, %v1196
      %v1205 = vand.u32 2147483647, %v1197
      %v1206 = vand.u32 2147483647, %v1198
      %v1207 = vand.u32 2147483647, %v1199
      %v1208 = vand.u32 2147483647, %v1200
      %v1209 = vand.u32 2147483647, %v1201
      %v1210 = vand.u32 2147483647, %v1202
      %v1211 = vadd.f32 %v1186, %v1203
      %v1212 = vadd.f32 %v1187, %v1204
      %v1213 = vadd.f32 %v1188, %v1205
      %v1214 = vadd.f32 %v1189, %v1206
      %v1215 = vadd.f32 %v1190, %v1207
      %v1216 = vadd.f32 %v1191, %v1208
      %v1217 = vadd.f32 %v1192, %v1209
      %v1218 = vadd.f32 %v1193, %v1210
      %1219 = vadd.xlane.f32.xlu0 %v1211
      %v1220 = vpop.xlane.xlu0 %1219
      %1221 = vadd.xlane.f32.xlu0 %v1212
      %v1222 = vpop.xlane.xlu0 %1221
      %1223 = vadd.xlane.f32.xlu0 %v1213
      %v1224 = vpop.xlane.xlu0 %1223
      %1225 = vadd.xlane.f32.xlu0 %v1214
      %v1226 = vpop.xlane.xlu0 %1225
      %1227 = vadd.xlane.f32.xlu0 %v1215
      %v1228 = vpop.xlane.xlu0 %1227
      %1229 = vadd.xlane.f32.xlu0 %v1216
      %v1230 = vpop.xlane.xlu0 %1229
      %1231 = vadd.xlane.f32.xlu0 %v1217
      %v1232 = vpop.xlane.xlu0 %1231
      %1233 = vadd.xlane.f32.xlu0 %v1218
      %v1234 = vpop.xlane.xlu0 %1233
      %v1243 = vadd.s32 %v1002, 4294967288
      %v1244 = vlaneseq
      %v1245 = vshrl.u32 %v1244, 7
      %v1246 = vsub.s32 %v1243, %v1245
      %v1247 = vrot.slane %v1220, %v1246
      %v1248 = vlaneseq
      %v1249 = vshrl.u32 %v1248, 7
      %v1250 = vsub.s32 %v1243, %v1249
      %v1251 = vrot.slane %v1222, %v1250
      %v1252 = vlaneseq
      %v1253 = vshrl.u32 %v1252, 7
      %v1254 = vsub.s32 %v1243, %v1253
      %v1255 = vrot.slane %v1224, %v1254
      %v1256 = vlaneseq
      %v1257 = vshrl.u32 %v1256, 7
      %v1258 = vsub.s32 %v1243, %v1257
      %v1259 = vrot.slane %v1226, %v1258
      %v1260 = vlaneseq
      %v1261 = vshrl.u32 %v1260, 7
      %v1262 = vsub.s32 %v1243, %v1261
      %v1263 = vrot.slane %v1228, %v1262
      %v1264 = vlaneseq
      %v1265 = vshrl.u32 %v1264, 7
      %v1266 = vsub.s32 %v1243, %v1265
      %v1267 = vrot.slane %v1230, %v1266
      %v1268 = vlaneseq
      %v1269 = vshrl.u32 %v1268, 7
      %v1270 = vsub.s32 %v1243, %v1269
      %v1271 = vrot.slane %v1232, %v1270
      %v1272 = vlaneseq
      %v1273 = vshrl.u32 %v1272, 7
      %v1274 = vsub.s32 %v1243, %v1273
      %v1275 = vrot.slane %v1234, %v1274
      %v1276 = vsel %vm1035, %v1251, %v1247
      %v1277 = vsel %vm1037, %v1255, %v1276
      %v1278 = vsel %vm1039, %v1259, %v1277
      %v1279 = vsel %vm1041, %v1263, %v1278
      %v1280 = vsel %vm1043, %v1267, %v1279
      %v1281 = vsel %vm1045, %v1271, %v1280
      %v1282 = vsel %vm1047, %v1275, %v1281
      %vm1284 = vcmask 130112
      %1285 = vst.msk [vmem:[#allocation2] sm:$0xff] %vm1284, %v1282
      %v1286 = vld [vmem:[%s1 + $0x70] sm:$0xff]
      %v1287 = vsub.f32 %v234, %v1286
      %v1288 = vsub.f32 %v238, %v1286
      %v1289 = vsub.f32 %v242, %v1286
      %v1290 = vsub.f32 %v246, %v1286
      %v1291 = vsub.f32 %v250, %v1286
      %v1292 = vsub.f32 %v254, %v1286
      %v1293 = vsub.f32 %v258, %v1286
      %v1294 = vsub.f32 %v262, %v1286
      %v1295 = vand.u32 2147483647, %v1287
      %v1296 = vand.u32 2147483647, %v1288
      %v1297 = vand.u32 2147483647, %v1289
      %v1298 = vand.u32 2147483647, %v1290
      %v1299 = vand.u32 2147483647, %v1291
      %v1300 = vand.u32 2147483647, %v1292
      %v1301 = vand.u32 2147483647, %v1293
      %v1302 = vand.u32 2147483647, %v1294
      %v1303 = vld [vmem:[%s1 + $0x78] sm:$0xff]
      %v1304 = vsub.f32 %v341, %v1303
      %v1305 = vsub.f32 %v345, %v1303
      %v1306 = vsub.f32 %v349, %v1303
      %v1307 = vsub.f32 %v353, %v1303
      %v1308 = vsub.f32 %v357, %v1303
      %v1309 = vsub.f32 %v361, %v1303
      %v1310 = vsub.f32 %v365, %v1303
      %v1311 = vsub.f32 %v369, %v1303
      %v1312 = vand.u32 2147483647, %v1304
      %v1313 = vand.u32 2147483647, %v1305
      %v1314 = vand.u32 2147483647, %v1306
      %v1315 = vand.u32 2147483647, %v1307
      %v1316 = vand.u32 2147483647, %v1308
      %v1317 = vand.u32 2147483647, %v1309
      %v1318 = vand.u32 2147483647, %v1310
      %v1319 = vand.u32 2147483647, %v1311
      %v1320 = vadd.f32 %v1295, %v1312
      %v1321 = vadd.f32 %v1296, %v1313
      %v1322 = vadd.f32 %v1297, %v1314
      %v1323 = vadd.f32 %v1298, %v1315
      %v1324 = vadd.f32 %v1299, %v1316
      %v1325 = vadd.f32 %v1300, %v1317
      %v1326 = vadd.f32 %v1301, %v1318
      %v1327 = vadd.f32 %v1302, %v1319
      %v1328 = vld [vmem:[%s1 + $0x80] sm:$0xff]
      %v1329 = vsub.f32 %v456, %v1328
      %v1330 = vsub.f32 %v460, %v1328
      %v1331 = vsub.f32 %v464, %v1328
      %v1332 = vsub.f32 %v468, %v1328
      %v1333 = vsub.f32 %v472, %v1328
      %v1334 = vsub.f32 %v476, %v1328
      %v1335 = vsub.f32 %v480, %v1328
      %v1336 = vsub.f32 %v484, %v1328
      %v1337 = vand.u32 2147483647, %v1329
      %v1338 = vand.u32 2147483647, %v1330
      %v1339 = vand.u32 2147483647, %v1331
      %v1340 = vand.u32 2147483647, %v1332
      %v1341 = vand.u32 2147483647, %v1333
      %v1342 = vand.u32 2147483647, %v1334
      %v1343 = vand.u32 2147483647, %v1335
      %v1344 = vand.u32 2147483647, %v1336
      %v1345 = vadd.f32 %v1320, %v1337
      %v1346 = vadd.f32 %v1321, %v1338
      %v1347 = vadd.f32 %v1322, %v1339
      %v1348 = vadd.f32 %v1323, %v1340
      %v1349 = vadd.f32 %v1324, %v1341
      %v1350 = vadd.f32 %v1325, %v1342
      %v1351 = vadd.f32 %v1326, %v1343
      %v1352 = vadd.f32 %v1327, %v1344
      %v1353 = vld [vmem:[%s1 + $0x88] sm:$0xff]
      %v1354 = vsub.f32 %v571, %v1353
      %v1355 = vsub.f32 %v575, %v1353
      %v1356 = vsub.f32 %v579, %v1353
      %v1357 = vsub.f32 %v583, %v1353
      %v1358 = vsub.f32 %v587, %v1353
      %v1359 = vsub.f32 %v591, %v1353
      %v1360 = vsub.f32 %v595, %v1353
      %v1361 = vsub.f32 %v599, %v1353
      %v1362 = vand.u32 2147483647, %v1354
      %v1363 = vand.u32 2147483647, %v1355
      %v1364 = vand.u32 2147483647, %v1356
      %v1365 = vand.u32 2147483647, %v1357
      %v1366 = vand.u32 2147483647, %v1358
      %v1367 = vand.u32 2147483647, %v1359
      %v1368 = vand.u32 2147483647, %v1360
      %v1369 = vand.u32 2147483647, %v1361
      %v1370 = vadd.f32 %v1345, %v1362
      %v1371 = vadd.f32 %v1346, %v1363
      %v1372 = vadd.f32 %v1347, %v1364
      %v1373 = vadd.f32 %v1348, %v1365
      %v1374 = vadd.f32 %v1349, %v1366
      %v1375 = vadd.f32 %v1350, %v1367
      %v1376 = vadd.f32 %v1351, %v1368
      %v1377 = vadd.f32 %v1352, %v1369
      %v1378 = vld [vmem:[%s1 + $0x90] sm:$0xff]
      %v1379 = vsub.f32 %v686, %v1378
      %v1380 = vsub.f32 %v690, %v1378
      %v1381 = vsub.f32 %v694, %v1378
      %v1382 = vsub.f32 %v698, %v1378
      %v1383 = vsub.f32 %v702, %v1378
      %v1384 = vsub.f32 %v706, %v1378
      %v1385 = vsub.f32 %v710, %v1378
      %v1386 = vsub.f32 %v714, %v1378
      %v1387 = vand.u32 2147483647, %v1379
      %v1388 = vand.u32 2147483647, %v1380
      %v1389 = vand.u32 2147483647, %v1381
      %v1390 = vand.u32 2147483647, %v1382
      %v1391 = vand.u32 2147483647, %v1383
      %v1392 = vand.u32 2147483647, %v1384
      %v1393 = vand.u32 2147483647, %v1385
      %v1394 = vand.u32 2147483647, %v1386
      %v1395 = vadd.f32 %v1370, %v1387
      %v1396 = vadd.f32 %v1371, %v1388
      %v1397 = vadd.f32 %v1372, %v1389
      %v1398 = vadd.f32 %v1373, %v1390
      %v1399 = vadd.f32 %v1374, %v1391
      %v1400 = vadd.f32 %v1375, %v1392
      %v1401 = vadd.f32 %v1376, %v1393
      %v1402 = vadd.f32 %v1377, %v1394
      %v1403 = vld [vmem:[%s1 + $0x98] sm:$0xff]
      %v1404 = vsub.f32 %v801, %v1403
      %v1405 = vsub.f32 %v805, %v1403
      %v1406 = vsub.f32 %v809, %v1403
      %v1407 = vsub.f32 %v813, %v1403
      %v1408 = vsub.f32 %v817, %v1403
      %v1409 = vsub.f32 %v821, %v1403
      %v1410 = vsub.f32 %v825, %v1403
      %v1411 = vsub.f32 %v829, %v1403
      %v1412 = vand.u32 2147483647, %v1404
      %v1413 = vand.u32 2147483647, %v1405
      %v1414 = vand.u32 2147483647, %v1406
      %v1415 = vand.u32 2147483647, %v1407
      %v1416 = vand.u32 2147483647, %v1408
      %v1417 = vand.u32 2147483647, %v1409
      %v1418 = vand.u32 2147483647, %v1410
      %v1419 = vand.u32 2147483647, %v1411
      %v1420 = vadd.f32 %v1395, %v1412
      %v1421 = vadd.f32 %v1396, %v1413
      %v1422 = vadd.f32 %v1397, %v1414
      %v1423 = vadd.f32 %v1398, %v1415
      %v1424 = vadd.f32 %v1399, %v1416
      %v1425 = vadd.f32 %v1400, %v1417
      %v1426 = vadd.f32 %v1401, %v1418
      %v1427 = vadd.f32 %v1402, %v1419
      %v1428 = vld [vmem:[%s1 + $0xa0] sm:$0xff]
      %v1429 = vsub.f32 %v916, %v1428
      %v1430 = vsub.f32 %v920, %v1428
      %v1431 = vsub.f32 %v924, %v1428
      %v1432 = vsub.f32 %v928, %v1428
      %v1433 = vsub.f32 %v932, %v1428
      %v1434 = vsub.f32 %v936, %v1428
      %v1435 = vsub.f32 %v940, %v1428
      %v1436 = vsub.f32 %v944, %v1428
      %v1437 = vand.u32 2147483647, %v1429
      %v1438 = vand.u32 2147483647, %v1430
      %v1439 = vand.u32 2147483647, %v1431
      %v1440 = vand.u32 2147483647, %v1432
      %v1441 = vand.u32 2147483647, %v1433
      %v1442 = vand.u32 2147483647, %v1434
      %v1443 = vand.u32 2147483647, %v1435
      %v1444 = vand.u32 2147483647, %v1436
      %v1445 = vadd.f32 %v1420, %v1437
      %v1446 = vadd.f32 %v1421, %v1438
      %v1447 = vadd.f32 %v1422, %v1439
      %v1448 = vadd.f32 %v1423, %v1440
      %v1449 = vadd.f32 %v1424, %v1441
      %v1450 = vadd.f32 %v1425, %v1442
      %v1451 = vadd.f32 %v1426, %v1443
      %v1452 = vadd.f32 %v1427, %v1444
      %1453 = vadd.xlane.f32.xlu0 %v1445
      %v1454 = vpop.xlane.xlu0 %1453
      %1455 = vadd.xlane.f32.xlu0 %v1446
      %v1456 = vpop.xlane.xlu0 %1455
      %1457 = vadd.xlane.f32.xlu0 %v1447
      %v1458 = vpop.xlane.xlu0 %1457
      %1459 = vadd.xlane.f32.xlu0 %v1448
      %v1460 = vpop.xlane.xlu0 %1459
      %1461 = vadd.xlane.f32.xlu0 %v1449
      %v1462 = vpop.xlane.xlu0 %1461
      %1463 = vadd.xlane.f32.xlu0 %v1450
      %v1464 = vpop.xlane.xlu0 %1463
      %1465 = vadd.xlane.f32.xlu0 %v1451
      %v1466 = vpop.xlane.xlu0 %1465
      %1467 = vadd.xlane.f32.xlu0 %v1452
      %v1468 = vpop.xlane.xlu0 %1467
      %v1477 = vadd.s32 %v1002, 4294967280
      %v1478 = vlaneseq
      %v1479 = vshrl.u32 %v1478, 7
      %v1480 = vsub.s32 %v1477, %v1479
      %v1481 = vrot.slane %v1454, %v1480
      %v1482 = vlaneseq
      %v1483 = vshrl.u32 %v1482, 7
      %v1484 = vsub.s32 %v1477, %v1483
      %v1485 = vrot.slane %v1456, %v1484
      %v1486 = vlaneseq
      %v1487 = vshrl.u32 %v1486, 7
      %v1488 = vsub.s32 %v1477, %v1487
      %v1489 = vrot.slane %v1458, %v1488
      %v1490 = vlaneseq
      %v1491 = vshrl.u32 %v1490, 7
      %v1492 = vsub.s32 %v1477, %v1491
      %v1493 = vrot.slane %v1460, %v1492
      %v1494 = vlaneseq
      %v1495 = vshrl.u32 %v1494, 7
      %v1496 = vsub.s32 %v1477, %v1495
      %v1497 = vrot.slane %v1462, %v1496
      %v1498 = vlaneseq
      %v1499 = vshrl.u32 %v1498, 7
      %v1500 = vsub.s32 %v1477, %v1499
      %v1501 = vrot.slane %v1464, %v1500
      %v1502 = vlaneseq
      %v1503 = vshrl.u32 %v1502, 7
      %v1504 = vsub.s32 %v1477, %v1503
      %v1505 = vrot.slane %v1466, %v1504
      %v1506 = vlaneseq
      %v1507 = vshrl.u32 %v1506, 7
      %v1508 = vsub.s32 %v1477, %v1507
      %v1509 = vrot.slane %v1468, %v1508
      %v1510 = vsel %vm1035, %v1485, %v1481
      %v1511 = vsel %vm1037, %v1489, %v1510
      %v1512 = vsel %vm1039, %v1493, %v1511
      %v1513 = vsel %vm1041, %v1497, %v1512
      %v1514 = vsel %vm1043, %v1501, %v1513
      %v1515 = vsel %vm1045, %v1505, %v1514
      %v1516 = vsel %vm1047, %v1509, %v1515
      %vm1518 = vcmask 195712
      %1519 = vst.msk [vmem:[#allocation2] sm:$0xff] %vm1518, %v1516
      %v1520 = vld [vmem:[%s1 + $0xa8] sm:$0xff]
      %v1521 = vsub.f32 %v234, %v1520
      %v1522 = vsub.f32 %v238, %v1520
      %v1523 = vsub.f32 %v242, %v1520
      %v1524 = vsub.f32 %v246, %v1520
      %v1525 = vsub.f32 %v250, %v1520
      %v1526 = vsub.f32 %v254, %v1520
      %v1527 = vsub.f32 %v258, %v1520
      %v1528 = vsub.f32 %v262, %v1520
      %v1529 = vand.u32 2147483647, %v1521
      %v1530 = vand.u32 2147483647, %v1522
      %v1531 = vand.u32 2147483647, %v1523
      %v1532 = vand.u32 2147483647, %v1524
      %v1533 = vand.u32 2147483647, %v1525
      %v1534 = vand.u32 2147483647, %v1526
      %v1535 = vand.u32 2147483647, %v1527
      %v1536 = vand.u32 2147483647, %v1528
      %v1537 = vld [vmem:[%s1 + $0xb0] sm:$0xff]
      %v1538 = vsub.f32 %v341, %v1537
      %v1539 = vsub.f32 %v345, %v1537
      %v1540 = vsub.f32 %v349, %v1537
      %v1541 = vsub.f32 %v353, %v1537
      %v1542 = vsub.f32 %v357, %v1537
      %v1543 = vsub.f32 %v361, %v1537
      %v1544 = vsub.f32 %v365, %v1537
      %v1545 = vsub.f32 %v369, %v1537
      %v1546 = vand.u32 2147483647, %v1538
      %v1547 = vand.u32 2147483647, %v1539
      %v1548 = vand.u32 2147483647, %v1540
      %v1549 = vand.u32 2147483647, %v1541
      %v1550 = vand.u32 2147483647, %v1542
      %v1551 = vand.u32 2147483647, %v1543
      %v1552 = vand.u32 2147483647, %v1544
      %v1553 = vand.u32 2147483647, %v1545
      %v1554 = vadd.f32 %v1529, %v1546
      %v1555 = vadd.f32 %v1530, %v1547
      %v1556 = vadd.f32 %v1531, %v1548
      %v1557 = vadd.f32 %v1532, %v1549
      %v1558 = vadd.f32 %v1533, %v1550
      %v1559 = vadd.f32 %v1534, %v1551
      %v1560 = vadd.f32 %v1535, %v1552
      %v1561 = vadd.f32 %v1536, %v1553
      %v1562 = vld [vmem:[%s1 + $0xb8] sm:$0xff]
      %v1563 = vsub.f32 %v456, %v1562
      %v1564 = vsub.f32 %v460, %v1562
      %v1565 = vsub.f32 %v464, %v1562
      %v1566 = vsub.f32 %v468, %v1562
      %v1567 = vsub.f32 %v472, %v1562
      %v1568 = vsub.f32 %v476, %v1562
      %v1569 = vsub.f32 %v480, %v1562
      %v1570 = vsub.f32 %v484, %v1562
      %v1571 = vand.u32 2147483647, %v1563
      %v1572 = vand.u32 2147483647, %v1564
      %v1573 = vand.u32 2147483647, %v1565
      %v1574 = vand.u32 2147483647, %v1566
      %v1575 = vand.u32 2147483647, %v1567
      %v1576 = vand.u32 2147483647, %v1568
      %v1577 = vand.u32 2147483647, %v1569
      %v1578 = vand.u32 2147483647, %v1570
      %v1579 = vadd.f32 %v1554, %v1571
      %v1580 = vadd.f32 %v1555, %v1572
      %v1581 = vadd.f32 %v1556, %v1573
      %v1582 = vadd.f32 %v1557, %v1574
      %v1583 = vadd.f32 %v1558, %v1575
      %v1584 = vadd.f32 %v1559, %v1576
      %v1585 = vadd.f32 %v1560, %v1577
      %v1586 = vadd.f32 %v1561, %v1578
      %v1587 = vld [vmem:[%s1 + $0xc0] sm:$0xff]
      %v1588 = vsub.f32 %v571, %v1587
      %v1589 = vsub.f32 %v575, %v1587
      %v1590 = vsub.f32 %v579, %v1587
      %v1591 = vsub.f32 %v583, %v1587
      %v1592 = vsub.f32 %v587, %v1587
      %v1593 = vsub.f32 %v591, %v1587
      %v1594 = vsub.f32 %v595, %v1587
      %v1595 = vsub.f32 %v599, %v1587
      %v1596 = vand.u32 2147483647, %v1588
      %v1597 = vand.u32 2147483647, %v1589
      %v1598 = vand.u32 2147483647, %v1590
      %v1599 = vand.u32 2147483647, %v1591
      %v1600 = vand.u32 2147483647, %v1592
      %v1601 = vand.u32 2147483647, %v1593
      %v1602 = vand.u32 2147483647, %v1594
      %v1603 = vand.u32 2147483647, %v1595
      %v1604 = vadd.f32 %v1579, %v1596
      %v1605 = vadd.f32 %v1580, %v1597
      %v1606 = vadd.f32 %v1581, %v1598
      %v1607 = vadd.f32 %v1582, %v1599
      %v1608 = vadd.f32 %v1583, %v1600
      %v1609 = vadd.f32 %v1584, %v1601
      %v1610 = vadd.f32 %v1585, %v1602
      %v1611 = vadd.f32 %v1586, %v1603
      %v1612 = vld [vmem:[%s1 + $0xc8] sm:$0xff]
      %v1613 = vsub.f32 %v686, %v1612
      %v1614 = vsub.f32 %v690, %v1612
      %v1615 = vsub.f32 %v694, %v1612
      %v1616 = vsub.f32 %v698, %v1612
      %v1617 = vsub.f32 %v702, %v1612
      %v1618 = vsub.f32 %v706, %v1612
      %v1619 = vsub.f32 %v710, %v1612
      %v1620 = vsub.f32 %v714, %v1612
      %v1621 = vand.u32 2147483647, %v1613
      %v1622 = vand.u32 2147483647, %v1614
      %v1623 = vand.u32 2147483647, %v1615
      %v1624 = vand.u32 2147483647, %v1616
      %v1625 = vand.u32 2147483647, %v1617
      %v1626 = vand.u32 2147483647, %v1618
      %v1627 = vand.u32 2147483647, %v1619
      %v1628 = vand.u32 2147483647, %v1620
      %v1629 = vadd.f32 %v1604, %v1621
      %v1630 = vadd.f32 %v1605, %v1622
      %v1631 = vadd.f32 %v1606, %v1623
      %v1632 = vadd.f32 %v1607, %v1624
      %v1633 = vadd.f32 %v1608, %v1625
      %v1634 = vadd.f32 %v1609, %v1626
      %v1635 = vadd.f32 %v1610, %v1627
      %v1636 = vadd.f32 %v1611, %v1628
      %v1637 = vld [vmem:[%s1 + $0xd0] sm:$0xff]
      %v1638 = vsub.f32 %v801, %v1637
      %v1639 = vsub.f32 %v805, %v1637
      %v1640 = vsub.f32 %v809, %v1637
      %v1641 = vsub.f32 %v813, %v1637
      %v1642 = vsub.f32 %v817, %v1637
      %v1643 = vsub.f32 %v821, %v1637
      %v1644 = vsub.f32 %v825, %v1637
      %v1645 = vsub.f32 %v829, %v1637
      %v1646 = vand.u32 2147483647, %v1638
      %v1647 = vand.u32 2147483647, %v1639
      %v1648 = vand.u32 2147483647, %v1640
      %v1649 = vand.u32 2147483647, %v1641
      %v1650 = vand.u32 2147483647, %v1642
      %v1651 = vand.u32 2147483647, %v1643
      %v1652 = vand.u32 2147483647, %v1644
      %v1653 = vand.u32 2147483647, %v1645
      %v1654 = vadd.f32 %v1629, %v1646
      %v1655 = vadd.f32 %v1630, %v1647
      %v1656 = vadd.f32 %v1631, %v1648
      %v1657 = vadd.f32 %v1632, %v1649
      %v1658 = vadd.f32 %v1633, %v1650
      %v1659 = vadd.f32 %v1634, %v1651
      %v1660 = vadd.f32 %v1635, %v1652
      %v1661 = vadd.f32 %v1636, %v1653
      %v1662 = vld [vmem:[%s1 + $0xd8] sm:$0xff]
      %v1663 = vsub.f32 %v916, %v1662
      %v1664 = vsub.f32 %v920, %v1662
      %v1665 = vsub.f32 %v924, %v1662
      %v1666 = vsub.f32 %v928, %v1662
      %v1667 = vsub.f32 %v932, %v1662
      %v1668 = vsub.f32 %v936, %v1662
      %v1669 = vsub.f32 %v940, %v1662
      %v1670 = vsub.f32 %v944, %v1662
      %v1671 = vand.u32 2147483647, %v1663
      %v1672 = vand.u32 2147483647, %v1664
      %v1673 = vand.u32 2147483647, %v1665
      %v1674 = vand.u32 2147483647, %v1666
      %v1675 = vand.u32 2147483647, %v1667
      %v1676 = vand.u32 2147483647, %v1668
      %v1677 = vand.u32 2147483647, %v1669
      %v1678 = vand.u32 2147483647, %v1670
      %v1679 = vadd.f32 %v1654, %v1671
      %v1680 = vadd.f32 %v1655, %v1672
      %v1681 = vadd.f32 %v1656, %v1673
      %v1682 = vadd.f32 %v1657, %v1674
      %v1683 = vadd.f32 %v1658, %v1675
      %v1684 = vadd.f32 %v1659, %v1676
      %v1685 = vadd.f32 %v1660, %v1677
      %v1686 = vadd.f32 %v1661, %v1678
      %1687 = vadd.xlane.f32.xlu0 %v1679
      %v1688 = vpop.xlane.xlu0 %1687
      %1689 = vadd.xlane.f32.xlu0 %v1680
      %v1690 = vpop.xlane.xlu0 %1689
      %1691 = vadd.xlane.f32.xlu0 %v1681
      %v1692 = vpop.xlane.xlu0 %1691
      %1693 = vadd.xlane.f32.xlu0 %v1682
      %v1694 = vpop.xlane.xlu0 %1693
      %1695 = vadd.xlane.f32.xlu0 %v1683
      %v1696 = vpop.xlane.xlu0 %1695
      %1697 = vadd.xlane.f32.xlu0 %v1684
      %v1698 = vpop.xlane.xlu0 %1697
      %1699 = vadd.xlane.f32.xlu0 %v1685
      %v1700 = vpop.xlane.xlu0 %1699
      %1701 = vadd.xlane.f32.xlu0 %v1686
      %v1702 = vpop.xlane.xlu0 %1701
      %v1711 = vadd.s32 %v1002, 4294967272
      %v1712 = vlaneseq
      %v1713 = vshrl.u32 %v1712, 7
      %v1714 = vsub.s32 %v1711, %v1713
      %v1715 = vrot.slane %v1688, %v1714
      %v1716 = vlaneseq
      %v1717 = vshrl.u32 %v1716, 7
      %v1718 = vsub.s32 %v1711, %v1717
      %v1719 = vrot.slane %v1690, %v1718
      %v1720 = vlaneseq
      %v1721 = vshrl.u32 %v1720, 7
      %v1722 = vsub.s32 %v1711, %v1721
      %v1723 = vrot.slane %v1692, %v1722
      %v1724 = vlaneseq
      %v1725 = vshrl.u32 %v1724, 7
      %v1726 = vsub.s32 %v1711, %v1725
      %v1727 = vrot.slane %v1694, %v1726
      %v1728 = vlaneseq
      %v1729 = vshrl.u32 %v1728, 7
      %v1730 = vsub.s32 %v1711, %v1729
      %v1731 = vrot.slane %v1696, %v1730
      %v1732 = vlaneseq
      %v1733 = vshrl.u32 %v1732, 7
      %v1734 = vsub.s32 %v1711, %v1733
      %v1735 = vrot.slane %v1698, %v1734
      %v1736 = vlaneseq
      %v1737 = vshrl.u32 %v1736, 7
      %v1738 = vsub.s32 %v1711, %v1737
      %v1739 = vrot.slane %v1700, %v1738
      %v1740 = vlaneseq
      %v1741 = vshrl.u32 %v1740, 7
      %v1742 = vsub.s32 %v1711, %v1741
      %v1743 = vrot.slane %v1702, %v1742
      %v1744 = vsel %vm1035, %v1719, %v1715
      %v1745 = vsel %vm1037, %v1723, %v1744
      %v1746 = vsel %vm1039, %v1727, %v1745
      %v1747 = vsel %vm1041, %v1731, %v1746
      %v1748 = vsel %vm1043, %v1735, %v1747
      %v1749 = vsel %vm1045, %v1739, %v1748
      %v1750 = vsel %vm1047, %v1743, %v1749
      %vm1752 = vcmask 261312
      %1753 = vst.msk [vmem:[#allocation2] sm:$0xff] %vm1752, %v1750
      %v1754 = vld [vmem:[%s1 + $0xe0] sm:$0xff]
      %v1755 = vsub.f32 %v234, %v1754
      %v1756 = vsub.f32 %v238, %v1754
      %v1757 = vsub.f32 %v242, %v1754
      %v1758 = vsub.f32 %v246, %v1754
      %v1759 = vsub.f32 %v250, %v1754
      %v1760 = vsub.f32 %v254, %v1754
      %v1761 = vsub.f32 %v258, %v1754
      %v1762 = vsub.f32 %v262, %v1754
      %v1763 = vand.u32 2147483647, %v1755
      %v1764 = vand.u32 2147483647, %v1756
      %v1765 = vand.u32 2147483647, %v1757
      %v1766 = vand.u32 2147483647, %v1758
      %v1767 = vand.u32 2147483647, %v1759
      %v1768 = vand.u32 2147483647, %v1760
      %v1769 = vand.u32 2147483647, %v1761
      %v1770 = vand.u32 2147483647, %v1762
      %v1771 = vld [vmem:[%s1 + $0xe8] sm:$0xff]
      %v1772 = vsub.f32 %v341, %v1771
      %v1773 = vsub.f32 %v345, %v1771
      %v1774 = vsub.f32 %v349, %v1771
      %v1775 = vsub.f32 %v353, %v1771
      %v1776 = vsub.f32 %v357, %v1771
      %v1777 = vsub.f32 %v361, %v1771
      %v1778 = vsub.f32 %v365, %v1771
      %v1779 = vsub.f32 %v369, %v1771
      %v1780 = vand.u32 2147483647, %v1772
      %v1781 = vand.u32 2147483647, %v1773
      %v1782 = vand.u32 2147483647, %v1774
      %v1783 = vand.u32 2147483647, %v1775
      %v1784 = vand.u32 2147483647, %v1776
      %v1785 = vand.u32 2147483647, %v1777
      %v1786 = vand.u32 2147483647, %v1778
      %v1787 = vand.u32 2147483647, %v1779
      %v1788 = vadd.f32 %v1763, %v1780
      %v1789 = vadd.f32 %v1764, %v1781
      %v1790 = vadd.f32 %v1765, %v1782
      %v1791 = vadd.f32 %v1766, %v1783
      %v1792 = vadd.f32 %v1767, %v1784
      %v1793 = vadd.f32 %v1768, %v1785
      %v1794 = vadd.f32 %v1769, %v1786
      %v1795 = vadd.f32 %v1770, %v1787
      %v1796 = vld [vmem:[%s1 + $0xf0] sm:$0xff]
      %v1797 = vsub.f32 %v456, %v1796
      %v1798 = vsub.f32 %v460, %v1796
      %v1799 = vsub.f32 %v464, %v1796
      %v1800 = vsub.f32 %v468, %v1796
      %v1801 = vsub.f32 %v472, %v1796
      %v1802 = vsub.f32 %v476, %v1796
      %v1803 = vsub.f32 %v480, %v1796
      %v1804 = vsub.f32 %v484, %v1796
      %v1805 = vand.u32 2147483647, %v1797
      %v1806 = vand.u32 2147483647, %v1798
      %v1807 = vand.u32 2147483647, %v1799
      %v1808 = vand.u32 2147483647, %v1800
      %v1809 = vand.u32 2147483647, %v1801
      %v1810 = vand.u32 2147483647, %v1802
      %v1811 = vand.u32 2147483647, %v1803
      %v1812 = vand.u32 2147483647, %v1804
      %v1813 = vadd.f32 %v1788, %v1805
      %v1814 = vadd.f32 %v1789, %v1806
      %v1815 = vadd.f32 %v1790, %v1807
      %v1816 = vadd.f32 %v1791, %v1808
      %v1817 = vadd.f32 %v1792, %v1809
      %v1818 = vadd.f32 %v1793, %v1810
      %v1819 = vadd.f32 %v1794, %v1811
      %v1820 = vadd.f32 %v1795, %v1812
      %v1821 = vld [vmem:[%s1 + $0xf8] sm:$0xff]
      %v1822 = vsub.f32 %v571, %v1821
      %v1823 = vsub.f32 %v575, %v1821
      %v1824 = vsub.f32 %v579, %v1821
      %v1825 = vsub.f32 %v583, %v1821
      %v1826 = vsub.f32 %v587, %v1821
      %v1827 = vsub.f32 %v591, %v1821
      %v1828 = vsub.f32 %v595, %v1821
      %v1829 = vsub.f32 %v599, %v1821
      %v1830 = vand.u32 2147483647, %v1822
      %v1831 = vand.u32 2147483647, %v1823
      %v1832 = vand.u32 2147483647, %v1824
      %v1833 = vand.u32 2147483647, %v1825
      %v1834 = vand.u32 2147483647, %v1826
      %v1835 = vand.u32 2147483647, %v1827
      %v1836 = vand.u32 2147483647, %v1828
      %v1837 = vand.u32 2147483647, %v1829
      %v1838 = vadd.f32 %v1813, %v1830
      %v1839 = vadd.f32 %v1814, %v1831
      %v1840 = vadd.f32 %v1815, %v1832
      %v1841 = vadd.f32 %v1816, %v1833
      %v1842 = vadd.f32 %v1817, %v1834
      %v1843 = vadd.f32 %v1818, %v1835
      %v1844 = vadd.f32 %v1819, %v1836
      %v1845 = vadd.f32 %v1820, %v1837
      %v1846 = vld [vmem:[%s1 + $0x100] sm:$0xff]
      %v1847 = vsub.f32 %v686, %v1846
      %v1848 = vsub.f32 %v690, %v1846
      %v1849 = vsub.f32 %v694, %v1846
      %v1850 = vsub.f32 %v698, %v1846
      %v1851 = vsub.f32 %v702, %v1846
      %v1852 = vsub.f32 %v706, %v1846
      %v1853 = vsub.f32 %v710, %v1846
      %v1854 = vsub.f32 %v714, %v1846
      %v1855 = vand.u32 2147483647, %v1847
      %v1856 = vand.u32 2147483647, %v1848
      %v1857 = vand.u32 2147483647, %v1849
      %v1858 = vand.u32 2147483647, %v1850
      %v1859 = vand.u32 2147483647, %v1851
      %v1860 = vand.u32 2147483647, %v1852
      %v1861 = vand.u32 2147483647, %v1853
      %v1862 = vand.u32 2147483647, %v1854
      %v1863 = vadd.f32 %v1838, %v1855
      %v1864 = vadd.f32 %v1839, %v1856
      %v1865 = vadd.f32 %v1840, %v1857
      %v1866 = vadd.f32 %v1841, %v1858
      %v1867 = vadd.f32 %v1842, %v1859
      %v1868 = vadd.f32 %v1843, %v1860
      %v1869 = vadd.f32 %v1844, %v1861
      %v1870 = vadd.f32 %v1845, %v1862
      %v1871 = vld [vmem:[%s1 + $0x108] sm:$0xff]
      %v1872 = vsub.f32 %v801, %v1871
      %v1873 = vsub.f32 %v805, %v1871
      %v1874 = vsub.f32 %v809, %v1871
      %v1875 = vsub.f32 %v813, %v1871
      %v1876 = vsub.f32 %v817, %v1871
      %v1877 = vsub.f32 %v821, %v1871
      %v1878 = vsub.f32 %v825, %v1871
      %v1879 = vsub.f32 %v829, %v1871
      %v1880 = vand.u32 2147483647, %v1872
      %v1881 = vand.u32 2147483647, %v1873
      %v1882 = vand.u32 2147483647, %v1874
      %v1883 = vand.u32 2147483647, %v1875
      %v1884 = vand.u32 2147483647, %v1876
      %v1885 = vand.u32 2147483647, %v1877
      %v1886 = vand.u32 2147483647, %v1878
      %v1887 = vand.u32 2147483647, %v1879
      %v1888 = vadd.f32 %v1863, %v1880
      %v1889 = vadd.f32 %v1864, %v1881
      %v1890 = vadd.f32 %v1865, %v1882
      %v1891 = vadd.f32 %v1866, %v1883
      %v1892 = vadd.f32 %v1867, %v1884
      %v1893 = vadd.f32 %v1868, %v1885
      %v1894 = vadd.f32 %v1869, %v1886
      %v1895 = vadd.f32 %v1870, %v1887
      %v1896 = vld [vmem:[%s1 + $0x110] sm:$0xff]
      %v1897 = vsub.f32 %v916, %v1896
      %v1898 = vsub.f32 %v920, %v1896
      %v1899 = vsub.f32 %v924, %v1896
      %v1900 = vsub.f32 %v928, %v1896
      %v1901 = vsub.f32 %v932, %v1896
      %v1902 = vsub.f32 %v936, %v1896
      %v1903 = vsub.f32 %v940, %v1896
      %v1904 = vsub.f32 %v944, %v1896
      %v1905 = vand.u32 2147483647, %v1897
      %v1906 = vand.u32 2147483647, %v1898
      %v1907 = vand.u32 2147483647, %v1899
      %v1908 = vand.u32 2147483647, %v1900
      %v1909 = vand.u32 2147483647, %v1901
      %v1910 = vand.u32 2147483647, %v1902
      %v1911 = vand.u32 2147483647, %v1903
      %v1912 = vand.u32 2147483647, %v1904
      %v1913 = vadd.f32 %v1888, %v1905
      %v1914 = vadd.f32 %v1889, %v1906
      %v1915 = vadd.f32 %v1890, %v1907
      %v1916 = vadd.f32 %v1891, %v1908
      %v1917 = vadd.f32 %v1892, %v1909
      %v1918 = vadd.f32 %v1893, %v1910
      %v1919 = vadd.f32 %v1894, %v1911
      %v1920 = vadd.f32 %v1895, %v1912
      %1921 = vadd.xlane.f32.xlu0 %v1913
      %v1922 = vpop.xlane.xlu0 %1921
      %1923 = vadd.xlane.f32.xlu0 %v1914
      %v1924 = vpop.xlane.xlu0 %1923
      %1925 = vadd.xlane.f32.xlu0 %v1915
      %v1926 = vpop.xlane.xlu0 %1925
      %1927 = vadd.xlane.f32.xlu0 %v1916
      %v1928 = vpop.xlane.xlu0 %1927
      %1929 = vadd.xlane.f32.xlu0 %v1917
      %v1930 = vpop.xlane.xlu0 %1929
      %1931 = vadd.xlane.f32.xlu0 %v1918
      %v1932 = vpop.xlane.xlu0 %1931
      %1933 = vadd.xlane.f32.xlu0 %v1919
      %v1934 = vpop.xlane.xlu0 %1933
      %1935 = vadd.xlane.f32.xlu0 %v1920
      %v1936 = vpop.xlane.xlu0 %1935
      %v1945 = vadd.s32 %v1002, 4294967264
      %v1946 = vlaneseq
      %v1947 = vshrl.u32 %v1946, 7
      %v1948 = vsub.s32 %v1945, %v1947
      %v1949 = vrot.slane %v1922, %v1948
      %v1950 = vlaneseq
      %v1951 = vshrl.u32 %v1950, 7
      %v1952 = vsub.s32 %v1945, %v1951
      %v1953 = vrot.slane %v1924, %v1952
      %v1954 = vlaneseq
      %v1955 = vshrl.u32 %v1954, 7
      %v1956 = vsub.s32 %v1945, %v1955
      %v1957 = vrot.slane %v1926, %v1956
      %v1958 = vlaneseq
      %v1959 = vshrl.u32 %v1958, 7
      %v1960 = vsub.s32 %v1945, %v1959
      %v1961 = vrot.slane %v1928, %v1960
      %v1962 = vlaneseq
      %v1963 = vshrl.u32 %v1962, 7
      %v1964 = vsub.s32 %v1945, %v1963
      %v1965 = vrot.slane %v1930, %v1964
      %v1966 = vlaneseq
      %v1967 = vshrl.u32 %v1966, 7
      %v1968 = vsub.s32 %v1945, %v1967
      %v1969 = vrot.slane %v1932, %v1968
      %v1970 = vlaneseq
      %v1971 = vshrl.u32 %v1970, 7
      %v1972 = vsub.s32 %v1945, %v1971
      %v1973 = vrot.slane %v1934, %v1972
      %v1974 = vlaneseq
      %v1975 = vshrl.u32 %v1974, 7
      %v1976 = vsub.s32 %v1945, %v1975
      %v1977 = vrot.slane %v1936, %v1976
      %v1978 = vsel %vm1035, %v1953, %v1949
      %v1979 = vsel %vm1037, %v1957, %v1978
      %v1980 = vsel %vm1039, %v1961, %v1979
      %v1981 = vsel %vm1041, %v1965, %v1980
      %v1982 = vsel %vm1043, %v1969, %v1981
      %v1983 = vsel %vm1045, %v1973, %v1982
      %v1984 = vsel %vm1047, %v1977, %v1983
      %vm1986 = vcmask 326912
      %1987 = vst.msk [vmem:[#allocation2] sm:$0xff] %vm1986, %v1984
      %v1988 = vld [vmem:[%s1 + $0x118] sm:$0xff]
      %v1989 = vsub.f32 %v234, %v1988
      %v1990 = vsub.f32 %v238, %v1988
      %v1991 = vsub.f32 %v242, %v1988
      %v1992 = vsub.f32 %v246, %v1988
      %v1993 = vsub.f32 %v250, %v1988
      %v1994 = vsub.f32 %v254, %v1988
      %v1995 = vsub.f32 %v258, %v1988
      %v1996 = vsub.f32 %v262, %v1988
      %v1997 = vand.u32 2147483647, %v1989
      %v1998 = vand.u32 2147483647, %v1990
      %v1999 = vand.u32 2147483647, %v1991
      %v2000 = vand.u32 2147483647, %v1992
      %v2001 = vand.u32 2147483647, %v1993
      %v2002 = vand.u32 2147483647, %v1994
      %v2003 = vand.u32 2147483647, %v1995
      %v2004 = vand.u32 2147483647, %v1996
      %v2005 = vld [vmem:[%s1 + $0x120] sm:$0xff]
      %v2006 = vsub.f32 %v341, %v2005
      %v2007 = vsub.f32 %v345, %v2005
      %v2008 = vsub.f32 %v349, %v2005
      %v2009 = vsub.f32 %v353, %v2005
      %v2010 = vsub.f32 %v357, %v2005
      %v2011 = vsub.f32 %v361, %v2005
      %v2012 = vsub.f32 %v365, %v2005
      %v2013 = vsub.f32 %v369, %v2005
      %v2014 = vand.u32 2147483647, %v2006
      %v2015 = vand.u32 2147483647, %v2007
      %v2016 = vand.u32 2147483647, %v2008
      %v2017 = vand.u32 2147483647, %v2009
      %v2018 = vand.u32 2147483647, %v2010
      %v2019 = vand.u32 2147483647, %v2011
      %v2020 = vand.u32 2147483647, %v2012
      %v2021 = vand.u32 2147483647, %v2013
      %v2022 = vadd.f32 %v1997, %v2014
      %v2023 = vadd.f32 %v1998, %v2015
      %v2024 = vadd.f32 %v1999, %v2016
      %v2025 = vadd.f32 %v2000, %v2017
      %v2026 = vadd.f32 %v2001, %v2018
      %v2027 = vadd.f32 %v2002, %v2019
      %v2028 = vadd.f32 %v2003, %v2020
      %v2029 = vadd.f32 %v2004, %v2021
      %v2030 = vld [vmem:[%s1 + $0x128] sm:$0xff]
      %v2031 = vsub.f32 %v456, %v2030
      %v2032 = vsub.f32 %v460, %v2030
      %v2033 = vsub.f32 %v464, %v2030
      %v2034 = vsub.f32 %v468, %v2030
      %v2035 = vsub.f32 %v472, %v2030
      %v2036 = vsub.f32 %v476, %v2030
      %v2037 = vsub.f32 %v480, %v2030
      %v2038 = vsub.f32 %v484, %v2030
      %v2039 = vand.u32 2147483647, %v2031
      %v2040 = vand.u32 2147483647, %v2032
      %v2041 = vand.u32 2147483647, %v2033
      %v2042 = vand.u32 2147483647, %v2034
      %v2043 = vand.u32 2147483647, %v2035
      %v2044 = vand.u32 2147483647, %v2036
      %v2045 = vand.u32 2147483647, %v2037
      %v2046 = vand.u32 2147483647, %v2038
      %v2047 = vadd.f32 %v2022, %v2039
      %v2048 = vadd.f32 %v2023, %v2040
      %v2049 = vadd.f32 %v2024, %v2041
      %v2050 = vadd.f32 %v2025, %v2042
      %v2051 = vadd.f32 %v2026, %v2043
      %v2052 = vadd.f32 %v2027, %v2044
      %v2053 = vadd.f32 %v2028, %v2045
      %v2054 = vadd.f32 %v2029, %v2046
      %v2055 = vld [vmem:[%s1 + $0x130] sm:$0xff]
      %v2056 = vsub.f32 %v571, %v2055
      %v2057 = vsub.f32 %v575, %v2055
      %v2058 = vsub.f32 %v579, %v2055
      %v2059 = vsub.f32 %v583, %v2055
      %v2060 = vsub.f32 %v587, %v2055
      %v2061 = vsub.f32 %v591, %v2055
      %v2062 = vsub.f32 %v595, %v2055
      %v2063 = vsub.f32 %v599, %v2055
      %v2064 = vand.u32 2147483647, %v2056
      %v2065 = vand.u32 2147483647, %v2057
      %v2066 = vand.u32 2147483647, %v2058
      %v2067 = vand.u32 2147483647, %v2059
      %v2068 = vand.u32 2147483647, %v2060
      %v2069 = vand.u32 2147483647, %v2061
      %v2070 = vand.u32 2147483647, %v2062
      %v2071 = vand.u32 2147483647, %v2063
      %v2072 = vadd.f32 %v2047, %v2064
      %v2073 = vadd.f32 %v2048, %v2065
      %v2074 = vadd.f32 %v2049, %v2066
      %v2075 = vadd.f32 %v2050, %v2067
      %v2076 = vadd.f32 %v2051, %v2068
      %v2077 = vadd.f32 %v2052, %v2069
      %v2078 = vadd.f32 %v2053, %v2070
      %v2079 = vadd.f32 %v2054, %v2071
      %v2080 = vld [vmem:[%s1 + $0x138] sm:$0xff]
      %v2081 = vsub.f32 %v686, %v2080
      %v2082 = vsub.f32 %v690, %v2080
      %v2083 = vsub.f32 %v694, %v2080
      %v2084 = vsub.f32 %v698, %v2080
      %v2085 = vsub.f32 %v702, %v2080
      %v2086 = vsub.f32 %v706, %v2080
      %v2087 = vsub.f32 %v710, %v2080
      %v2088 = vsub.f32 %v714, %v2080
      %v2089 = vand.u32 2147483647, %v2081
      %v2090 = vand.u32 2147483647, %v2082
      %v2091 = vand.u32 2147483647, %v2083
      %v2092 = vand.u32 2147483647, %v2084
      %v2093 = vand.u32 2147483647, %v2085
      %v2094 = vand.u32 2147483647, %v2086
      %v2095 = vand.u32 2147483647, %v2087
      %v2096 = vand.u32 2147483647, %v2088
      %v2097 = vadd.f32 %v2072, %v2089
      %v2098 = vadd.f32 %v2073, %v2090
      %v2099 = vadd.f32 %v2074, %v2091
      %v2100 = vadd.f32 %v2075, %v2092
      %v2101 = vadd.f32 %v2076, %v2093
      %v2102 = vadd.f32 %v2077, %v2094
      %v2103 = vadd.f32 %v2078, %v2095
      %v2104 = vadd.f32 %v2079, %v2096
      %v2105 = vld [vmem:[%s1 + $0x140] sm:$0xff]
      %v2106 = vsub.f32 %v801, %v2105
      %v2107 = vsub.f32 %v805, %v2105
      %v2108 = vsub.f32 %v809, %v2105
      %v2109 = vsub.f32 %v813, %v2105
      %v2110 = vsub.f32 %v817, %v2105
      %v2111 = vsub.f32 %v821, %v2105
      %v2112 = vsub.f32 %v825, %v2105
      %v2113 = vsub.f32 %v829, %v2105
      %v2114 = vand.u32 2147483647, %v2106
      %v2115 = vand.u32 2147483647, %v2107
      %v2116 = vand.u32 2147483647, %v2108
      %v2117 = vand.u32 2147483647, %v2109
      %v2118 = vand.u32 2147483647, %v2110
      %v2119 = vand.u32 2147483647, %v2111
      %v2120 = vand.u32 2147483647, %v2112
      %v2121 = vand.u32 2147483647, %v2113
      %v2122 = vadd.f32 %v2097, %v2114
      %v2123 = vadd.f32 %v2098, %v2115
      %v2124 = vadd.f32 %v2099, %v2116
      %v2125 = vadd.f32 %v2100, %v2117
      %v2126 = vadd.f32 %v2101, %v2118
      %v2127 = vadd.f32 %v2102, %v2119
      %v2128 = vadd.f32 %v2103, %v2120
      %v2129 = vadd.f32 %v2104, %v2121
      %v2130 = vld [vmem:[%s1 + $0x148] sm:$0xff]
      %v2131 = vsub.f32 %v916, %v2130
      %v2132 = vsub.f32 %v920, %v2130
      %v2133 = vsub.f32 %v924, %v2130
      %v2134 = vsub.f32 %v928, %v2130
      %v2135 = vsub.f32 %v932, %v2130
      %v2136 = vsub.f32 %v936, %v2130
      %v2137 = vsub.f32 %v940, %v2130
      %v2138 = vsub.f32 %v944, %v2130
      %v2139 = vand.u32 2147483647, %v2131
      %v2140 = vand.u32 2147483647, %v2132
      %v2141 = vand.u32 2147483647, %v2133
      %v2142 = vand.u32 2147483647, %v2134
      %v2143 = vand.u32 2147483647, %v2135
      %v2144 = vand.u32 2147483647, %v2136
      %v2145 = vand.u32 2147483647, %v2137
      %v2146 = vand.u32 2147483647, %v2138
      %v2147 = vadd.f32 %v2122, %v2139
      %v2148 = vadd.f32 %v2123, %v2140
      %v2149 = vadd.f32 %v2124, %v2141
      %v2150 = vadd.f32 %v2125, %v2142
      %v2151 = vadd.f32 %v2126, %v2143
      %v2152 = vadd.f32 %v2127, %v2144
      %v2153 = vadd.f32 %v2128, %v2145
      %v2154 = vadd.f32 %v2129, %v2146
      %2155 = vadd.xlane.f32.xlu0 %v2147
      %v2156 = vpop.xlane.xlu0 %2155
      %2157 = vadd.xlane.f32.xlu0 %v2148
      %v2158 = vpop.xlane.xlu0 %2157
      %2159 = vadd.xlane.f32.xlu0 %v2149
      %v2160 = vpop.xlane.xlu0 %2159
      %2161 = vadd.xlane.f32.xlu0 %v2150
      %v2162 = vpop.xlane.xlu0 %2161
      %2163 = vadd.xlane.f32.xlu0 %v2151
      %v2164 = vpop.xlane.xlu0 %2163
      %2165 = vadd.xlane.f32.xlu0 %v2152
      %v2166 = vpop.xlane.xlu0 %2165
      %2167 = vadd.xlane.f32.xlu0 %v2153
      %v2168 = vpop.xlane.xlu0 %2167
      %2169 = vadd.xlane.f32.xlu0 %v2154
      %v2170 = vpop.xlane.xlu0 %2169
      %v2179 = vadd.s32 %v1002, 4294967256
      %v2180 = vlaneseq
      %v2181 = vshrl.u32 %v2180, 7
      %v2182 = vsub.s32 %v2179, %v2181
      %v2183 = vrot.slane %v2156, %v2182
      %v2184 = vlaneseq
      %v2185 = vshrl.u32 %v2184, 7
      %v2186 = vsub.s32 %v2179, %v2185
      %v2187 = vrot.slane %v2158, %v2186
      %v2188 = vlaneseq
      %v2189 = vshrl.u32 %v2188, 7
      %v2190 = vsub.s32 %v2179, %v2189
      %v2191 = vrot.slane %v2160, %v2190
      %v2192 = vlaneseq
      %v2193 = vshrl.u32 %v2192, 7
      %v2194 = vsub.s32 %v2179, %v2193
      %v2195 = vrot.slane %v2162, %v2194
      %v2196 = vlaneseq
      %v2197 = vshrl.u32 %v2196, 7
      %v2198 = vsub.s32 %v2179, %v2197
      %v2199 = vrot.slane %v2164, %v2198
      %v2200 = vlaneseq
      %v2201 = vshrl.u32 %v2200, 7
      %v2202 = vsub.s32 %v2179, %v2201
      %v2203 = vrot.slane %v2166, %v2202
      %v2204 = vlaneseq
      %v2205 = vshrl.u32 %v2204, 7
      %v2206 = vsub.s32 %v2179, %v2205
      %v2207 = vrot.slane %v2168, %v2206
      %v2208 = vlaneseq
      %v2209 = vshrl.u32 %v2208, 7
      %v2210 = vsub.s32 %v2179, %v2209
      %v2211 = vrot.slane %v2170, %v2210
      %v2212 = vsel %vm1035, %v2187, %v2183
      %v2213 = vsel %vm1037, %v2191, %v2212
      %v2214 = vsel %vm1039, %v2195, %v2213
      %v2215 = vsel %vm1041, %v2199, %v2214
      %v2216 = vsel %vm1043, %v2203, %v2215
      %v2217 = vsel %vm1045, %v2207, %v2216
      %v2218 = vsel %vm1047, %v2211, %v2217
      %vm2220 = vcmask 392512
      %2221 = vst.msk [vmem:[#allocation2] sm:$0xff] %vm2220, %v2218
      %v2222 = vld [vmem:[%s1 + $0x150] sm:$0xff]
      %v2223 = vsub.f32 %v234, %v2222
      %v2224 = vsub.f32 %v238, %v2222
      %v2225 = vsub.f32 %v242, %v2222
      %v2226 = vsub.f32 %v246, %v2222
      %v2227 = vsub.f32 %v250, %v2222
      %v2228 = vsub.f32 %v254, %v2222
      %v2229 = vsub.f32 %v258, %v2222
      %v2230 = vsub.f32 %v262, %v2222
      %v2231 = vand.u32 2147483647, %v2223
      %v2232 = vand.u32 2147483647, %v2224
      %v2233 = vand.u32 2147483647, %v2225
      %v2234 = vand.u32 2147483647, %v2226
      %v2235 = vand.u32 2147483647, %v2227
      %v2236 = vand.u32 2147483647, %v2228
      %v2237 = vand.u32 2147483647, %v2229
      %v2238 = vand.u32 2147483647, %v2230
      %v2239 = vld [vmem:[%s1 + $0x158] sm:$0xff]
      %v2240 = vsub.f32 %v341, %v2239
      %v2241 = vsub.f32 %v345, %v2239
      %v2242 = vsub.f32 %v349, %v2239
      %v2243 = vsub.f32 %v353, %v2239
      %v2244 = vsub.f32 %v357, %v2239
      %v2245 = vsub.f32 %v361, %v2239
      %v2246 = vsub.f32 %v365, %v2239
      %v2247 = vsub.f32 %v369, %v2239
      %v2248 = vand.u32 2147483647, %v2240
      %v2249 = vand.u32 2147483647, %v2241
      %v2250 = vand.u32 2147483647, %v2242
      %v2251 = vand.u32 2147483647, %v2243
      %v2252 = vand.u32 2147483647, %v2244
      %v2253 = vand.u32 2147483647, %v2245
      %v2254 = vand.u32 2147483647, %v2246
      %v2255 = vand.u32 2147483647, %v2247
      %v2256 = vadd.f32 %v2231, %v2248
      %v2257 = vadd.f32 %v2232, %v2249
      %v2258 = vadd.f32 %v2233, %v2250
      %v2259 = vadd.f32 %v2234, %v2251
      %v2260 = vadd.f32 %v2235, %v2252
      %v2261 = vadd.f32 %v2236, %v2253
      %v2262 = vadd.f32 %v2237, %v2254
      %v2263 = vadd.f32 %v2238, %v2255
      %v2264 = vld [vmem:[%s1 + $0x160] sm:$0xff]
      %v2265 = vsub.f32 %v456, %v2264
      %v2266 = vsub.f32 %v460, %v2264
      %v2267 = vsub.f32 %v464, %v2264
      %v2268 = vsub.f32 %v468, %v2264
      %v2269 = vsub.f32 %v472, %v2264
      %v2270 = vsub.f32 %v476, %v2264
      %v2271 = vsub.f32 %v480, %v2264
      %v2272 = vsub.f32 %v484, %v2264
      %v2273 = vand.u32 2147483647, %v2265
      %v2274 = vand.u32 2147483647, %v2266
      %v2275 = vand.u32 2147483647, %v2267
      %v2276 = vand.u32 2147483647, %v2268
      %v2277 = vand.u32 2147483647, %v2269
      %v2278 = vand.u32 2147483647, %v2270
      %v2279 = vand.u32 2147483647, %v2271
      %v2280 = vand.u32 2147483647, %v2272
      %v2281 = vadd.f32 %v2256, %v2273
      %v2282 = vadd.f32 %v2257, %v2274
      %v2283 = vadd.f32 %v2258, %v2275
      %v2284 = vadd.f32 %v2259, %v2276
      %v2285 = vadd.f32 %v2260, %v2277
      %v2286 = vadd.f32 %v2261, %v2278
      %v2287 = vadd.f32 %v2262, %v2279
      %v2288 = vadd.f32 %v2263, %v2280
      %v2289 = vld [vmem:[%s1 + $0x168] sm:$0xff]
      %v2290 = vsub.f32 %v571, %v2289
      %v2291 = vsub.f32 %v575, %v2289
      %v2292 = vsub.f32 %v579, %v2289
      %v2293 = vsub.f32 %v583, %v2289
      %v2294 = vsub.f32 %v587, %v2289
      %v2295 = vsub.f32 %v591, %v2289
      %v2296 = vsub.f32 %v595, %v2289
      %v2297 = vsub.f32 %v599, %v2289
      %v2298 = vand.u32 2147483647, %v2290
      %v2299 = vand.u32 2147483647, %v2291
      %v2300 = vand.u32 2147483647, %v2292
      %v2301 = vand.u32 2147483647, %v2293
      %v2302 = vand.u32 2147483647, %v2294
      %v2303 = vand.u32 2147483647, %v2295
      %v2304 = vand.u32 2147483647, %v2296
      %v2305 = vand.u32 2147483647, %v2297
      %v2306 = vadd.f32 %v2281, %v2298
      %v2307 = vadd.f32 %v2282, %v2299
      %v2308 = vadd.f32 %v2283, %v2300
      %v2309 = vadd.f32 %v2284, %v2301
      %v2310 = vadd.f32 %v2285, %v2302
      %v2311 = vadd.f32 %v2286, %v2303
      %v2312 = vadd.f32 %v2287, %v2304
      %v2313 = vadd.f32 %v2288, %v2305
      %v2314 = vld [vmem:[%s1 + $0x170] sm:$0xff]
      %v2315 = vsub.f32 %v686, %v2314
      %v2316 = vsub.f32 %v690, %v2314
      %v2317 = vsub.f32 %v694, %v2314
      %v2318 = vsub.f32 %v698, %v2314
      %v2319 = vsub.f32 %v702, %v2314
      %v2320 = vsub.f32 %v706, %v2314
      %v2321 = vsub.f32 %v710, %v2314
      %v2322 = vsub.f32 %v714, %v2314
      %v2323 = vand.u32 2147483647, %v2315
      %v2324 = vand.u32 2147483647, %v2316
      %v2325 = vand.u32 2147483647, %v2317
      %v2326 = vand.u32 2147483647, %v2318
      %v2327 = vand.u32 2147483647, %v2319
      %v2328 = vand.u32 2147483647, %v2320
      %v2329 = vand.u32 2147483647, %v2321
      %v2330 = vand.u32 2147483647, %v2322
      %v2331 = vadd.f32 %v2306, %v2323
      %v2332 = vadd.f32 %v2307, %v2324
      %v2333 = vadd.f32 %v2308, %v2325
      %v2334 = vadd.f32 %v2309, %v2326
      %v2335 = vadd.f32 %v2310, %v2327
      %v2336 = vadd.f32 %v2311, %v2328
      %v2337 = vadd.f32 %v2312, %v2329
      %v2338 = vadd.f32 %v2313, %v2330
      %v2339 = vld [vmem:[%s1 + $0x178] sm:$0xff]
      %v2340 = vsub.f32 %v801, %v2339
      %v2341 = vsub.f32 %v805, %v2339
      %v2342 = vsub.f32 %v809, %v2339
      %v2343 = vsub.f32 %v813, %v2339
      %v2344 = vsub.f32 %v817, %v2339
      %v2345 = vsub.f32 %v821, %v2339
      %v2346 = vsub.f32 %v825, %v2339
      %v2347 = vsub.f32 %v829, %v2339
      %v2348 = vand.u32 2147483647, %v2340
      %v2349 = vand.u32 2147483647, %v2341
      %v2350 = vand.u32 2147483647, %v2342
      %v2351 = vand.u32 2147483647, %v2343
      %v2352 = vand.u32 2147483647, %v2344
      %v2353 = vand.u32 2147483647, %v2345
      %v2354 = vand.u32 2147483647, %v2346
      %v2355 = vand.u32 2147483647, %v2347
      %v2356 = vadd.f32 %v2331, %v2348
      %v2357 = vadd.f32 %v2332, %v2349
      %v2358 = vadd.f32 %v2333, %v2350
      %v2359 = vadd.f32 %v2334, %v2351
      %v2360 = vadd.f32 %v2335, %v2352
      %v2361 = vadd.f32 %v2336, %v2353
      %v2362 = vadd.f32 %v2337, %v2354
      %v2363 = vadd.f32 %v2338, %v2355
      %v2364 = vld [vmem:[%s1 + $0x180] sm:$0xff]
      %v2365 = vsub.f32 %v916, %v2364
      %v2366 = vsub.f32 %v920, %v2364
      %v2367 = vsub.f32 %v924, %v2364
      %v2368 = vsub.f32 %v928, %v2364
      %v2369 = vsub.f32 %v932, %v2364
      %v2370 = vsub.f32 %v936, %v2364
      %v2371 = vsub.f32 %v940, %v2364
      %v2372 = vsub.f32 %v944, %v2364
      %v2373 = vand.u32 2147483647, %v2365
      %v2374 = vand.u32 2147483647, %v2366
      %v2375 = vand.u32 2147483647, %v2367
      %v2376 = vand.u32 2147483647, %v2368
      %v2377 = vand.u32 2147483647, %v2369
      %v2378 = vand.u32 2147483647, %v2370
      %v2379 = vand.u32 2147483647, %v2371
      %v2380 = vand.u32 2147483647, %v2372
      %v2381 = vadd.f32 %v2356, %v2373
      %v2382 = vadd.f32 %v2357, %v2374
      %v2383 = vadd.f32 %v2358, %v2375
      %v2384 = vadd.f32 %v2359, %v2376
      %v2385 = vadd.f32 %v2360, %v2377
      %v2386 = vadd.f32 %v2361, %v2378
      %v2387 = vadd.f32 %v2362, %v2379
      %v2388 = vadd.f32 %v2363, %v2380
      %2389 = vadd.xlane.f32.xlu0 %v2381
      %v2390 = vpop.xlane.xlu0 %2389
      %2391 = vadd.xlane.f32.xlu0 %v2382
      %v2392 = vpop.xlane.xlu0 %2391
      %2393 = vadd.xlane.f32.xlu0 %v2383
      %v2394 = vpop.xlane.xlu0 %2393
      %2395 = vadd.xlane.f32.xlu0 %v2384
      %v2396 = vpop.xlane.xlu0 %2395
      %2397 = vadd.xlane.f32.xlu0 %v2385
      %v2398 = vpop.xlane.xlu0 %2397
      %2399 = vadd.xlane.f32.xlu0 %v2386
      %v2400 = vpop.xlane.xlu0 %2399
      %2401 = vadd.xlane.f32.xlu0 %v2387
      %v2402 = vpop.xlane.xlu0 %2401
      %2403 = vadd.xlane.f32.xlu0 %v2388
      %v2404 = vpop.xlane.xlu0 %2403
      %v2413 = vadd.s32 %v1002, 4294967248
      %v2414 = vlaneseq
      %v2415 = vshrl.u32 %v2414, 7
      %v2416 = vsub.s32 %v2413, %v2415
      %v2417 = vrot.slane %v2390, %v2416
      %v2418 = vlaneseq
      %v2419 = vshrl.u32 %v2418, 7
      %v2420 = vsub.s32 %v2413, %v2419
      %v2421 = vrot.slane %v2392, %v2420
      %v2422 = vlaneseq
      %v2423 = vshrl.u32 %v2422, 7
      %v2424 = vsub.s32 %v2413, %v2423
      %v2425 = vrot.slane %v2394, %v2424
      %v2426 = vlaneseq
      %v2427 = vshrl.u32 %v2426, 7
      %v2428 = vsub.s32 %v2413, %v2427
      %v2429 = vrot.slane %v2396, %v2428
      %v2430 = vlaneseq
      %v2431 = vshrl.u32 %v2430, 7
      %v2432 = vsub.s32 %v2413, %v2431
      %v2433 = vrot.slane %v2398, %v2432
      %v2434 = vlaneseq
      %v2435 = vshrl.u32 %v2434, 7
      %v2436 = vsub.s32 %v2413, %v2435
      %v2437 = vrot.slane %v2400, %v2436
      %v2438 = vlaneseq
      %v2439 = vshrl.u32 %v2438, 7
      %v2440 = vsub.s32 %v2413, %v2439
      %v2441 = vrot.slane %v2402, %v2440
      %v2442 = vlaneseq
      %v2443 = vshrl.u32 %v2442, 7
      %v2444 = vsub.s32 %v2413, %v2443
      %v2445 = vrot.slane %v2404, %v2444
      %v2446 = vsel %vm1035, %v2421, %v2417
      %v2447 = vsel %vm1037, %v2425, %v2446
      %v2448 = vsel %vm1039, %v2429, %v2447
      %v2449 = vsel %vm1041, %v2433, %v2448
      %v2450 = vsel %vm1043, %v2437, %v2449
      %v2451 = vsel %vm1045, %v2441, %v2450
      %v2452 = vsel %vm1047, %v2445, %v2451
      %vm2454 = vcmask 458112
      %2455 = vst.msk [vmem:[#allocation2] sm:$0xff] %vm2454, %v2452
      %v2456 = vld [vmem:[%s1 + $0x188] sm:$0xff]
      %v2457 = vsub.f32 %v234, %v2456
      %v2458 = vsub.f32 %v238, %v2456
      %v2459 = vsub.f32 %v242, %v2456
      %v2460 = vsub.f32 %v246, %v2456
      %v2461 = vsub.f32 %v250, %v2456
      %v2462 = vsub.f32 %v254, %v2456
      %v2463 = vsub.f32 %v258, %v2456
      %v2464 = vsub.f32 %v262, %v2456
      %v2465 = vand.u32 2147483647, %v2457
      %v2466 = vand.u32 2147483647, %v2458
      %v2467 = vand.u32 2147483647, %v2459
      %v2468 = vand.u32 2147483647, %v2460
      %v2469 = vand.u32 2147483647, %v2461
      %v2470 = vand.u32 2147483647, %v2462
      %v2471 = vand.u32 2147483647, %v2463
      %v2472 = vand.u32 2147483647, %v2464
      %v2473 = vld [vmem:[%s1 + $0x190] sm:$0xff]
      %v2474 = vsub.f32 %v341, %v2473
      %v2475 = vsub.f32 %v345, %v2473
      %v2476 = vsub.f32 %v349, %v2473
      %v2477 = vsub.f32 %v353, %v2473
      %v2478 = vsub.f32 %v357, %v2473
      %v2479 = vsub.f32 %v361, %v2473
      %v2480 = vsub.f32 %v365, %v2473
      %v2481 = vsub.f32 %v369, %v2473
      %v2482 = vand.u32 2147483647, %v2474
      %v2483 = vand.u32 2147483647, %v2475
      %v2484 = vand.u32 2147483647, %v2476
      %v2485 = vand.u32 2147483647, %v2477
      %v2486 = vand.u32 2147483647, %v2478
      %v2487 = vand.u32 2147483647, %v2479
      %v2488 = vand.u32 2147483647, %v2480
      %v2489 = vand.u32 2147483647, %v2481
      %v2490 = vadd.f32 %v2465, %v2482
      %v2491 = vadd.f32 %v2466, %v2483
      %v2492 = vadd.f32 %v2467, %v2484
      %v2493 = vadd.f32 %v2468, %v2485
      %v2494 = vadd.f32 %v2469, %v2486
      %v2495 = vadd.f32 %v2470, %v2487
      %v2496 = vadd.f32 %v2471, %v2488
      %v2497 = vadd.f32 %v2472, %v2489
      %v2498 = vld [vmem:[%s1 + $0x198] sm:$0xff]
      %v2499 = vsub.f32 %v456, %v2498
      %v2500 = vsub.f32 %v460, %v2498
      %v2501 = vsub.f32 %v464, %v2498
      %v2502 = vsub.f32 %v468, %v2498
      %v2503 = vsub.f32 %v472, %v2498
      %v2504 = vsub.f32 %v476, %v2498
      %v2505 = vsub.f32 %v480, %v2498
      %v2506 = vsub.f32 %v484, %v2498
      %v2507 = vand.u32 2147483647, %v2499
      %v2508 = vand.u32 2147483647, %v2500
      %v2509 = vand.u32 2147483647, %v2501
      %v2510 = vand.u32 2147483647, %v2502
      %v2511 = vand.u32 2147483647, %v2503
      %v2512 = vand.u32 2147483647, %v2504
      %v2513 = vand.u32 2147483647, %v2505
      %v2514 = vand.u32 2147483647, %v2506
      %v2515 = vadd.f32 %v2490, %v2507
      %v2516 = vadd.f32 %v2491, %v2508
      %v2517 = vadd.f32 %v2492, %v2509
      %v2518 = vadd.f32 %v2493, %v2510
      %v2519 = vadd.f32 %v2494, %v2511
      %v2520 = vadd.f32 %v2495, %v2512
      %v2521 = vadd.f32 %v2496, %v2513
      %v2522 = vadd.f32 %v2497, %v2514
      %v2523 = vld [vmem:[%s1 + $0x1a0] sm:$0xff]
      %v2524 = vsub.f32 %v571, %v2523
      %v2525 = vsub.f32 %v575, %v2523
      %v2526 = vsub.f32 %v579, %v2523
      %v2527 = vsub.f32 %v583, %v2523
      %v2528 = vsub.f32 %v587, %v2523
      %v2529 = vsub.f32 %v591, %v2523
      %v2530 = vsub.f32 %v595, %v2523
      %v2531 = vsub.f32 %v599, %v2523
      %v2532 = vand.u32 2147483647, %v2524
      %v2533 = vand.u32 2147483647, %v2525
      %v2534 = vand.u32 2147483647, %v2526
      %v2535 = vand.u32 2147483647, %v2527
      %v2536 = vand.u32 2147483647, %v2528
      %v2537 = vand.u32 2147483647, %v2529
      %v2538 = vand.u32 2147483647, %v2530
      %v2539 = vand.u32 2147483647, %v2531
      %v2540 = vadd.f32 %v2515, %v2532
      %v2541 = vadd.f32 %v2516, %v2533
      %v2542 = vadd.f32 %v2517, %v2534
      %v2543 = vadd.f32 %v2518, %v2535
      %v2544 = vadd.f32 %v2519, %v2536
      %v2545 = vadd.f32 %v2520, %v2537
      %v2546 = vadd.f32 %v2521, %v2538
      %v2547 = vadd.f32 %v2522, %v2539
      %v2548 = vld [vmem:[%s1 + $0x1a8] sm:$0xff]
      %v2549 = vsub.f32 %v686, %v2548
      %v2550 = vsub.f32 %v690, %v2548
      %v2551 = vsub.f32 %v694, %v2548
      %v2552 = vsub.f32 %v698, %v2548
      %v2553 = vsub.f32 %v702, %v2548
      %v2554 = vsub.f32 %v706, %v2548
      %v2555 = vsub.f32 %v710, %v2548
      %v2556 = vsub.f32 %v714, %v2548
      %v2557 = vand.u32 2147483647, %v2549
      %v2558 = vand.u32 2147483647, %v2550
      %v2559 = vand.u32 2147483647, %v2551
      %v2560 = vand.u32 2147483647, %v2552
      %v2561 = vand.u32 2147483647, %v2553
      %v2562 = vand.u32 2147483647, %v2554
      %v2563 = vand.u32 2147483647, %v2555
      %v2564 = vand.u32 2147483647, %v2556
      %v2565 = vadd.f32 %v2540, %v2557
      %v2566 = vadd.f32 %v2541, %v2558
      %v2567 = vadd.f32 %v2542, %v2559
      %v2568 = vadd.f32 %v2543, %v2560
      %v2569 = vadd.f32 %v2544, %v2561
      %v2570 = vadd.f32 %v2545, %v2562
      %v2571 = vadd.f32 %v2546, %v2563
      %v2572 = vadd.f32 %v2547, %v2564
      %v2573 = vld [vmem:[%s1 + $0x1b0] sm:$0xff]
      %v2574 = vsub.f32 %v801, %v2573
      %v2575 = vsub.f32 %v805, %v2573
      %v2576 = vsub.f32 %v809, %v2573
      %v2577 = vsub.f32 %v813, %v2573
      %v2578 = vsub.f32 %v817, %v2573
      %v2579 = vsub.f32 %v821, %v2573
      %v2580 = vsub.f32 %v825, %v2573
      %v2581 = vsub.f32 %v829, %v2573
      %v2582 = vand.u32 2147483647, %v2574
      %v2583 = vand.u32 2147483647, %v2575
      %v2584 = vand.u32 2147483647, %v2576
      %v2585 = vand.u32 2147483647, %v2577
      %v2586 = vand.u32 2147483647, %v2578
      %v2587 = vand.u32 2147483647, %v2579
      %v2588 = vand.u32 2147483647, %v2580
      %v2589 = vand.u32 2147483647, %v2581
      %v2590 = vadd.f32 %v2565, %v2582
      %v2591 = vadd.f32 %v2566, %v2583
      %v2592 = vadd.f32 %v2567, %v2584
      %v2593 = vadd.f32 %v2568, %v2585
      %v2594 = vadd.f32 %v2569, %v2586
      %v2595 = vadd.f32 %v2570, %v2587
      %v2596 = vadd.f32 %v2571, %v2588
      %v2597 = vadd.f32 %v2572, %v2589
      %v2598 = vld [vmem:[%s1 + $0x1b8] sm:$0xff]
      %v2599 = vsub.f32 %v916, %v2598
      %v2600 = vsub.f32 %v920, %v2598
      %v2601 = vsub.f32 %v924, %v2598
      %v2602 = vsub.f32 %v928, %v2598
      %v2603 = vsub.f32 %v932, %v2598
      %v2604 = vsub.f32 %v936, %v2598
      %v2605 = vsub.f32 %v940, %v2598
      %v2606 = vsub.f32 %v944, %v2598
      %v2607 = vand.u32 2147483647, %v2599
      %v2608 = vand.u32 2147483647, %v2600
      %v2609 = vand.u32 2147483647, %v2601
      %v2610 = vand.u32 2147483647, %v2602
      %v2611 = vand.u32 2147483647, %v2603
      %v2612 = vand.u32 2147483647, %v2604
      %v2613 = vand.u32 2147483647, %v2605
      %v2614 = vand.u32 2147483647, %v2606
      %v2615 = vadd.f32 %v2590, %v2607
      %v2616 = vadd.f32 %v2591, %v2608
      %v2617 = vadd.f32 %v2592, %v2609
      %v2618 = vadd.f32 %v2593, %v2610
      %v2619 = vadd.f32 %v2594, %v2611
      %v2620 = vadd.f32 %v2595, %v2612
      %v2621 = vadd.f32 %v2596, %v2613
      %v2622 = vadd.f32 %v2597, %v2614
      %2623 = vadd.xlane.f32.xlu0 %v2615
      %v2624 = vpop.xlane.xlu0 %2623
      %2625 = vadd.xlane.f32.xlu0 %v2616
      %v2626 = vpop.xlane.xlu0 %2625
      %2627 = vadd.xlane.f32.xlu0 %v2617
      %v2628 = vpop.xlane.xlu0 %2627
      %2629 = vadd.xlane.f32.xlu0 %v2618
      %v2630 = vpop.xlane.xlu0 %2629
      %2631 = vadd.xlane.f32.xlu0 %v2619
      %v2632 = vpop.xlane.xlu0 %2631
      %2633 = vadd.xlane.f32.xlu0 %v2620
      %v2634 = vpop.xlane.xlu0 %2633
      %2635 = vadd.xlane.f32.xlu0 %v2621
      %v2636 = vpop.xlane.xlu0 %2635
      %2637 = vadd.xlane.f32.xlu0 %v2622
      %v2638 = vpop.xlane.xlu0 %2637
      %v2647 = vadd.s32 %v1002, 4294967240
      %v2648 = vlaneseq
      %v2649 = vshrl.u32 %v2648, 7
      %v2650 = vsub.s32 %v2647, %v2649
      %v2651 = vrot.slane %v2624, %v2650
      %v2652 = vlaneseq
      %v2653 = vshrl.u32 %v2652, 7
      %v2654 = vsub.s32 %v2647, %v2653
      %v2655 = vrot.slane %v2626, %v2654
      %v2656 = vlaneseq
      %v2657 = vshrl.u32 %v2656, 7
      %v2658 = vsub.s32 %v2647, %v2657
      %v2659 = vrot.slane %v2628, %v2658
      %v2660 = vlaneseq
      %v2661 = vshrl.u32 %v2660, 7
      %v2662 = vsub.s32 %v2647, %v2661
      %v2663 = vrot.slane %v2630, %v2662
      %v2664 = vlaneseq
      %v2665 = vshrl.u32 %v2664, 7
      %v2666 = vsub.s32 %v2647, %v2665
      %v2667 = vrot.slane %v2632, %v2666
      %v2668 = vlaneseq
      %v2669 = vshrl.u32 %v2668, 7
      %v2670 = vsub.s32 %v2647, %v2669
      %v2671 = vrot.slane %v2634, %v2670
      %v2672 = vlaneseq
      %v2673 = vshrl.u32 %v2672, 7
      %v2674 = vsub.s32 %v2647, %v2673
      %v2675 = vrot.slane %v2636, %v2674
      %v2676 = vlaneseq
      %v2677 = vshrl.u32 %v2676, 7
      %v2678 = vsub.s32 %v2647, %v2677
      %v2679 = vrot.slane %v2638, %v2678
      %v2680 = vsel %vm1035, %v2655, %v2651
      %v2681 = vsel %vm1037, %v2659, %v2680
      %v2682 = vsel %vm1039, %v2663, %v2681
      %v2683 = vsel %vm1041, %v2667, %v2682
      %v2684 = vsel %vm1043, %v2671, %v2683
      %v2685 = vsel %vm1045, %v2675, %v2684
      %v2686 = vsel %vm1047, %v2679, %v2685
      %vm2688 = vcmask 523712
      %2689 = vst.msk [vmem:[#allocation2] sm:$0xff] %vm2688, %v2686
      %v2690 = vld [vmem:[%s1 + $0x1c0] sm:$0xff]
      %v2691 = vsub.f32 %v234, %v2690
      %v2692 = vsub.f32 %v238, %v2690
      %v2693 = vsub.f32 %v242, %v2690
      %v2694 = vsub.f32 %v246, %v2690
      %v2695 = vsub.f32 %v250, %v2690
      %v2696 = vsub.f32 %v254, %v2690
      %v2697 = vsub.f32 %v258, %v2690
      %v2698 = vsub.f32 %v262, %v2690
      %v2699 = vand.u32 2147483647, %v2691
      %v2700 = vand.u32 2147483647, %v2692
      %v2701 = vand.u32 2147483647, %v2693
      %v2702 = vand.u32 2147483647, %v2694
      %v2703 = vand.u32 2147483647, %v2695
      %v2704 = vand.u32 2147483647, %v2696
      %v2705 = vand.u32 2147483647, %v2697
      %v2706 = vand.u32 2147483647, %v2698
      %v2707 = vld [vmem:[%s1 + $0x1c8] sm:$0xff]
      %v2708 = vsub.f32 %v341, %v2707
      %v2709 = vsub.f32 %v345, %v2707
      %v2710 = vsub.f32 %v349, %v2707
      %v2711 = vsub.f32 %v353, %v2707
      %v2712 = vsub.f32 %v357, %v2707
      %v2713 = vsub.f32 %v361, %v2707
      %v2714 = vsub.f32 %v365, %v2707
      %v2715 = vsub.f32 %v369, %v2707
      %v2716 = vand.u32 2147483647, %v2708
      %v2717 = vand.u32 2147483647, %v2709
      %v2718 = vand.u32 2147483647, %v2710
      %v2719 = vand.u32 2147483647, %v2711
      %v2720 = vand.u32 2147483647, %v2712
      %v2721 = vand.u32 2147483647, %v2713
      %v2722 = vand.u32 2147483647, %v2714
      %v2723 = vand.u32 2147483647, %v2715
      %v2724 = vadd.f32 %v2699, %v2716
      %v2725 = vadd.f32 %v2700, %v2717
      %v2726 = vadd.f32 %v2701, %v2718
      %v2727 = vadd.f32 %v2702, %v2719
      %v2728 = vadd.f32 %v2703, %v2720
      %v2729 = vadd.f32 %v2704, %v2721
      %v2730 = vadd.f32 %v2705, %v2722
      %v2731 = vadd.f32 %v2706, %v2723
      %v2732 = vld [vmem:[%s1 + $0x1d0] sm:$0xff]
      %v2733 = vsub.f32 %v456, %v2732
      %v2734 = vsub.f32 %v460, %v2732
      %v2735 = vsub.f32 %v464, %v2732
      %v2736 = vsub.f32 %v468, %v2732
      %v2737 = vsub.f32 %v472, %v2732
      %v2738 = vsub.f32 %v476, %v2732
      %v2739 = vsub.f32 %v480, %v2732
      %v2740 = vsub.f32 %v484, %v2732
      %v2741 = vand.u32 2147483647, %v2733
      %v2742 = vand.u32 2147483647, %v2734
      %v2743 = vand.u32 2147483647, %v2735
      %v2744 = vand.u32 2147483647, %v2736
      %v2745 = vand.u32 2147483647, %v2737
      %v2746 = vand.u32 2147483647, %v2738
      %v2747 = vand.u32 2147483647, %v2739
      %v2748 = vand.u32 2147483647, %v2740
      %v2749 = vadd.f32 %v2724, %v2741
      %v2750 = vadd.f32 %v2725, %v2742
      %v2751 = vadd.f32 %v2726, %v2743
      %v2752 = vadd.f32 %v2727, %v2744
      %v2753 = vadd.f32 %v2728, %v2745
      %v2754 = vadd.f32 %v2729, %v2746
      %v2755 = vadd.f32 %v2730, %v2747
      %v2756 = vadd.f32 %v2731, %v2748
      %v2757 = vld [vmem:[%s1 + $0x1d8] sm:$0xff]
      %v2758 = vsub.f32 %v571, %v2757
      %v2759 = vsub.f32 %v575, %v2757
      %v2760 = vsub.f32 %v579, %v2757
      %v2761 = vsub.f32 %v583, %v2757
      %v2762 = vsub.f32 %v587, %v2757
      %v2763 = vsub.f32 %v591, %v2757
      %v2764 = vsub.f32 %v595, %v2757
      %v2765 = vsub.f32 %v599, %v2757
      %v2766 = vand.u32 2147483647, %v2758
      %v2767 = vand.u32 2147483647, %v2759
      %v2768 = vand.u32 2147483647, %v2760
      %v2769 = vand.u32 2147483647, %v2761
      %v2770 = vand.u32 2147483647, %v2762
      %v2771 = vand.u32 2147483647, %v2763
      %v2772 = vand.u32 2147483647, %v2764
      %v2773 = vand.u32 2147483647, %v2765
      %v2774 = vadd.f32 %v2749, %v2766
      %v2775 = vadd.f32 %v2750, %v2767
      %v2776 = vadd.f32 %v2751, %v2768
      %v2777 = vadd.f32 %v2752, %v2769
      %v2778 = vadd.f32 %v2753, %v2770
      %v2779 = vadd.f32 %v2754, %v2771
      %v2780 = vadd.f32 %v2755, %v2772
      %v2781 = vadd.f32 %v2756, %v2773
      %v2782 = vld [vmem:[%s1 + $0x1e0] sm:$0xff]
      %v2783 = vsub.f32 %v686, %v2782
      %v2784 = vsub.f32 %v690, %v2782
      %v2785 = vsub.f32 %v694, %v2782
      %v2786 = vsub.f32 %v698, %v2782
      %v2787 = vsub.f32 %v702, %v2782
      %v2788 = vsub.f32 %v706, %v2782
      %v2789 = vsub.f32 %v710, %v2782
      %v2790 = vsub.f32 %v714, %v2782
      %v2791 = vand.u32 2147483647, %v2783
      %v2792 = vand.u32 2147483647, %v2784
      %v2793 = vand.u32 2147483647, %v2785
      %v2794 = vand.u32 2147483647, %v2786
      %v2795 = vand.u32 2147483647, %v2787
      %v2796 = vand.u32 2147483647, %v2788
      %v2797 = vand.u32 2147483647, %v2789
      %v2798 = vand.u32 2147483647, %v2790
      %v2799 = vadd.f32 %v2774, %v2791
      %v2800 = vadd.f32 %v2775, %v2792
      %v2801 = vadd.f32 %v2776, %v2793
      %v2802 = vadd.f32 %v2777, %v2794
      %v2803 = vadd.f32 %v2778, %v2795
      %v2804 = vadd.f32 %v2779, %v2796
      %v2805 = vadd.f32 %v2780, %v2797
      %v2806 = vadd.f32 %v2781, %v2798
      %v2807 = vld [vmem:[%s1 + $0x1e8] sm:$0xff]
      %v2808 = vsub.f32 %v801, %v2807
      %v2809 = vsub.f32 %v805, %v2807
      %v2810 = vsub.f32 %v809, %v2807
      %v2811 = vsub.f32 %v813, %v2807
      %v2812 = vsub.f32 %v817, %v2807
      %v2813 = vsub.f32 %v821, %v2807
      %v2814 = vsub.f32 %v825, %v2807
      %v2815 = vsub.f32 %v829, %v2807
      %v2816 = vand.u32 2147483647, %v2808
      %v2817 = vand.u32 2147483647, %v2809
      %v2818 = vand.u32 2147483647, %v2810
      %v2819 = vand.u32 2147483647, %v2811
      %v2820 = vand.u32 2147483647, %v2812
      %v2821 = vand.u32 2147483647, %v2813
      %v2822 = vand.u32 2147483647, %v2814
      %v2823 = vand.u32 2147483647, %v2815
      %v2824 = vadd.f32 %v2799, %v2816
      %v2825 = vadd.f32 %v2800, %v2817
      %v2826 = vadd.f32 %v2801, %v2818
      %v2827 = vadd.f32 %v2802, %v2819
      %v2828 = vadd.f32 %v2803, %v2820
      %v2829 = vadd.f32 %v2804, %v2821
      %v2830 = vadd.f32 %v2805, %v2822
      %v2831 = vadd.f32 %v2806, %v2823
      %v2832 = vld [vmem:[%s1 + $0x1f0] sm:$0xff]
      %v2833 = vsub.f32 %v916, %v2832
      %v2834 = vsub.f32 %v920, %v2832
      %v2835 = vsub.f32 %v924, %v2832
      %v2836 = vsub.f32 %v928, %v2832
      %v2837 = vsub.f32 %v932, %v2832
      %v2838 = vsub.f32 %v936, %v2832
      %v2839 = vsub.f32 %v940, %v2832
      %v2840 = vsub.f32 %v944, %v2832
      %v2841 = vand.u32 2147483647, %v2833
      %v2842 = vand.u32 2147483647, %v2834
      %v2843 = vand.u32 2147483647, %v2835
      %v2844 = vand.u32 2147483647, %v2836
      %v2845 = vand.u32 2147483647, %v2837
      %v2846 = vand.u32 2147483647, %v2838
      %v2847 = vand.u32 2147483647, %v2839
      %v2848 = vand.u32 2147483647, %v2840
      %v2849 = vadd.f32 %v2824, %v2841
      %v2850 = vadd.f32 %v2825, %v2842
      %v2851 = vadd.f32 %v2826, %v2843
      %v2852 = vadd.f32 %v2827, %v2844
      %v2853 = vadd.f32 %v2828, %v2845
      %v2854 = vadd.f32 %v2829, %v2846
      %v2855 = vadd.f32 %v2830, %v2847
      %v2856 = vadd.f32 %v2831, %v2848
      %2857 = vadd.xlane.f32.xlu0 %v2849
      %v2858 = vpop.xlane.xlu0 %2857
      %2859 = vadd.xlane.f32.xlu0 %v2850
      %v2860 = vpop.xlane.xlu0 %2859
      %2861 = vadd.xlane.f32.xlu0 %v2851
      %v2862 = vpop.xlane.xlu0 %2861
      %2863 = vadd.xlane.f32.xlu0 %v2852
      %v2864 = vpop.xlane.xlu0 %2863
      %2865 = vadd.xlane.f32.xlu0 %v2853
      %v2866 = vpop.xlane.xlu0 %2865
      %2867 = vadd.xlane.f32.xlu0 %v2854
      %v2868 = vpop.xlane.xlu0 %2867
      %2869 = vadd.xlane.f32.xlu0 %v2855
      %v2870 = vpop.xlane.xlu0 %2869
      %2871 = vadd.xlane.f32.xlu0 %v2856
      %v2872 = vpop.xlane.xlu0 %2871
      %v2881 = vadd.s32 %v1002, 4294967232
      %v2882 = vlaneseq
      %v2883 = vshrl.u32 %v2882, 7
      %v2884 = vsub.s32 %v2881, %v2883
      %v2885 = vrot.slane %v2858, %v2884
      %v2886 = vlaneseq
      %v2887 = vshrl.u32 %v2886, 7
      %v2888 = vsub.s32 %v2881, %v2887
      %v2889 = vrot.slane %v2860, %v2888
      %v2890 = vlaneseq
      %v2891 = vshrl.u32 %v2890, 7
      %v2892 = vsub.s32 %v2881, %v2891
      %v2893 = vrot.slane %v2862, %v2892
      %v2894 = vlaneseq
      %v2895 = vshrl.u32 %v2894, 7
      %v2896 = vsub.s32 %v2881, %v2895
      %v2897 = vrot.slane %v2864, %v2896
      %v2898 = vlaneseq
      %v2899 = vshrl.u32 %v2898, 7
      %v2900 = vsub.s32 %v2881, %v2899
      %v2901 = vrot.slane %v2866, %v2900
      %v2902 = vlaneseq
      %v2903 = vshrl.u32 %v2902, 7
      %v2904 = vsub.s32 %v2881, %v2903
      %v2905 = vrot.slane %v2868, %v2904
      %v2906 = vlaneseq
      %v2907 = vshrl.u32 %v2906, 7
      %v2908 = vsub.s32 %v2881, %v2907
      %v2909 = vrot.slane %v2870, %v2908
      %v2910 = vlaneseq
      %v2911 = vshrl.u32 %v2910, 7
      %v2912 = vsub.s32 %v2881, %v2911
      %v2913 = vrot.slane %v2872, %v2912
      %v2914 = vsel %vm1035, %v2889, %v2885
      %v2915 = vsel %vm1037, %v2893, %v2914
      %v2916 = vsel %vm1039, %v2897, %v2915
      %v2917 = vsel %vm1041, %v2901, %v2916
      %v2918 = vsel %vm1043, %v2905, %v2917
      %v2919 = vsel %vm1045, %v2909, %v2918
      %v2920 = vsel %vm1047, %v2913, %v2919
      %vm2922 = vcmask 589312
      %2923 = vst.msk [vmem:[#allocation2] sm:$0xff] %vm2922, %v2920
      %v2924 = vld [vmem:[%s1 + $0x1f8] sm:$0xff]
      %v2925 = vsub.f32 %v234, %v2924
      %v2926 = vsub.f32 %v238, %v2924
      %v2927 = vsub.f32 %v242, %v2924
      %v2928 = vsub.f32 %v246, %v2924
      %v2929 = vsub.f32 %v250, %v2924
      %v2930 = vsub.f32 %v254, %v2924
      %v2931 = vsub.f32 %v258, %v2924
      %v2932 = vsub.f32 %v262, %v2924
      %v2933 = vand.u32 2147483647, %v2925
      %v2934 = vand.u32 2147483647, %v2926
      %v2935 = vand.u32 2147483647, %v2927
      %v2936 = vand.u32 2147483647, %v2928
      %v2937 = vand.u32 2147483647, %v2929
      %v2938 = vand.u32 2147483647, %v2930
      %v2939 = vand.u32 2147483647, %v2931
      %v2940 = vand.u32 2147483647, %v2932
      %v2941 = vld [vmem:[%s1 + $0x200] sm:$0xff]
      %v2942 = vsub.f32 %v341, %v2941
      %v2943 = vsub.f32 %v345, %v2941
      %v2944 = vsub.f32 %v349, %v2941
      %v2945 = vsub.f32 %v353, %v2941
      %v2946 = vsub.f32 %v357, %v2941
      %v2947 = vsub.f32 %v361, %v2941
      %v2948 = vsub.f32 %v365, %v2941
      %v2949 = vsub.f32 %v369, %v2941
      %v2950 = vand.u32 2147483647, %v2942
      %v2951 = vand.u32 2147483647, %v2943
      %v2952 = vand.u32 2147483647, %v2944
      %v2953 = vand.u32 2147483647, %v2945
      %v2954 = vand.u32 2147483647, %v2946
      %v2955 = vand.u32 2147483647, %v2947
      %v2956 = vand.u32 2147483647, %v2948
      %v2957 = vand.u32 2147483647, %v2949
      %v2958 = vadd.f32 %v2933, %v2950
      %v2959 = vadd.f32 %v2934, %v2951
      %v2960 = vadd.f32 %v2935, %v2952
      %v2961 = vadd.f32 %v2936, %v2953
      %v2962 = vadd.f32 %v2937, %v2954
      %v2963 = vadd.f32 %v2938, %v2955
      %v2964 = vadd.f32 %v2939, %v2956
      %v2965 = vadd.f32 %v2940, %v2957
      %v2966 = vld [vmem:[%s1 + $0x208] sm:$0xff]
      %v2967 = vsub.f32 %v456, %v2966
      %v2968 = vsub.f32 %v460, %v2966
      %v2969 = vsub.f32 %v464, %v2966
      %v2970 = vsub.f32 %v468, %v2966
      %v2971 = vsub.f32 %v472, %v2966
      %v2972 = vsub.f32 %v476, %v2966
      %v2973 = vsub.f32 %v480, %v2966
      %v2974 = vsub.f32 %v484, %v2966
      %v2975 = vand.u32 2147483647, %v2967
      %v2976 = vand.u32 2147483647, %v2968
      %v2977 = vand.u32 2147483647, %v2969
      %v2978 = vand.u32 2147483647, %v2970
      %v2979 = vand.u32 2147483647, %v2971
      %v2980 = vand.u32 2147483647, %v2972
      %v2981 = vand.u32 2147483647, %v2973
      %v2982 = vand.u32 2147483647, %v2974
      %v2983 = vadd.f32 %v2958, %v2975
      %v2984 = vadd.f32 %v2959, %v2976
      %v2985 = vadd.f32 %v2960, %v2977
      %v2986 = vadd.f32 %v2961, %v2978
      %v2987 = vadd.f32 %v2962, %v2979
      %v2988 = vadd.f32 %v2963, %v2980
      %v2989 = vadd.f32 %v2964, %v2981
      %v2990 = vadd.f32 %v2965, %v2982
      %v2991 = vld [vmem:[%s1 + $0x210] sm:$0xff]
      %v2992 = vsub.f32 %v571, %v2991
      %v2993 = vsub.f32 %v575, %v2991
      %v2994 = vsub.f32 %v579, %v2991
      %v2995 = vsub.f32 %v583, %v2991
      %v2996 = vsub.f32 %v587, %v2991
      %v2997 = vsub.f32 %v591, %v2991
      %v2998 = vsub.f32 %v595, %v2991
      %v2999 = vsub.f32 %v599, %v2991
      %v3000 = vand.u32 2147483647, %v2992
      %v3001 = vand.u32 2147483647, %v2993
      %v3002 = vand.u32 2147483647, %v2994
      %v3003 = vand.u32 2147483647, %v2995
      %v3004 = vand.u32 2147483647, %v2996
      %v3005 = vand.u32 2147483647, %v2997
      %v3006 = vand.u32 2147483647, %v2998
      %v3007 = vand.u32 2147483647, %v2999
      %v3008 = vadd.f32 %v2983, %v3000
      %v3009 = vadd.f32 %v2984, %v3001
      %v3010 = vadd.f32 %v2985, %v3002
      %v3011 = vadd.f32 %v2986, %v3003
      %v3012 = vadd.f32 %v2987, %v3004
      %v3013 = vadd.f32 %v2988, %v3005
      %v3014 = vadd.f32 %v2989, %v3006
      %v3015 = vadd.f32 %v2990, %v3007
      %v3016 = vld [vmem:[%s1 + $0x218] sm:$0xff]
      %v3017 = vsub.f32 %v686, %v3016
      %v3018 = vsub.f32 %v690, %v3016
      %v3019 = vsub.f32 %v694, %v3016
      %v3020 = vsub.f32 %v698, %v3016
      %v3021 = vsub.f32 %v702, %v3016
      %v3022 = vsub.f32 %v706, %v3016
      %v3023 = vsub.f32 %v710, %v3016
      %v3024 = vsub.f32 %v714, %v3016
      %v3025 = vand.u32 2147483647, %v3017
      %v3026 = vand.u32 2147483647, %v3018
      %v3027 = vand.u32 2147483647, %v3019
      %v3028 = vand.u32 2147483647, %v3020
      %v3029 = vand.u32 2147483647, %v3021
      %v3030 = vand.u32 2147483647, %v3022
      %v3031 = vand.u32 2147483647, %v3023
      %v3032 = vand.u32 2147483647, %v3024
      %v3033 = vadd.f32 %v3008, %v3025
      %v3034 = vadd.f32 %v3009, %v3026
      %v3035 = vadd.f32 %v3010, %v3027
      %v3036 = vadd.f32 %v3011, %v3028
      %v3037 = vadd.f32 %v3012, %v3029
      %v3038 = vadd.f32 %v3013, %v3030
      %v3039 = vadd.f32 %v3014, %v3031
      %v3040 = vadd.f32 %v3015, %v3032
      %v3041 = vld [vmem:[%s1 + $0x220] sm:$0xff]
      %v3042 = vsub.f32 %v801, %v3041
      %v3043 = vsub.f32 %v805, %v3041
      %v3044 = vsub.f32 %v809, %v3041
      %v3045 = vsub.f32 %v813, %v3041
      %v3046 = vsub.f32 %v817, %v3041
      %v3047 = vsub.f32 %v821, %v3041
      %v3048 = vsub.f32 %v825, %v3041
      %v3049 = vsub.f32 %v829, %v3041
      %v3050 = vand.u32 2147483647, %v3042
      %v3051 = vand.u32 2147483647, %v3043
      %v3052 = vand.u32 2147483647, %v3044
      %v3053 = vand.u32 2147483647, %v3045
      %v3054 = vand.u32 2147483647, %v3046
      %v3055 = vand.u32 2147483647, %v3047
      %v3056 = vand.u32 2147483647, %v3048
      %v3057 = vand.u32 2147483647, %v3049
      %v3058 = vadd.f32 %v3033, %v3050
      %v3059 = vadd.f32 %v3034, %v3051
      %v3060 = vadd.f32 %v3035, %v3052
      %v3061 = vadd.f32 %v3036, %v3053
      %v3062 = vadd.f32 %v3037, %v3054
      %v3063 = vadd.f32 %v3038, %v3055
      %v3064 = vadd.f32 %v3039, %v3056
      %v3065 = vadd.f32 %v3040, %v3057
      %v3066 = vld [vmem:[%s1 + $0x228] sm:$0xff]
      %v3067 = vsub.f32 %v916, %v3066
      %v3068 = vsub.f32 %v920, %v3066
      %v3069 = vsub.f32 %v924, %v3066
      %v3070 = vsub.f32 %v928, %v3066
      %v3071 = vsub.f32 %v932, %v3066
      %v3072 = vsub.f32 %v936, %v3066
      %v3073 = vsub.f32 %v940, %v3066
      %v3074 = vsub.f32 %v944, %v3066
      %v3075 = vand.u32 2147483647, %v3067
      %v3076 = vand.u32 2147483647, %v3068
      %v3077 = vand.u32 2147483647, %v3069
      %v3078 = vand.u32 2147483647, %v3070
      %v3079 = vand.u32 2147483647, %v3071
      %v3080 = vand.u32 2147483647, %v3072
      %v3081 = vand.u32 2147483647, %v3073
      %v3082 = vand.u32 2147483647, %v3074
      %v3083 = vadd.f32 %v3058, %v3075
      %v3084 = vadd.f32 %v3059, %v3076
      %v3085 = vadd.f32 %v3060, %v3077
      %v3086 = vadd.f32 %v3061, %v3078
      %v3087 = vadd.f32 %v3062, %v3079
      %v3088 = vadd.f32 %v3063, %v3080
      %v3089 = vadd.f32 %v3064, %v3081
      %v3090 = vadd.f32 %v3065, %v3082
      %3091 = vadd.xlane.f32.xlu0 %v3083
      %v3092 = vpop.xlane.xlu0 %3091
      %3093 = vadd.xlane.f32.xlu0 %v3084
      %v3094 = vpop.xlane.xlu0 %3093
      %3095 = vadd.xlane.f32.xlu0 %v3085
      %v3096 = vpop.xlane.xlu0 %3095
      %3097 = vadd.xlane.f32.xlu0 %v3086
      %v3098 = vpop.xlane.xlu0 %3097
      %3099 = vadd.xlane.f32.xlu0 %v3087
      %v3100 = vpop.xlane.xlu0 %3099
      %3101 = vadd.xlane.f32.xlu0 %v3088
      %v3102 = vpop.xlane.xlu0 %3101
      %3103 = vadd.xlane.f32.xlu0 %v3089
      %v3104 = vpop.xlane.xlu0 %3103
      %3105 = vadd.xlane.f32.xlu0 %v3090
      %v3106 = vpop.xlane.xlu0 %3105
      %v3115 = vadd.s32 %v1002, 4294967224
      %v3116 = vlaneseq
      %v3117 = vshrl.u32 %v3116, 7
      %v3118 = vsub.s32 %v3115, %v3117
      %v3119 = vrot.slane %v3092, %v3118
      %v3120 = vlaneseq
      %v3121 = vshrl.u32 %v3120, 7
      %v3122 = vsub.s32 %v3115, %v3121
      %v3123 = vrot.slane %v3094, %v3122
      %v3124 = vlaneseq
      %v3125 = vshrl.u32 %v3124, 7
      %v3126 = vsub.s32 %v3115, %v3125
      %v3127 = vrot.slane %v3096, %v3126
      %v3128 = vlaneseq
      %v3129 = vshrl.u32 %v3128, 7
      %v3130 = vsub.s32 %v3115, %v3129
      %v3131 = vrot.slane %v3098, %v3130
      %v3132 = vlaneseq
      %v3133 = vshrl.u32 %v3132, 7
      %v3134 = vsub.s32 %v3115, %v3133
      %v3135 = vrot.slane %v3100, %v3134
      %v3136 = vlaneseq
      %v3137 = vshrl.u32 %v3136, 7
      %v3138 = vsub.s32 %v3115, %v3137
      %v3139 = vrot.slane %v3102, %v3138
      %v3140 = vlaneseq
      %v3141 = vshrl.u32 %v3140, 7
      %v3142 = vsub.s32 %v3115, %v3141
      %v3143 = vrot.slane %v3104, %v3142
      %v3144 = vlaneseq
      %v3145 = vshrl.u32 %v3144, 7
      %v3146 = vsub.s32 %v3115, %v3145
      %v3147 = vrot.slane %v3106, %v3146
      %v3148 = vsel %vm1035, %v3123, %v3119
      %v3149 = vsel %vm1037, %v3127, %v3148
      %v3150 = vsel %vm1039, %v3131, %v3149
      %v3151 = vsel %vm1041, %v3135, %v3150
      %v3152 = vsel %vm1043, %v3139, %v3151
      %v3153 = vsel %vm1045, %v3143, %v3152
      %v3154 = vsel %vm1047, %v3147, %v3153
      %vm3156 = vcmask 654912
      %3157 = vst.msk [vmem:[#allocation2] sm:$0xff] %vm3156, %v3154
      %v3158 = vld [vmem:[%s1 + $0x230] sm:$0xff]
      %v3159 = vsub.f32 %v234, %v3158
      %v3160 = vsub.f32 %v238, %v3158
      %v3161 = vsub.f32 %v242, %v3158
      %v3162 = vsub.f32 %v246, %v3158
      %v3163 = vsub.f32 %v250, %v3158
      %v3164 = vsub.f32 %v254, %v3158
      %v3165 = vsub.f32 %v258, %v3158
      %v3166 = vsub.f32 %v262, %v3158
      %v3167 = vand.u32 2147483647, %v3159
      %v3168 = vand.u32 2147483647, %v3160
      %v3169 = vand.u32 2147483647, %v3161
      %v3170 = vand.u32 2147483647, %v3162
      %v3171 = vand.u32 2147483647, %v3163
      %v3172 = vand.u32 2147483647, %v3164
      %v3173 = vand.u32 2147483647, %v3165
      %v3174 = vand.u32 2147483647, %v3166
      %v3175 = vld [vmem:[%s1 + $0x238] sm:$0xff]
      %v3176 = vsub.f32 %v341, %v3175
      %v3177 = vsub.f32 %v345, %v3175
      %v3178 = vsub.f32 %v349, %v3175
      %v3179 = vsub.f32 %v353, %v3175
      %v3180 = vsub.f32 %v357, %v3175
      %v3181 = vsub.f32 %v361, %v3175
      %v3182 = vsub.f32 %v365, %v3175
      %v3183 = vsub.f32 %v369, %v3175
      %v3184 = vand.u32 2147483647, %v3176
      %v3185 = vand.u32 2147483647, %v3177
      %v3186 = vand.u32 2147483647, %v3178
      %v3187 = vand.u32 2147483647, %v3179
      %v3188 = vand.u32 2147483647, %v3180
      %v3189 = vand.u32 2147483647, %v3181
      %v3190 = vand.u32 2147483647, %v3182
      %v3191 = vand.u32 2147483647, %v3183
      %v3192 = vadd.f32 %v3167, %v3184
      %v3193 = vadd.f32 %v3168, %v3185
      %v3194 = vadd.f32 %v3169, %v3186
      %v3195 = vadd.f32 %v3170, %v3187
      %v3196 = vadd.f32 %v3171, %v3188
      %v3197 = vadd.f32 %v3172, %v3189
      %v3198 = vadd.f32 %v3173, %v3190
      %v3199 = vadd.f32 %v3174, %v3191
      %v3200 = vld [vmem:[%s1 + $0x240] sm:$0xff]
      %v3201 = vsub.f32 %v456, %v3200
      %v3202 = vsub.f32 %v460, %v3200
      %v3203 = vsub.f32 %v464, %v3200
      %v3204 = vsub.f32 %v468, %v3200
      %v3205 = vsub.f32 %v472, %v3200
      %v3206 = vsub.f32 %v476, %v3200
      %v3207 = vsub.f32 %v480, %v3200
      %v3208 = vsub.f32 %v484, %v3200
      %v3209 = vand.u32 2147483647, %v3201
      %v3210 = vand.u32 2147483647, %v3202
      %v3211 = vand.u32 2147483647, %v3203
      %v3212 = vand.u32 2147483647, %v3204
      %v3213 = vand.u32 2147483647, %v3205
      %v3214 = vand.u32 2147483647, %v3206
      %v3215 = vand.u32 2147483647, %v3207
      %v3216 = vand.u32 2147483647, %v3208
      %v3217 = vadd.f32 %v3192, %v3209
      %v3218 = vadd.f32 %v3193, %v3210
      %v3219 = vadd.f32 %v3194, %v3211
      %v3220 = vadd.f32 %v3195, %v3212
      %v3221 = vadd.f32 %v3196, %v3213
      %v3222 = vadd.f32 %v3197, %v3214
      %v3223 = vadd.f32 %v3198, %v3215
      %v3224 = vadd.f32 %v3199, %v3216
      %v3225 = vld [vmem:[%s1 + $0x248] sm:$0xff]
      %v3226 = vsub.f32 %v571, %v3225
      %v3227 = vsub.f32 %v575, %v3225
      %v3228 = vsub.f32 %v579, %v3225
      %v3229 = vsub.f32 %v583, %v3225
      %v3230 = vsub.f32 %v587, %v3225
      %v3231 = vsub.f32 %v591, %v3225
      %v3232 = vsub.f32 %v595, %v3225
      %v3233 = vsub.f32 %v599, %v3225
      %v3234 = vand.u32 2147483647, %v3226
      %v3235 = vand.u32 2147483647, %v3227
      %v3236 = vand.u32 2147483647, %v3228
      %v3237 = vand.u32 2147483647, %v3229
      %v3238 = vand.u32 2147483647, %v3230
      %v3239 = vand.u32 2147483647, %v3231
      %v3240 = vand.u32 2147483647, %v3232
      %v3241 = vand.u32 2147483647, %v3233
      %v3242 = vadd.f32 %v3217, %v3234
      %v3243 = vadd.f32 %v3218, %v3235
      %v3244 = vadd.f32 %v3219, %v3236
      %v3245 = vadd.f32 %v3220, %v3237
      %v3246 = vadd.f32 %v3221, %v3238
      %v3247 = vadd.f32 %v3222, %v3239
      %v3248 = vadd.f32 %v3223, %v3240
      %v3249 = vadd.f32 %v3224, %v3241
      %v3250 = vld [vmem:[%s1 + $0x250] sm:$0xff]
      %v3251 = vsub.f32 %v686, %v3250
      %v3252 = vsub.f32 %v690, %v3250
      %v3253 = vsub.f32 %v694, %v3250
      %v3254 = vsub.f32 %v698, %v3250
      %v3255 = vsub.f32 %v702, %v3250
      %v3256 = vsub.f32 %v706, %v3250
      %v3257 = vsub.f32 %v710, %v3250
      %v3258 = vsub.f32 %v714, %v3250
      %v3259 = vand.u32 2147483647, %v3251
      %v3260 = vand.u32 2147483647, %v3252
      %v3261 = vand.u32 2147483647, %v3253
      %v3262 = vand.u32 2147483647, %v3254
      %v3263 = vand.u32 2147483647, %v3255
      %v3264 = vand.u32 2147483647, %v3256
      %v3265 = vand.u32 2147483647, %v3257
      %v3266 = vand.u32 2147483647, %v3258
      %v3267 = vadd.f32 %v3242, %v3259
      %v3268 = vadd.f32 %v3243, %v3260
      %v3269 = vadd.f32 %v3244, %v3261
      %v3270 = vadd.f32 %v3245, %v3262
      %v3271 = vadd.f32 %v3246, %v3263
      %v3272 = vadd.f32 %v3247, %v3264
      %v3273 = vadd.f32 %v3248, %v3265
      %v3274 = vadd.f32 %v3249, %v3266
      %v3275 = vld [vmem:[%s1 + $0x258] sm:$0xff]
      %v3276 = vsub.f32 %v801, %v3275
      %v3277 = vsub.f32 %v805, %v3275
      %v3278 = vsub.f32 %v809, %v3275
      %v3279 = vsub.f32 %v813, %v3275
      %v3280 = vsub.f32 %v817, %v3275
      %v3281 = vsub.f32 %v821, %v3275
      %v3282 = vsub.f32 %v825, %v3275
      %v3283 = vsub.f32 %v829, %v3275
      %v3284 = vand.u32 2147483647, %v3276
      %v3285 = vand.u32 2147483647, %v3277
      %v3286 = vand.u32 2147483647, %v3278
      %v3287 = vand.u32 2147483647, %v3279
      %v3288 = vand.u32 2147483647, %v3280
      %v3289 = vand.u32 2147483647, %v3281
      %v3290 = vand.u32 2147483647, %v3282
      %v3291 = vand.u32 2147483647, %v3283
      %v3292 = vadd.f32 %v3267, %v3284
      %v3293 = vadd.f32 %v3268, %v3285
      %v3294 = vadd.f32 %v3269, %v3286
      %v3295 = vadd.f32 %v3270, %v3287
      %v3296 = vadd.f32 %v3271, %v3288
      %v3297 = vadd.f32 %v3272, %v3289
      %v3298 = vadd.f32 %v3273, %v3290
      %v3299 = vadd.f32 %v3274, %v3291
      %v3300 = vld [vmem:[%s1 + $0x260] sm:$0xff]
      %v3301 = vsub.f32 %v916, %v3300
      %v3302 = vsub.f32 %v920, %v3300
      %v3303 = vsub.f32 %v924, %v3300
      %v3304 = vsub.f32 %v928, %v3300
      %v3305 = vsub.f32 %v932, %v3300
      %v3306 = vsub.f32 %v936, %v3300
      %v3307 = vsub.f32 %v940, %v3300
      %v3308 = vsub.f32 %v944, %v3300
      %v3309 = vand.u32 2147483647, %v3301
      %v3310 = vand.u32 2147483647, %v3302
      %v3311 = vand.u32 2147483647, %v3303
      %v3312 = vand.u32 2147483647, %v3304
      %v3313 = vand.u32 2147483647, %v3305
      %v3314 = vand.u32 2147483647, %v3306
      %v3315 = vand.u32 2147483647, %v3307
      %v3316 = vand.u32 2147483647, %v3308
      %v3317 = vadd.f32 %v3292, %v3309
      %v3318 = vadd.f32 %v3293, %v3310
      %v3319 = vadd.f32 %v3294, %v3311
      %v3320 = vadd.f32 %v3295, %v3312
      %v3321 = vadd.f32 %v3296, %v3313
      %v3322 = vadd.f32 %v3297, %v3314
      %v3323 = vadd.f32 %v3298, %v3315
      %v3324 = vadd.f32 %v3299, %v3316
      %3325 = vadd.xlane.f32.xlu0 %v3317
      %v3326 = vpop.xlane.xlu0 %3325
      %3327 = vadd.xlane.f32.xlu0 %v3318
      %v3328 = vpop.xlane.xlu0 %3327
      %3329 = vadd.xlane.f32.xlu0 %v3319
      %v3330 = vpop.xlane.xlu0 %3329
      %3331 = vadd.xlane.f32.xlu0 %v3320
      %v3332 = vpop.xlane.xlu0 %3331
      %3333 = vadd.xlane.f32.xlu0 %v3321
      %v3334 = vpop.xlane.xlu0 %3333
      %3335 = vadd.xlane.f32.xlu0 %v3322
      %v3336 = vpop.xlane.xlu0 %3335
      %3337 = vadd.xlane.f32.xlu0 %v3323
      %v3338 = vpop.xlane.xlu0 %3337
      %3339 = vadd.xlane.f32.xlu0 %v3324
      %v3340 = vpop.xlane.xlu0 %3339
      %v3349 = vadd.s32 %v1002, 4294967216
      %v3350 = vlaneseq
      %v3351 = vshrl.u32 %v3350, 7
      %v3352 = vsub.s32 %v3349, %v3351
      %v3353 = vrot.slane %v3326, %v3352
      %v3354 = vlaneseq
      %v3355 = vshrl.u32 %v3354, 7
      %v3356 = vsub.s32 %v3349, %v3355
      %v3357 = vrot.slane %v3328, %v3356
      %v3358 = vlaneseq
      %v3359 = vshrl.u32 %v3358, 7
      %v3360 = vsub.s32 %v3349, %v3359
      %v3361 = vrot.slane %v3330, %v3360
      %v3362 = vlaneseq
      %v3363 = vshrl.u32 %v3362, 7
      %v3364 = vsub.s32 %v3349, %v3363
      %v3365 = vrot.slane %v3332, %v3364
      %v3366 = vlaneseq
      %v3367 = vshrl.u32 %v3366, 7
      %v3368 = vsub.s32 %v3349, %v3367
      %v3369 = vrot.slane %v3334, %v3368
      %v3370 = vlaneseq
      %v3371 = vshrl.u32 %v3370, 7
      %v3372 = vsub.s32 %v3349, %v3371
      %v3373 = vrot.slane %v3336, %v3372
      %v3374 = vlaneseq
      %v3375 = vshrl.u32 %v3374, 7
      %v3376 = vsub.s32 %v3349, %v3375
      %v3377 = vrot.slane %v3338, %v3376
      %v3378 = vlaneseq
      %v3379 = vshrl.u32 %v3378, 7
      %v3380 = vsub.s32 %v3349, %v3379
      %v3381 = vrot.slane %v3340, %v3380
      %v3382 = vsel %vm1035, %v3357, %v3353
      %v3383 = vsel %vm1037, %v3361, %v3382
      %v3384 = vsel %vm1039, %v3365, %v3383
      %v3385 = vsel %vm1041, %v3369, %v3384
      %v3386 = vsel %vm1043, %v3373, %v3385
      %v3387 = vsel %vm1045, %v3377, %v3386
      %v3388 = vsel %vm1047, %v3381, %v3387
      %vm3390 = vcmask 720512
      %3391 = vst.msk [vmem:[#allocation2] sm:$0xff] %vm3390, %v3388
      %v3392 = vld [vmem:[%s1 + $0x268] sm:$0xff]
      %v3393 = vsub.f32 %v234, %v3392
      %v3394 = vsub.f32 %v238, %v3392
      %v3395 = vsub.f32 %v242, %v3392
      %v3396 = vsub.f32 %v246, %v3392
      %v3397 = vsub.f32 %v250, %v3392
      %v3398 = vsub.f32 %v254, %v3392
      %v3399 = vsub.f32 %v258, %v3392
      %v3400 = vsub.f32 %v262, %v3392
      %v3401 = vand.u32 2147483647, %v3393
      %v3402 = vand.u32 2147483647, %v3394
      %v3403 = vand.u32 2147483647, %v3395
      %v3404 = vand.u32 2147483647, %v3396
      %v3405 = vand.u32 2147483647, %v3397
      %v3406 = vand.u32 2147483647, %v3398
      %v3407 = vand.u32 2147483647, %v3399
      %v3408 = vand.u32 2147483647, %v3400
      %v3409 = vld [vmem:[%s1 + $0x270] sm:$0xff]
      %v3410 = vsub.f32 %v341, %v3409
      %v3411 = vsub.f32 %v345, %v3409
      %v3412 = vsub.f32 %v349, %v3409
      %v3413 = vsub.f32 %v353, %v3409
      %v3414 = vsub.f32 %v357, %v3409
      %v3415 = vsub.f32 %v361, %v3409
      %v3416 = vsub.f32 %v365, %v3409
      %v3417 = vsub.f32 %v369, %v3409
      %v3418 = vand.u32 2147483647, %v3410
      %v3419 = vand.u32 2147483647, %v3411
      %v3420 = vand.u32 2147483647, %v3412
      %v3421 = vand.u32 2147483647, %v3413
      %v3422 = vand.u32 2147483647, %v3414
      %v3423 = vand.u32 2147483647, %v3415
      %v3424 = vand.u32 2147483647, %v3416
      %v3425 = vand.u32 2147483647, %v3417
      %v3426 = vadd.f32 %v3401, %v3418
      %v3427 = vadd.f32 %v3402, %v3419
      %v3428 = vadd.f32 %v3403, %v3420
      %v3429 = vadd.f32 %v3404, %v3421
      %v3430 = vadd.f32 %v3405, %v3422
      %v3431 = vadd.f32 %v3406, %v3423
      %v3432 = vadd.f32 %v3407, %v3424
      %v3433 = vadd.f32 %v3408, %v3425
      %v3434 = vld [vmem:[%s1 + $0x278] sm:$0xff]
      %v3435 = vsub.f32 %v456, %v3434
      %v3436 = vsub.f32 %v460, %v3434
      %v3437 = vsub.f32 %v464, %v3434
      %v3438 = vsub.f32 %v468, %v3434
      %v3439 = vsub.f32 %v472, %v3434
      %v3440 = vsub.f32 %v476, %v3434
      %v3441 = vsub.f32 %v480, %v3434
      %v3442 = vsub.f32 %v484, %v3434
      %v3443 = vand.u32 2147483647, %v3435
      %v3444 = vand.u32 2147483647, %v3436
      %v3445 = vand.u32 2147483647, %v3437
      %v3446 = vand.u32 2147483647, %v3438
      %v3447 = vand.u32 2147483647, %v3439
      %v3448 = vand.u32 2147483647, %v3440
      %v3449 = vand.u32 2147483647, %v3441
      %v3450 = vand.u32 2147483647, %v3442
      %v3451 = vadd.f32 %v3426, %v3443
      %v3452 = vadd.f32 %v3427, %v3444
      %v3453 = vadd.f32 %v3428, %v3445
      %v3454 = vadd.f32 %v3429, %v3446
      %v3455 = vadd.f32 %v3430, %v3447
      %v3456 = vadd.f32 %v3431, %v3448
      %v3457 = vadd.f32 %v3432, %v3449
      %v3458 = vadd.f32 %v3433, %v3450
      %v3459 = vld [vmem:[%s1 + $0x280] sm:$0xff]
      %v3460 = vsub.f32 %v571, %v3459
      %v3461 = vsub.f32 %v575, %v3459
      %v3462 = vsub.f32 %v579, %v3459
      %v3463 = vsub.f32 %v583, %v3459
      %v3464 = vsub.f32 %v587, %v3459
      %v3465 = vsub.f32 %v591, %v3459
      %v3466 = vsub.f32 %v595, %v3459
      %v3467 = vsub.f32 %v599, %v3459
      %v3468 = vand.u32 2147483647, %v3460
      %v3469 = vand.u32 2147483647, %v3461
      %v3470 = vand.u32 2147483647, %v3462
      %v3471 = vand.u32 2147483647, %v3463
      %v3472 = vand.u32 2147483647, %v3464
      %v3473 = vand.u32 2147483647, %v3465
      %v3474 = vand.u32 2147483647, %v3466
      %v3475 = vand.u32 2147483647, %v3467
      %v3476 = vadd.f32 %v3451, %v3468
      %v3477 = vadd.f32 %v3452, %v3469
      %v3478 = vadd.f32 %v3453, %v3470
      %v3479 = vadd.f32 %v3454, %v3471
      %v3480 = vadd.f32 %v3455, %v3472
      %v3481 = vadd.f32 %v3456, %v3473
      %v3482 = vadd.f32 %v3457, %v3474
      %v3483 = vadd.f32 %v3458, %v3475
      %v3484 = vld [vmem:[%s1 + $0x288] sm:$0xff]
      %v3485 = vsub.f32 %v686, %v3484
      %v3486 = vsub.f32 %v690, %v3484
      %v3487 = vsub.f32 %v694, %v3484
      %v3488 = vsub.f32 %v698, %v3484
      %v3489 = vsub.f32 %v702, %v3484
      %v3490 = vsub.f32 %v706, %v3484
      %v3491 = vsub.f32 %v710, %v3484
      %v3492 = vsub.f32 %v714, %v3484
      %v3493 = vand.u32 2147483647, %v3485
      %v3494 = vand.u32 2147483647, %v3486
      %v3495 = vand.u32 2147483647, %v3487
      %v3496 = vand.u32 2147483647, %v3488
      %v3497 = vand.u32 2147483647, %v3489
      %v3498 = vand.u32 2147483647, %v3490
      %v3499 = vand.u32 2147483647, %v3491
      %v3500 = vand.u32 2147483647, %v3492
      %v3501 = vadd.f32 %v3476, %v3493
      %v3502 = vadd.f32 %v3477, %v3494
      %v3503 = vadd.f32 %v3478, %v3495
      %v3504 = vadd.f32 %v3479, %v3496
      %v3505 = vadd.f32 %v3480, %v3497
      %v3506 = vadd.f32 %v3481, %v3498
      %v3507 = vadd.f32 %v3482, %v3499
      %v3508 = vadd.f32 %v3483, %v3500
      %v3509 = vld [vmem:[%s1 + $0x290] sm:$0xff]
      %v3510 = vsub.f32 %v801, %v3509
      %v3511 = vsub.f32 %v805, %v3509
      %v3512 = vsub.f32 %v809, %v3509
      %v3513 = vsub.f32 %v813, %v3509
      %v3514 = vsub.f32 %v817, %v3509
      %v3515 = vsub.f32 %v821, %v3509
      %v3516 = vsub.f32 %v825, %v3509
      %v3517 = vsub.f32 %v829, %v3509
      %v3518 = vand.u32 2147483647, %v3510
      %v3519 = vand.u32 2147483647, %v3511
      %v3520 = vand.u32 2147483647, %v3512
      %v3521 = vand.u32 2147483647, %v3513
      %v3522 = vand.u32 2147483647, %v3514
      %v3523 = vand.u32 2147483647, %v3515
      %v3524 = vand.u32 2147483647, %v3516
      %v3525 = vand.u32 2147483647, %v3517
      %v3526 = vadd.f32 %v3501, %v3518
      %v3527 = vadd.f32 %v3502, %v3519
      %v3528 = vadd.f32 %v3503, %v3520
      %v3529 = vadd.f32 %v3504, %v3521
      %v3530 = vadd.f32 %v3505, %v3522
      %v3531 = vadd.f32 %v3506, %v3523
      %v3532 = vadd.f32 %v3507, %v3524
      %v3533 = vadd.f32 %v3508, %v3525
      %v3534 = vld [vmem:[%s1 + $0x298] sm:$0xff]
      %v3535 = vsub.f32 %v916, %v3534
      %v3536 = vsub.f32 %v920, %v3534
      %v3537 = vsub.f32 %v924, %v3534
      %v3538 = vsub.f32 %v928, %v3534
      %v3539 = vsub.f32 %v932, %v3534
      %v3540 = vsub.f32 %v936, %v3534
      %v3541 = vsub.f32 %v940, %v3534
      %v3542 = vsub.f32 %v944, %v3534
      %v3543 = vand.u32 2147483647, %v3535
      %v3544 = vand.u32 2147483647, %v3536
      %v3545 = vand.u32 2147483647, %v3537
      %v3546 = vand.u32 2147483647, %v3538
      %v3547 = vand.u32 2147483647, %v3539
      %v3548 = vand.u32 2147483647, %v3540
      %v3549 = vand.u32 2147483647, %v3541
      %v3550 = vand.u32 2147483647, %v3542
      %v3551 = vadd.f32 %v3526, %v3543
      %v3552 = vadd.f32 %v3527, %v3544
      %v3553 = vadd.f32 %v3528, %v3545
      %v3554 = vadd.f32 %v3529, %v3546
      %v3555 = vadd.f32 %v3530, %v3547
      %v3556 = vadd.f32 %v3531, %v3548
      %v3557 = vadd.f32 %v3532, %v3549
      %v3558 = vadd.f32 %v3533, %v3550
      %3559 = vadd.xlane.f32.xlu0 %v3551
      %v3560 = vpop.xlane.xlu0 %3559
      %3561 = vadd.xlane.f32.xlu0 %v3552
      %v3562 = vpop.xlane.xlu0 %3561
      %3563 = vadd.xlane.f32.xlu0 %v3553
      %v3564 = vpop.xlane.xlu0 %3563
      %3565 = vadd.xlane.f32.xlu0 %v3554
      %v3566 = vpop.xlane.xlu0 %3565
      %3567 = vadd.xlane.f32.xlu0 %v3555
      %v3568 = vpop.xlane.xlu0 %3567
      %3569 = vadd.xlane.f32.xlu0 %v3556
      %v3570 = vpop.xlane.xlu0 %3569
      %3571 = vadd.xlane.f32.xlu0 %v3557
      %v3572 = vpop.xlane.xlu0 %3571
      %3573 = vadd.xlane.f32.xlu0 %v3558
      %v3574 = vpop.xlane.xlu0 %3573
      %v3583 = vadd.s32 %v1002, 4294967208
      %v3584 = vlaneseq
      %v3585 = vshrl.u32 %v3584, 7
      %v3586 = vsub.s32 %v3583, %v3585
      %v3587 = vrot.slane %v3560, %v3586
      %v3588 = vlaneseq
      %v3589 = vshrl.u32 %v3588, 7
      %v3590 = vsub.s32 %v3583, %v3589
      %v3591 = vrot.slane %v3562, %v3590
      %v3592 = vlaneseq
      %v3593 = vshrl.u32 %v3592, 7
      %v3594 = vsub.s32 %v3583, %v3593
      %v3595 = vrot.slane %v3564, %v3594
      %v3596 = vlaneseq
      %v3597 = vshrl.u32 %v3596, 7
      %v3598 = vsub.s32 %v3583, %v3597
      %v3599 = vrot.slane %v3566, %v3598
      %v3600 = vlaneseq
      %v3601 = vshrl.u32 %v3600, 7
      %v3602 = vsub.s32 %v3583, %v3601
      %v3603 = vrot.slane %v3568, %v3602
      %v3604 = vlaneseq
      %v3605 = vshrl.u32 %v3604, 7
      %v3606 = vsub.s32 %v3583, %v3605
      %v3607 = vrot.slane %v3570, %v3606
      %v3608 = vlaneseq
      %v3609 = vshrl.u32 %v3608, 7
      %v3610 = vsub.s32 %v3583, %v3609
      %v3611 = vrot.slane %v3572, %v3610
      %v3612 = vlaneseq
      %v3613 = vshrl.u32 %v3612, 7
      %v3614 = vsub.s32 %v3583, %v3613
      %v3615 = vrot.slane %v3574, %v3614
      %v3616 = vsel %vm1035, %v3591, %v3587
      %v3617 = vsel %vm1037, %v3595, %v3616
      %v3618 = vsel %vm1039, %v3599, %v3617
      %v3619 = vsel %vm1041, %v3603, %v3618
      %v3620 = vsel %vm1043, %v3607, %v3619
      %v3621 = vsel %vm1045, %v3611, %v3620
      %v3622 = vsel %vm1047, %v3615, %v3621
      %vm3624 = vcmask 786112
      %3625 = vst.msk [vmem:[#allocation2] sm:$0xff] %vm3624, %v3622
      %v3626 = vld [vmem:[%s1 + $0x2a0] sm:$0xff]
      %v3627 = vsub.f32 %v234, %v3626
      %v3628 = vsub.f32 %v238, %v3626
      %v3629 = vsub.f32 %v242, %v3626
      %v3630 = vsub.f32 %v246, %v3626
      %v3631 = vsub.f32 %v250, %v3626
      %v3632 = vsub.f32 %v254, %v3626
      %v3633 = vsub.f32 %v258, %v3626
      %v3634 = vsub.f32 %v262, %v3626
      %v3635 = vand.u32 2147483647, %v3627
      %v3636 = vand.u32 2147483647, %v3628
      %v3637 = vand.u32 2147483647, %v3629
      %v3638 = vand.u32 2147483647, %v3630
      %v3639 = vand.u32 2147483647, %v3631
      %v3640 = vand.u32 2147483647, %v3632
      %v3641 = vand.u32 2147483647, %v3633
      %v3642 = vand.u32 2147483647, %v3634
      %v3643 = vld [vmem:[%s1 + $0x2a8] sm:$0xff]
      %v3644 = vsub.f32 %v341, %v3643
      %v3645 = vsub.f32 %v345, %v3643
      %v3646 = vsub.f32 %v349, %v3643
      %v3647 = vsub.f32 %v353, %v3643
      %v3648 = vsub.f32 %v357, %v3643
      %v3649 = vsub.f32 %v361, %v3643
      %v3650 = vsub.f32 %v365, %v3643
      %v3651 = vsub.f32 %v369, %v3643
      %v3652 = vand.u32 2147483647, %v3644
      %v3653 = vand.u32 2147483647, %v3645
      %v3654 = vand.u32 2147483647, %v3646
      %v3655 = vand.u32 2147483647, %v3647
      %v3656 = vand.u32 2147483647, %v3648
      %v3657 = vand.u32 2147483647, %v3649
      %v3658 = vand.u32 2147483647, %v3650
      %v3659 = vand.u32 2147483647, %v3651
      %v3660 = vadd.f32 %v3635, %v3652
      %v3661 = vadd.f32 %v3636, %v3653
      %v3662 = vadd.f32 %v3637, %v3654
      %v3663 = vadd.f32 %v3638, %v3655
      %v3664 = vadd.f32 %v3639, %v3656
      %v3665 = vadd.f32 %v3640, %v3657
      %v3666 = vadd.f32 %v3641, %v3658
      %v3667 = vadd.f32 %v3642, %v3659
      %v3668 = vld [vmem:[%s1 + $0x2b0] sm:$0xff]
      %v3669 = vsub.f32 %v456, %v3668
      %v3670 = vsub.f32 %v460, %v3668
      %v3671 = vsub.f32 %v464, %v3668
      %v3672 = vsub.f32 %v468, %v3668
      %v3673 = vsub.f32 %v472, %v3668
      %v3674 = vsub.f32 %v476, %v3668
      %v3675 = vsub.f32 %v480, %v3668
      %v3676 = vsub.f32 %v484, %v3668
      %v3677 = vand.u32 2147483647, %v3669
      %v3678 = vand.u32 2147483647, %v3670
      %v3679 = vand.u32 2147483647, %v3671
      %v3680 = vand.u32 2147483647, %v3672
      %v3681 = vand.u32 2147483647, %v3673
      %v3682 = vand.u32 2147483647, %v3674
      %v3683 = vand.u32 2147483647, %v3675
      %v3684 = vand.u32 2147483647, %v3676
      %v3685 = vadd.f32 %v3660, %v3677
      %v3686 = vadd.f32 %v3661, %v3678
      %v3687 = vadd.f32 %v3662, %v3679
      %v3688 = vadd.f32 %v3663, %v3680
      %v3689 = vadd.f32 %v3664, %v3681
      %v3690 = vadd.f32 %v3665, %v3682
      %v3691 = vadd.f32 %v3666, %v3683
      %v3692 = vadd.f32 %v3667, %v3684
      %v3693 = vld [vmem:[%s1 + $0x2b8] sm:$0xff]
      %v3694 = vsub.f32 %v571, %v3693
      %v3695 = vsub.f32 %v575, %v3693
      %v3696 = vsub.f32 %v579, %v3693
      %v3697 = vsub.f32 %v583, %v3693
      %v3698 = vsub.f32 %v587, %v3693
      %v3699 = vsub.f32 %v591, %v3693
      %v3700 = vsub.f32 %v595, %v3693
      %v3701 = vsub.f32 %v599, %v3693
      %v3702 = vand.u32 2147483647, %v3694
      %v3703 = vand.u32 2147483647, %v3695
      %v3704 = vand.u32 2147483647, %v3696
      %v3705 = vand.u32 2147483647, %v3697
      %v3706 = vand.u32 2147483647, %v3698
      %v3707 = vand.u32 2147483647, %v3699
      %v3708 = vand.u32 2147483647, %v3700
      %v3709 = vand.u32 2147483647, %v3701
      %v3710 = vadd.f32 %v3685, %v3702
      %v3711 = vadd.f32 %v3686, %v3703
      %v3712 = vadd.f32 %v3687, %v3704
      %v3713 = vadd.f32 %v3688, %v3705
      %v3714 = vadd.f32 %v3689, %v3706
      %v3715 = vadd.f32 %v3690, %v3707
      %v3716 = vadd.f32 %v3691, %v3708
      %v3717 = vadd.f32 %v3692, %v3709
      %v3718 = vld [vmem:[%s1 + $0x2c0] sm:$0xff]
      %v3719 = vsub.f32 %v686, %v3718
      %v3720 = vsub.f32 %v690, %v3718
      %v3721 = vsub.f32 %v694, %v3718
      %v3722 = vsub.f32 %v698, %v3718
      %v3723 = vsub.f32 %v702, %v3718
      %v3724 = vsub.f32 %v706, %v3718
      %v3725 = vsub.f32 %v710, %v3718
      %v3726 = vsub.f32 %v714, %v3718
      %v3727 = vand.u32 2147483647, %v3719
      %v3728 = vand.u32 2147483647, %v3720
      %v3729 = vand.u32 2147483647, %v3721
      %v3730 = vand.u32 2147483647, %v3722
      %v3731 = vand.u32 2147483647, %v3723
      %v3732 = vand.u32 2147483647, %v3724
      %v3733 = vand.u32 2147483647, %v3725
      %v3734 = vand.u32 2147483647, %v3726
      %v3735 = vadd.f32 %v3710, %v3727
      %v3736 = vadd.f32 %v3711, %v3728
      %v3737 = vadd.f32 %v3712, %v3729
      %v3738 = vadd.f32 %v3713, %v3730
      %v3739 = vadd.f32 %v3714, %v3731
      %v3740 = vadd.f32 %v3715, %v3732
      %v3741 = vadd.f32 %v3716, %v3733
      %v3742 = vadd.f32 %v3717, %v3734
      %v3743 = vld [vmem:[%s1 + $0x2c8] sm:$0xff]
      %v3744 = vsub.f32 %v801, %v3743
      %v3745 = vsub.f32 %v805, %v3743
      %v3746 = vsub.f32 %v809, %v3743
      %v3747 = vsub.f32 %v813, %v3743
      %v3748 = vsub.f32 %v817, %v3743
      %v3749 = vsub.f32 %v821, %v3743
      %v3750 = vsub.f32 %v825, %v3743
      %v3751 = vsub.f32 %v829, %v3743
      %v3752 = vand.u32 2147483647, %v3744
      %v3753 = vand.u32 2147483647, %v3745
      %v3754 = vand.u32 2147483647, %v3746
      %v3755 = vand.u32 2147483647, %v3747
      %v3756 = vand.u32 2147483647, %v3748
      %v3757 = vand.u32 2147483647, %v3749
      %v3758 = vand.u32 2147483647, %v3750
      %v3759 = vand.u32 2147483647, %v3751
      %v3760 = vadd.f32 %v3735, %v3752
      %v3761 = vadd.f32 %v3736, %v3753
      %v3762 = vadd.f32 %v3737, %v3754
      %v3763 = vadd.f32 %v3738, %v3755
      %v3764 = vadd.f32 %v3739, %v3756
      %v3765 = vadd.f32 %v3740, %v3757
      %v3766 = vadd.f32 %v3741, %v3758
      %v3767 = vadd.f32 %v3742, %v3759
      %v3768 = vld [vmem:[%s1 + $0x2d0] sm:$0xff]
      %v3769 = vsub.f32 %v916, %v3768
      %v3770 = vsub.f32 %v920, %v3768
      %v3771 = vsub.f32 %v924, %v3768
      %v3772 = vsub.f32 %v928, %v3768
      %v3773 = vsub.f32 %v932, %v3768
      %v3774 = vsub.f32 %v936, %v3768
      %v3775 = vsub.f32 %v940, %v3768
      %v3776 = vsub.f32 %v944, %v3768
      %v3777 = vand.u32 2147483647, %v3769
      %v3778 = vand.u32 2147483647, %v3770
      %v3779 = vand.u32 2147483647, %v3771
      %v3780 = vand.u32 2147483647, %v3772
      %v3781 = vand.u32 2147483647, %v3773
      %v3782 = vand.u32 2147483647, %v3774
      %v3783 = vand.u32 2147483647, %v3775
      %v3784 = vand.u32 2147483647, %v3776
      %v3785 = vadd.f32 %v3760, %v3777
      %v3786 = vadd.f32 %v3761, %v3778
      %v3787 = vadd.f32 %v3762, %v3779
      %v3788 = vadd.f32 %v3763, %v3780
      %v3789 = vadd.f32 %v3764, %v3781
      %v3790 = vadd.f32 %v3765, %v3782
      %v3791 = vadd.f32 %v3766, %v3783
      %v3792 = vadd.f32 %v3767, %v3784
      %3793 = vadd.xlane.f32.xlu0 %v3785
      %v3794 = vpop.xlane.xlu0 %3793
      %3795 = vadd.xlane.f32.xlu0 %v3786
      %v3796 = vpop.xlane.xlu0 %3795
      %3797 = vadd.xlane.f32.xlu0 %v3787
      %v3798 = vpop.xlane.xlu0 %3797
      %3799 = vadd.xlane.f32.xlu0 %v3788
      %v3800 = vpop.xlane.xlu0 %3799
      %3801 = vadd.xlane.f32.xlu0 %v3789
      %v3802 = vpop.xlane.xlu0 %3801
      %3803 = vadd.xlane.f32.xlu0 %v3790
      %v3804 = vpop.xlane.xlu0 %3803
      %3805 = vadd.xlane.f32.xlu0 %v3791
      %v3806 = vpop.xlane.xlu0 %3805
      %3807 = vadd.xlane.f32.xlu0 %v3792
      %v3808 = vpop.xlane.xlu0 %3807
      %v3817 = vadd.s32 %v1002, 4294967200
      %v3818 = vlaneseq
      %v3819 = vshrl.u32 %v3818, 7
      %v3820 = vsub.s32 %v3817, %v3819
      %v3821 = vrot.slane %v3794, %v3820
      %v3822 = vlaneseq
      %v3823 = vshrl.u32 %v3822, 7
      %v3824 = vsub.s32 %v3817, %v3823
      %v3825 = vrot.slane %v3796, %v3824
      %v3826 = vlaneseq
      %v3827 = vshrl.u32 %v3826, 7
      %v3828 = vsub.s32 %v3817, %v3827
      %v3829 = vrot.slane %v3798, %v3828
      %v3830 = vlaneseq
      %v3831 = vshrl.u32 %v3830, 7
      %v3832 = vsub.s32 %v3817, %v3831
      %v3833 = vrot.slane %v3800, %v3832
      %v3834 = vlaneseq
      %v3835 = vshrl.u32 %v3834, 7
      %v3836 = vsub.s32 %v3817, %v3835
      %v3837 = vrot.slane %v3802, %v3836
      %v3838 = vlaneseq
      %v3839 = vshrl.u32 %v3838, 7
      %v3840 = vsub.s32 %v3817, %v3839
      %v3841 = vrot.slane %v3804, %v3840
      %v3842 = vlaneseq
      %v3843 = vshrl.u32 %v3842, 7
      %v3844 = vsub.s32 %v3817, %v3843
      %v3845 = vrot.slane %v3806, %v3844
      %v3846 = vlaneseq
      %v3847 = vshrl.u32 %v3846, 7
      %v3848 = vsub.s32 %v3817, %v3847
      %v3849 = vrot.slane %v3808, %v3848
      %v3850 = vsel %vm1035, %v3825, %v3821
      %v3851 = vsel %vm1037, %v3829, %v3850
      %v3852 = vsel %vm1039, %v3833, %v3851
      %v3853 = vsel %vm1041, %v3837, %v3852
      %v3854 = vsel %vm1043, %v3841, %v3853
      %v3855 = vsel %vm1045, %v3845, %v3854
      %v3856 = vsel %vm1047, %v3849, %v3855
      %vm3858 = vcmask 851712
      %3859 = vst.msk [vmem:[#allocation2] sm:$0xff] %vm3858, %v3856
      %v3860 = vld [vmem:[#allocation2] sm:$0xff]
      %v3861 = vld [vmem:[%s2] sm:$0xff]
      %v3862 = vld [vmem:[%s2 + $0x8] sm:$0xff]
      %v3863 = vld [vmem:[%s2 + $0x10] sm:$0xff]
      %v3864 = vld [vmem:[%s2 + $0x18] sm:$0xff]
      %v3865 = vld [vmem:[%s2 + $0x20] sm:$0xff]
      %v3866 = vld [vmem:[%s2 + $0x28] sm:$0xff]
      %v3867 = vld [vmem:[%s2 + $0x30] sm:$0xff]
      %v3868 = vld [vmem:[%s2 + $0x38] sm:$0xff]
      %v3869 = vld [vmem:[%s2 + $0x40] sm:$0xff]
      %v3870 = vld [vmem:[%s2 + $0x48] sm:$0xff]
      %v3871 = vld [vmem:[%s2 + $0x50] sm:$0xff]
      %v3872 = vld [vmem:[%s2 + $0x58] sm:$0xff]
      %v3873 = vld [vmem:[%s2 + $0x60] sm:$0xff]
      %v3874 = vld [vmem:[%s2 + $0x68] sm:$0xff]
      %v3875 = vld [vmem:[%s2 + $0x70] sm:$0xff]
      %v3876 = vld [vmem:[%s2 + $0x78] sm:$0xff]
      %3877 = vmatprep.subr.mxu0 0.0
      %3878 = vmatpush1.msra.mxu0 %v3861
      %3879 = vmatprep.subr.mxu0 0.0
      %3880 = vmatpush1.msra.mxu0 %v3862
      %3881 = vmatprep.subr.mxu0 0.0
      %3882 = vmatpush1.msra.mxu0 %v3863
      %3883 = vmatprep.subr.mxu0 0.0
      %3884 = vmatpush1.msra.mxu0 %v3864
      %3885 = vmatprep.subr.mxu0 0.0
      %3886 = vmatpush1.msra.mxu0 %v3865
      %3887 = vmatprep.subr.mxu0 0.0
      %3888 = vmatpush1.msra.mxu0 %v3866
      %3889 = vmatprep.subr.mxu0 0.0
      %3890 = vmatpush1.msra.mxu0 %v3867
      %3891 = vmatprep.subr.mxu0 0.0
      %3892 = vmatpush1.msra.mxu0 %v3868
      %3893 = vmatprep.subr.mxu0 0.0
      %3894 = vmatpush1.msra.mxu0 %v3869
      %3895 = vmatprep.subr.mxu0 0.0
      %3896 = vmatpush1.msra.mxu0 %v3870
      %3897 = vmatprep.subr.mxu0 0.0
      %3898 = vmatpush1.msra.mxu0 %v3871
      %3899 = vmatprep.subr.mxu0 0.0
      %3900 = vmatpush1.msra.mxu0 %v3872
      %3901 = vmatprep.subr.mxu0 0.0
      %3902 = vmatpush1.msra.mxu0 %v3873
      %3903 = vmatprep.subr.mxu0 0.0
      %3904 = vmatpush1.msra.mxu0 %v3874
      %3905 = vmatprep.subr.mxu0 0.0
      %3906 = vmatpush1.msra.mxu0 %v3875
      %3907 = vmatprep.subr.mxu0 0.0
      %3908 = vmatpush1.msra.mxu0 %v3876
      %3909 = vmatprep.subr.mxu0 0.0
      %3910 = vmatpush1.msra.mxu0 0.0
      %3911 = vmatprep.subr.mxu0 0.0
      %3912 = vmatpush1.msra.mxu0 0.0
      %3913 = vmatprep.subr.mxu0 0.0
      %3914 = vmatpush1.msra.mxu0 0.0
      %3915 = vmatprep.subr.mxu0 0.0
      %3916 = vmatpush1.msra.mxu0 0.0
      %3917 = vmatprep.subr.mxu0 0.0
      %3918 = vmatpush1.msra.mxu0 0.0
      %3919 = vmatprep.subr.mxu0 0.0
      %3920 = vmatpush1.msra.mxu0 0.0
      %3921 = vmatprep.subr.mxu0 0.0
      %3922 = vmatpush1.msra.mxu0 0.0
      %3923 = vmatprep.subr.mxu0 0.0
      %3924 = vmatpush1.msra.mxu0 0.0
      %3925 = vmatprep.subr.mxu0 0.0
      %3926 = vmatpush1.msra.mxu0 0.0
      %3927 = vmatprep.subr.mxu0 0.0
      %3928 = vmatpush1.msra.mxu0 0.0
      %3929 = vmatprep.subr.mxu0 0.0
      %3930 = vmatpush1.msra.mxu0 0.0
      %3931 = vmatprep.subr.mxu0 0.0
      %3932 = vmatpush1.msra.mxu0 0.0
      %3933 = vmatprep.subr.mxu0 0.0
      %3934 = vmatpush1.msra.mxu0 0.0
      %3935 = vmatprep.subr.mxu0 0.0
      %3936 = vmatpush1.msra.mxu0 0.0
      %3937 = vmatprep.subr.mxu0 0.0
      %3938 = vmatpush1.msra.mxu0 0.0
      %3939 = vmatprep.subr.mxu0 0.0
      %3940 = vmatpush1.msra.mxu0 0.0
      %3941 = vmatprep.mubr.f32.mxu0 0.0
      %3942 = vmatmul.mubr.f32.gmra.mrb[0].mxu0 %v3860
      %v3943 = vpop.f32.mrb[0].mxu0
      %v3944 = vadd.f32 0.0, %v3943
      %v3945 = vpop.f32.mrb[0].mxu0
      %3946 = vdwg.mxu0
      %vm3947 = vcmask 80896
      %3948 = vst.msk [vmem:[%s168] sm:$0xff] %vm3947, %v3944
      %p3949 = scmp.lt.s32.totalorder %s14, 1
      %s3950 = scalar_select %p3949, %s14, 1
      %s3951 = smul.addr %s3950, 8
      %s3952 = scalar_lea.vmem %s3, %s3951
      // Predicated region
      $region33: #{meta_tensor_forward.1} parent=31 // pred_check
        %p3953 = pneg %p100
      $region34: #{meta_tensor_forward.1} parent=31 // pred_check_branch
        %3955 = sbr.rel (%p3953) target = $region36
      $region35: #{meta_tensor_forward.1} parent=31 // pred_region
        _
      $region36: #{meta_tensor_forward.1} parent=31 // pred_fallthru
        _
    $region32: #{meta_tensor_forward.1} parent=5 // pred_fallthru
      _
    %p3956 = scmp.le.s32.totalorder 2, %s9
    // Predicated region
    $region37: #{meta_tensor_forward.1} parent=5 // pred_check
      %p3957 = pneg %p3956
    $region38: #{meta_tensor_forward.1} parent=5 // pred_check_branch
      %3959 = sbr.rel (%p3957) target = $region40
    $region39: #{meta_tensor_forward.1} parent=5 // pred_region
      %s3960 = ssub.s32 %s9, 2
      // Predicated region
      $region41: #{meta_tensor_forward.1} parent=39 // pred_check
        %p3961 = pneg %p106
      $region42: #{meta_tensor_forward.1} parent=39 // pred_check_branch
        %3963 = sbr.rel (%p3961) target = $region44
      $region43: #{meta_tensor_forward.1} parent=39 // pred_region
        %p3964 = scmp.lt.s32.totalorder %s15, 1
        %s3965 = scalar_select %p3964, %s15, 1
        %s3966 = smul.addr %s3965, 8
        %s3967 = scalar_lea.vmem %s3, %s3966
      $region44: #{meta_tensor_forward.1} parent=39 // pred_fallthru
        _
    $region40: #{meta_tensor_forward.1} parent=5 // pred_fallthru
      _
  $region6: #{meta_tensor_forward.1} parent=0 // loop_footer
    %s13 = sadd.s32 1, %s9
  $region7: #{meta_tensor_forward.1} parent=0 // loop_footer_branch
    %8 = sbr.rel target = $region3
  $region8: #{meta_tensor_forward.1} parent=0 // loop_exit
    _

</llo_original>
